<compile_context>
chip_gen: v5e
topology: v5e:2x2
jax: 0.10.0
libtpu: 0.0.40
codegen_flags: <defaults>
</compile_context>

<pallas_src>
import math
import functools

import jax
import jax.numpy as jnp
from jax.experimental import pallas as pl
from jax.experimental.pallas import tpu as pltpu

LN_EPS = 1e-5  # nn.LayerNorm default


def _layer_norm(x, gamma, beta):
    # x: (R, D) f32, gamma/beta: (1, D) f32  (biased variance, as in PyTorch)
    mean = jnp.mean(x, axis=-1, keepdims=True)
    var = jnp.mean(jnp.square(x - mean), axis=-1, keepdims=True)
    return (x - mean) * jax.lax.rsqrt(var + LN_EPS) * gamma + beta


def encoder_block_kernel(num_heads,
                         x_ref, ln1_w_ref, ln1_b_ref, wqkv_ref, bqkv_ref,
                         wo_ref, bo_ref, ln2_w_ref, ln2_b_ref,
                         w1_ref, b1_ref, w2_ref, b2_ref,
                         o_ref, attn_ref):
    """Fully fused encoder block: LN1 -> MSA -> +res -> LN2 -> MLP(GELU) -> +res."""
    Bb, S, D = x_ref.shape
    R = Bb * S
    hd = D // num_heads

    # Fold the batch block into the matmul row dimension: all dense projections
    # below see R = Bb*S LHS rows (better MXU fill on 128/256-row MXUs).
    x = x_ref[...].reshape(R, D)                                     # (R, D) f32

    # ---------------- MSA half ----------------
    xn = _layer_norm(x, ln1_w_ref[...], ln1_b_ref[...])
    # Packed QKV projection; 1/sqrt(head_dim) q-scale already folded into wqkv/bqkv.
    qkv = jnp.dot(xn.astype(jnp.bfloat16), wqkv_ref[...],
                  preferred_element_type=jnp.float32) + bqkv_ref[...]
    qkv_b = qkv.astype(jnp.bfloat16)

    # Softmax attention is batch-local, so only this part loops over the batch block.
    # Each head's (S, hd) output goes into its lane slice of the (R, D) bf16 scratch
    # so the output projection is a single K=D matmul over all rows.
    for b in range(Bb):                        # static, small trip count
        rows = slice(b * S, (b + 1) * S)
        # TODO(synk): at real head counts (H>=12) switch to lax.fori_loop / batched
        # dot_general over heads to avoid repeated 32-lane slices & vreg pressure.
        for h in range(num_heads):             # static, small trip count
            qh = qkv_b[rows, h * hd:(h + 1) * hd]
            kh = qkv_b[rows, D + h * hd:D + (h + 1) * hd]
            vh = qkv_b[rows, 2 * D + h * hd:2 * D + (h + 1) * hd]
            s = jnp.einsum("qd,kd->qk", qh, kh,
                           preferred_element_type=jnp.float32)       # (S, S) f32
            s = s - jnp.max(s, axis=-1, keepdims=True)
            p = jnp.exp(s)
            p = p * pl.reciprocal(jnp.sum(p, axis=-1, keepdims=True), approx=True)
            head = jnp.dot(p.astype(jnp.bfloat16), vh,
                           preferred_element_type=jnp.float32)       # (S, hd) f32
            attn_ref[b * S:(b + 1) * S, h * hd:(h + 1) * hd] = head.astype(jnp.bfloat16)

    # Single output projection with full K=D contraction depth over all R rows.
    msa = jnp.dot(attn_ref[...], wo_ref[...],
                  preferred_element_type=jnp.float32) + bo_ref[...]
    y = msa + x                                                      # residual (VMEM-resident)

    # ---------------- MLP half ----------------
    yn = _layer_norm(y, ln2_w_ref[...], ln2_b_ref[...])
    h1 = jnp.dot(yn.astype(jnp.bfloat16), w1_ref[...],
                 preferred_element_type=jnp.float32) + b1_ref[...]
    # Exact (erf) GELU == PyTorch nn.GELU default.
    # TODO(synk): on v5e, if the MLP half profiles VALU-bound, switch to tanh-approx GELU.
    h1 = 0.5 * h1 * (1.0 + jax.lax.erf(h1 * (1.0 / math.sqrt(2.0))))
    out = jnp.dot(h1.astype(jnp.bfloat16), w2_ref[...],
                  preferred_element_type=jnp.float32) + b2_ref[...]
    # TODO(synk): dropout layers are identity here (eval-mode); no RNG-matched train path.
    o_ref[...] = (out + y).reshape(Bb, S, D).astype(o_ref.dtype)     # residual


def transformer_encoder_block(x, params, num_heads, *, single_buffer_weights=True):
    B, S, D = x.shape
    M = params["w1_t"].shape[1]
    assert D % num_heads == 0

    # Fold enough batches into one block that the dense matmuls see ~128-256 LHS rows,
    # while keeping B // Bb grid steps for megacore sharding when B is large.
    target_rows = 256
    Bb = max(1, min(B, target_rows // max(S, 1)))
    while B % Bb:
        Bb -= 1
    R = Bb * S

    def pspec(shape):
        # Grid-invariant (replicated) parameter block. Single-buffer it: the second
        # pipeline buffer is pure VMEM waste when index_map is constant.
        n = len(shape)
        if single_buffer_weights:
            return pl.BlockSpec(shape, lambda i, _n=n: (0,) * _n,
                                pipeline_mode=pl.Buffered(1))
        return pl.BlockSpec(shape, lambda i, _n=n: (0,) * _n)

    x_spec = pl.BlockSpec((Bb, S, D), lambda i: (i, 0, 0))
    out_shape = jax.ShapeDtypeStruct((B, S, D), x.dtype)

    # Advisory cost hint for XLA's scheduler.
    flops = (2 * B * S * D * (3 * D)      # QKV
             + 4 * B * S * S * D          # scores + AV (all heads)
             + 2 * B * S * D * D          # out-proj
             + 4 * B * S * D * M)         # MLP
    transcendentals = B * num_heads * S * S + B * S * M + 2 * B * S
    bytes_accessed = (2 * B * S * D * 4
                      + 2 * (D * 3 * D + D * D + 2 * D * M)
                      + 4 * (3 * D + 6 * D + M))

    kernel = functools.partial(encoder_block_kernel, num_heads)
    fused = pl.pallas_call(
        kernel,
        grid=(B // Bb,),
        in_specs=[x_spec,
                  pspec((1, D)), pspec((1, D)),              # ln1 gamma/beta
                  pspec((D, 3 * D)), pspec((1, 3 * D)),      # packed QKV (bf16) + bias
                  pspec((D, D)), pspec((1, D)),              # out-proj (bf16) + bias
                  pspec((1, D)), pspec((1, D)),              # ln2 gamma/beta
                  pspec((D, M)), pspec((1, M)),              # mlp W1 (bf16) + b1
                  pspec((M, D)), pspec((1, D))],             # mlp W2 (bf16) + b2
        out_specs=x_spec,
        out_shape=out_shape,
        scratch_shapes=[pltpu.VMEM((R, D), jnp.bfloat16)],   # per-head attention slab
        compiler_params=pltpu.CompilerParams(
            dimension_semantics=("parallel",),
            # 48 MiB leaves headroom under v7x's 64 MiB physical VMEM; raise toward
            # 100 MiB on v5e/v6e (128 MiB physical) when scaling D/M/S.
            vmem_limit_bytes=48 * 1024 * 1024),
        cost_estimate=pl.CostEstimate(flops=flops,
                                      transcendentals=transcendentals,
                                      bytes_accessed=bytes_accessed),
    )
    return fused(x,
                 params["ln1_w"], params["ln1_b"],
                 params["wqkv_t"], params["bqkv"],
                 params["wo_t"], params["bo"],
                 params["ln2_w"], params["ln2_b"],
                 params["w1_t"], params["b1"],
                 params["w2_t"], params["b2"])


def init_raw_params(key, D, M):
    """Deterministic synthetic f32 parameters matching the PyTorch module's shapes."""
    ks = jax.random.split(key, 8)

    def lin_w(k, shape, fan_in):
        return jax.random.normal(k, shape, jnp.float32) / math.sqrt(fan_in)

    return {
        "ln1_w": jnp.ones((D,), jnp.float32), "ln1_b": jnp.zeros((D,), jnp.float32),
        "ln2_w": jnp.ones((D,), jnp.float32), "ln2_b": jnp.zeros((D,), jnp.float32),
        "in_proj_w": lin_w(ks[0], (3 * D, D), D),      # nn.MultiheadAttention.in_proj_weight
        "in_proj_b": 0.01 * jax.random.normal(ks[1], (3 * D,), jnp.float32),
        "out_proj_w": lin_w(ks[2], (D, D), D),
        "out_proj_b": 0.01 * jax.random.normal(ks[3], (D,), jnp.float32),
        "w1": lin_w(ks[4], (M, D), D),                 # Linear(D -> M).weight
        "b1": 0.01 * jax.random.normal(ks[5], (M,), jnp.float32),
        "w2": lin_w(ks[6], (D, M), M),                 # Linear(M -> D).weight
        "b2": 0.01 * jax.random.normal(ks[7], (D,), jnp.float32),
    }


def pack_params(raw, D, M, H):
    """Pre-pack for the kernel: transpose, bf16 weights, fold 1/sqrt(hd) into Q."""
    hd = D // H
    scale = 1.0 / math.sqrt(hd)
    q_scale = jnp.concatenate([jnp.full((D,), scale, jnp.float32),
                               jnp.ones((2 * D,), jnp.float32)])
    wqkv_t = raw["in_proj_w"].T * q_scale[None, :]     # (D, 3D)
    bqkv = raw["in_proj_b"] * q_scale
    return {
        "ln1_w": raw["ln1_w"].reshape(1, D), "ln1_b": raw["ln1_b"].reshape(1, D),
        "ln2_w": raw["ln2_w"].reshape(1, D), "ln2_b": raw["ln2_b"].reshape(1, D),
        "wqkv_t": wqkv_t.astype(jnp.bfloat16),
        "bqkv": bqkv.reshape(1, 3 * D),
        "wo_t": raw["out_proj_w"].T.astype(jnp.bfloat16),   # single (D, D) out-proj weight
        "bo": raw["out_proj_b"].reshape(1, D),
        "w1_t": raw["w1"].T.astype(jnp.bfloat16),           # (D, M)
        "b1": raw["b1"].reshape(1, M),
        "w2_t": raw["w2"].T.astype(jnp.bfloat16),           # (M, D)
        "b2": raw["b2"].reshape(1, D),
    }


def reference_block(x, raw, H):
    """Pure-JAX f32 reference of the PyTorch forward (eval mode)."""
    B, S, D = x.shape
    hd = D // H

    def ln(v, g, b):
        m = v.mean(-1, keepdims=True)
        var = jnp.mean(jnp.square(v - m), -1, keepdims=True)
        return (v - m) * jax.lax.rsqrt(var + LN_EPS) * g + b

    xn = ln(x, raw["ln1_w"], raw["ln1_b"])
    qkv = xn @ raw["in_proj_w"].T + raw["in_proj_b"]
    q, k, v = jnp.split(qkv, 3, axis=-1)

    def heads(t):
        return t.reshape(B, S, H, hd).transpose(0, 2, 1, 3)

    q, k, v = heads(q) / math.sqrt(hd), heads(k), heads(v)
    s = jnp.einsum("bhqd,bhkd->bhqk", q, k)
    p = jax.nn.softmax(s, axis=-1)
    a = jnp.einsum("bhqk,bhkd->bhqd", p, v)
    a = a.transpose(0, 2, 1, 3).reshape(B, S, D)
    y = a @ raw["out_proj_w"].T + raw["out_proj_b"] + x

    yn = ln(y, raw["ln2_w"], raw["ln2_b"])
    h1 = yn @ raw["w1"].T + raw["b1"]
    h1 = 0.5 * h1 * (1.0 + jax.lax.erf(h1 / math.sqrt(2.0)))
    return h1 @ raw["w2"].T + raw["b2"] + y


if __name__ == "__main__":
    # batch, seq, embed, heads, mlp_size — small but lane-dense (D, 3D, M multiples of 128)
    B, S, D, H, M = 2, 16, 128, 4, 256
    key = jax.random.PRNGKey(0)
    kx, kp = jax.random.split(key)
    x = jax.random.normal(kx, (B, S, D), jnp.float32)
    raw = init_raw_params(kp, D, M)
    params = pack_params(raw, D, M, H)
    ref = reference_block(x, raw, H)

    def run(single_buffer):
        out = transformer_encoder_block(x, params, H, single_buffer_weights=single_buffer)
        out = jax.block_until_ready(out)
        return out, float(jnp.max(jnp.abs(out - ref)))

    try:
        out, err = run(True)
    except Exception:
        # This JAX build rejects pl.Buffered(1) single-buffering of grid-invariant
        # weights; fall back to default double-buffered weight pipelining.
        out, err = run(False)

    assert out.shape == (B, S, D) and out.dtype == jnp.float32
    assert bool(jnp.all(jnp.isfinite(out)))
    assert err < 0.15, f"max |pallas - reference| too large: {err}"
    print("KERNEL_OK")
</pallas_src>

<mosaic_0001>
module attributes {stable_mosaic.version = 11 : i64} {
  func.func @encoder_block_kernel(%arg0: i32, %arg1: memref<2x16x128xf32, #tpu.memory_space<vmem>>, %arg2: memref<1x128xf32, #tpu.memory_space<vmem>>, %arg3: memref<1x128xf32, #tpu.memory_space<vmem>>, %arg4: memref<128x384xbf16, #tpu.memory_space<vmem>>, %arg5: memref<1x384xf32, #tpu.memory_space<vmem>>, %arg6: memref<128x128xbf16, #tpu.memory_space<vmem>>, %arg7: memref<1x128xf32, #tpu.memory_space<vmem>>, %arg8: memref<1x128xf32, #tpu.memory_space<vmem>>, %arg9: memref<1x128xf32, #tpu.memory_space<vmem>>, %arg10: memref<128x256xbf16, #tpu.memory_space<vmem>>, %arg11: memref<1x256xf32, #tpu.memory_space<vmem>>, %arg12: memref<256x128xbf16, #tpu.memory_space<vmem>>, %arg13: memref<1x128xf32, #tpu.memory_space<vmem>>, %arg14: memref<2x16x128xf32, #tpu.memory_space<vmem>>, %arg15: memref<32x128xbf16, #tpu.memory_space<vmem>>) attributes {dimension_semantics = [#tpu.dimension_semantics<parallel>], iteration_bounds = array<i64: 1>, scalar_prefetch = 0 : i64, scratch_operands = 1 : i64, tpu.core_type = #tpu.core_type<tc>, window_params = [{transform_indices = @transform_0, window_bounds = array<i64: 2, 16, 128>}, {pipeline_mode = #tpu.pipeline_mode<synchronous>, transform_indices = @transform_1, window_bounds = array<i64: 1, 128>}, {pipeline_mode = #tpu.pipeline_mode<synchronous>, transform_indices = @transform_2, window_bounds = array<i64: 1, 128>}, {pipeline_mode = #tpu.pipeline_mode<synchronous>, transform_indices = @transform_3, window_bounds = array<i64: 128, 384>}, {pipeline_mode = #tpu.pipeline_mode<synchronous>, transform_indices = @transform_4, window_bounds = array<i64: 1, 384>}, {pipeline_mode = #tpu.pipeline_mode<synchronous>, transform_indices = @transform_5, window_bounds = array<i64: 128, 128>}, {pipeline_mode = #tpu.pipeline_mode<synchronous>, transform_indices = @transform_6, window_bounds = array<i64: 1, 128>}, {pipeline_mode = #tpu.pipeline_mode<synchronous>, transform_indices = @transform_7, window_bounds = array<i64: 1, 128>}, {pipeline_mode = #tpu.pipeline_mode<synchronous>, transform_indices = @transform_8, window_bounds = array<i64: 1, 128>}, {pipeline_mode = #tpu.pipeline_mode<synchronous>, transform_indices = @transform_9, window_bounds = array<i64: 128, 256>}, {pipeline_mode = #tpu.pipeline_mode<synchronous>, transform_indices = @transform_10, window_bounds = array<i64: 1, 256>}, {pipeline_mode = #tpu.pipeline_mode<synchronous>, transform_indices = @transform_11, window_bounds = array<i64: 256, 128>}, {pipeline_mode = #tpu.pipeline_mode<synchronous>, transform_indices = @transform_12, window_bounds = array<i64: 1, 128>}, {transform_indices = @transform_13, window_bounds = array<i64: 2, 16, 128>}]} {
    %c0 = arith.constant 0 : index
    %c0_0 = arith.constant 0 : index
    %c0_1 = arith.constant 0 : index
    %0 = vector.load %arg1[%c0, %c0_0, %c0_1] : memref<2x16x128xf32, #tpu.memory_space<vmem>>, vector<2x16x128xf32>
    %1 = vector.shape_cast %0 : vector<2x16x128xf32> to vector<32x128xf32>
    %c0_2 = arith.constant 0 : index
    %c0_3 = arith.constant 0 : index
    %2 = vector.load %arg2[%c0_2, %c0_3] : memref<1x128xf32, #tpu.memory_space<vmem>>, vector<1x128xf32>
    %c0_4 = arith.constant 0 : index
    %c0_5 = arith.constant 0 : index
    %3 = vector.load %arg3[%c0_4, %c0_5] : memref<1x128xf32, #tpu.memory_space<vmem>>, vector<1x128xf32>
    %cst = arith.constant dense<0.000000e+00> : vector<32xf32>
    %4 = vector.multi_reduction <add>, %1, %cst [1] : vector<32x128xf32> to vector<32xf32>
    %5 = vector.shape_cast %4 : vector<32xf32> to vector<32x1xf32>
    %cst_6 = arith.constant 1.280000e+02 : f32
    %6 = vector.broadcast %cst_6 : f32 to vector<32x1xf32>
    %7 = arith.divf %5, %6 : vector<32x1xf32>
    %8 = vector.broadcast %7 : vector<32x1xf32> to vector<32x128xf32>
    %9 = arith.subf %1, %8 : vector<32x128xf32>
    %10 = arith.mulf %9, %9 : vector<32x128xf32>
    %cst_7 = arith.constant dense<0.000000e+00> : vector<32xf32>
    %11 = vector.multi_reduction <add>, %10, %cst_7 [1] : vector<32x128xf32> to vector<32xf32>
    %12 = vector.shape_cast %11 : vector<32xf32> to vector<32x1xf32>
    %cst_8 = arith.constant 1.280000e+02 : f32
    %13 = vector.broadcast %cst_8 : f32 to vector<32x1xf32>
    %14 = arith.divf %12, %13 : vector<32x1xf32>
    %15 = vector.broadcast %7 : vector<32x1xf32> to vector<32x128xf32>
    %16 = arith.subf %1, %15 : vector<32x128xf32>
    %cst_9 = arith.constant 9.99999974E-6 : f32
    %17 = vector.broadcast %cst_9 : f32 to vector<32x1xf32>
    %18 = arith.addf %14, %17 : vector<32x1xf32>
    %19 = math.rsqrt %18 : vector<32x1xf32>
    %20 = vector.broadcast %19 : vector<32x1xf32> to vector<32x128xf32>
    %21 = arith.mulf %16, %20 : vector<32x128xf32>
    %22 = vector.broadcast %2 : vector<1x128xf32> to vector<32x128xf32>
    %23 = arith.mulf %21, %22 : vector<32x128xf32>
    %24 = vector.broadcast %3 : vector<1x128xf32> to vector<32x128xf32>
    %25 = arith.addf %23, %24 : vector<32x128xf32>
    %26 = arith.truncf %25 : vector<32x128xf32> to vector<32x128xbf16>
    %c0_10 = arith.constant 0 : index
    %c0_11 = arith.constant 0 : index
    %27 = vector.load %arg4[%c0_10, %c0_11] : memref<128x384xbf16, #tpu.memory_space<vmem>>, vector<128x384xbf16>
    %cst_12 = arith.constant dense<0.000000e+00> : vector<32x384xf32>
    %28 = tpu.matmul %26, %27, %cst_12 {dimension_numbers = #tpu.dot_dimension_numbers<[1], [0], [0], [1], [0, 0, 1, 1], [], []>} : vector<32x128xbf16>, vector<128x384xbf16>, vector<32x384xf32> -> vector<32x384xf32>
    %c0_13 = arith.constant 0 : index
    %c0_14 = arith.constant 0 : index
    %29 = vector.load %arg5[%c0_13, %c0_14] : memref<1x384xf32, #tpu.memory_space<vmem>>, vector<1x384xf32>
    %30 = vector.broadcast %29 : vector<1x384xf32> to vector<32x384xf32>
    %31 = arith.addf %28, %30 : vector<32x384xf32>
    %32 = arith.truncf %31 : vector<32x384xf32> to vector<32x384xbf16>
    %33 = vector.extract_strided_slice %32 {offsets = [0, 0], sizes = [16, 32], strides = [1, 1]} : vector<32x384xbf16> to vector<16x32xbf16>
    %34 = vector.extract_strided_slice %32 {offsets = [0, 128], sizes = [16, 32], strides = [1, 1]} : vector<32x384xbf16> to vector<16x32xbf16>
    %35 = vector.extract_strided_slice %32 {offsets = [0, 256], sizes = [16, 32], strides = [1, 1]} : vector<32x384xbf16> to vector<16x32xbf16>
    "tpu.trace_start"() <{level = 10 : i32, message = "qd,kd->qk"}> : () -> ()
    %cst_15 = arith.constant dense<0.000000e+00> : vector<16x16xf32>
    %36 = tpu.matmul %33, %34, %cst_15 {dimension_numbers = #tpu.dot_dimension_numbers<[1], [1], [0], [0], [0, 0, 1, 0], [], []>} : vector<16x32xbf16>, vector<16x32xbf16>, vector<16x16xf32> -> vector<16x16xf32>
    "tpu.trace_stop"() : () -> ()
    %cst_16 = arith.constant dense<0xFF800000> : vector<16xf32>
    %37 = vector.multi_reduction <maximumf>, %36, %cst_16 [1] : vector<16x16xf32> to vector<16xf32>
    %38 = vector.shape_cast %37 : vector<16xf32> to vector<16x1xf32>
    %39 = vector.broadcast %38 : vector<16x1xf32> to vector<16x16xf32>
    %40 = arith.subf %36, %39 : vector<16x16xf32>
    %41 = math.exp %40 : vector<16x16xf32>
    %cst_17 = arith.constant dense<0.000000e+00> : vector<16xf32>
    %42 = vector.multi_reduction <add>, %41, %cst_17 [1] : vector<16x16xf32> to vector<16xf32>
    %43 = vector.shape_cast %42 : vector<16xf32> to vector<16x1xf32>
    %44 = tpu.reciprocal %43 {approx = true} : vector<16x1xf32> -> vector<16x1xf32>
    %45 = vector.broadcast %44 : vector<16x1xf32> to vector<16x16xf32>
    %46 = arith.mulf %41, %45 : vector<16x16xf32>
    %47 = arith.truncf %46 : vector<16x16xf32> to vector<16x16xbf16>
    %cst_18 = arith.constant dense<0.000000e+00> : vector<16x32xf32>
    %48 = tpu.matmul %47, %35, %cst_18 {dimension_numbers = #tpu.dot_dimension_numbers<[1], [0], [0], [1], [0, 0, 1, 1], [], []>} : vector<16x16xbf16>, vector<16x32xbf16>, vector<16x32xf32> -> vector<16x32xf32>
    %49 = arith.truncf %48 : vector<16x32xf32> to vector<16x32xbf16>
    %c0_19 = arith.constant 0 : index
    %c0_20 = arith.constant 0 : index
    %50 = vector.load %arg15[%c0_19, %c0_20] : memref<32x128xbf16, #tpu.memory_space<vmem>>, vector<16x32xbf16>
    tpu.vector_store %arg15[%c0_19, %c0_20], %49 {strides = array<i32>} : memref<32x128xbf16, #tpu.memory_space<vmem>>, vector<16x32xbf16>,
    %51 = vector.extract_strided_slice %32 {offsets = [0, 32], sizes = [16, 32], strides = [1, 1]} : vector<32x384xbf16> to vector<16x32xbf16>
    %52 = vector.extract_strided_slice %32 {offsets = [0, 160], sizes = [16, 32], strides = [1, 1]} : vector<32x384xbf16> to vector<16x32xbf16>
    %53 = vector.extract_strided_slice %32 {offsets = [0, 288], sizes = [16, 32], strides = [1, 1]} : vector<32x384xbf16> to vector<16x32xbf16>
    "tpu.trace_start"() <{level = 10 : i32, message = "qd,kd->qk"}> : () -> ()
    %cst_21 = arith.constant dense<0.000000e+00> : vector<16x16xf32>
    %54 = tpu.matmul %51, %52, %cst_21 {dimension_numbers = #tpu.dot_dimension_numbers<[1], [1], [0], [0], [0, 0, 1, 0], [], []>} : vector<16x32xbf16>, vector<16x32xbf16>, vector<16x16xf32> -> vector<16x16xf32>
    "tpu.trace_stop"() : () -> ()
    %cst_22 = arith.constant dense<0xFF800000> : vector<16xf32>
    %55 = vector.multi_reduction <maximumf>, %54, %cst_22 [1] : vector<16x16xf32> to vector<16xf32>
    %56 = vector.shape_cast %55 : vector<16xf32> to vector<16x1xf32>
    %57 = vector.broadcast %56 : vector<16x1xf32> to vector<16x16xf32>
    %58 = arith.subf %54, %57 : vector<16x16xf32>
    %59 = math.exp %58 : vector<16x16xf32>
    %cst_23 = arith.constant dense<0.000000e+00> : vector<16xf32>
    %60 = vector.multi_reduction <add>, %59, %cst_23 [1] : vector<16x16xf32> to vector<16xf32>
    %61 = vector.shape_cast %60 : vector<16xf32> to vector<16x1xf32>
    %62 = tpu.reciprocal %61 {approx = true} : vector<16x1xf32> -> vector<16x1xf32>
    %63 = vector.broadcast %62 : vector<16x1xf32> to vector<16x16xf32>
    %64 = arith.mulf %59, %63 : vector<16x16xf32>
    %65 = arith.truncf %64 : vector<16x16xf32> to vector<16x16xbf16>
    %cst_24 = arith.constant dense<0.000000e+00> : vector<16x32xf32>
    %66 = tpu.matmul %65, %53, %cst_24 {dimension_numbers = #tpu.dot_dimension_numbers<[1], [0], [0], [1], [0, 0, 1, 1], [], []>} : vector<16x16xbf16>, vector<16x32xbf16>, vector<16x32xf32> -> vector<16x32xf32>
    %67 = arith.truncf %66 : vector<16x32xf32> to vector<16x32xbf16>
    %c0_25 = arith.constant 0 : index
    %c32 = arith.constant 32 : index
    %68 = vector.load %arg15[%c0_25, %c32] : memref<32x128xbf16, #tpu.memory_space<vmem>>, vector<16x32xbf16>
    tpu.vector_store %arg15[%c0_25, %c32], %67 {strides = array<i32>} : memref<32x128xbf16, #tpu.memory_space<vmem>>, vector<16x32xbf16>,
    %69 = vector.extract_strided_slice %32 {offsets = [0, 64], sizes = [16, 32], strides = [1, 1]} : vector<32x384xbf16> to vector<16x32xbf16>
    %70 = vector.extract_strided_slice %32 {offsets = [0, 192], sizes = [16, 32], strides = [1, 1]} : vector<32x384xbf16> to vector<16x32xbf16>
    %71 = vector.extract_strided_slice %32 {offsets = [0, 320], sizes = [16, 32], strides = [1, 1]} : vector<32x384xbf16> to vector<16x32xbf16>
    "tpu.trace_start"() <{level = 10 : i32, message = "qd,kd->qk"}> : () -> ()
    %cst_26 = arith.constant dense<0.000000e+00> : vector<16x16xf32>
    %72 = tpu.matmul %69, %70, %cst_26 {dimension_numbers = #tpu.dot_dimension_numbers<[1], [1], [0], [0], [0, 0, 1, 0], [], []>} : vector<16x32xbf16>, vector<16x32xbf16>, vector<16x16xf32> -> vector<16x16xf32>
    "tpu.trace_stop"() : () -> ()
    %cst_27 = arith.constant dense<0xFF800000> : vector<16xf32>
    %73 = vector.multi_reduction <maximumf>, %72, %cst_27 [1] : vector<16x16xf32> to vector<16xf32>
    %74 = vector.shape_cast %73 : vector<16xf32> to vector<16x1xf32>
    %75 = vector.broadcast %74 : vector<16x1xf32> to vector<16x16xf32>
    %76 = arith.subf %72, %75 : vector<16x16xf32>
    %77 = math.exp %76 : vector<16x16xf32>
    %cst_28 = arith.constant dense<0.000000e+00> : vector<16xf32>
    %78 = vector.multi_reduction <add>, %77, %cst_28 [1] : vector<16x16xf32> to vector<16xf32>
    %79 = vector.shape_cast %78 : vector<16xf32> to vector<16x1xf32>
    %80 = tpu.reciprocal %79 {approx = true} : vector<16x1xf32> -> vector<16x1xf32>
    %81 = vector.broadcast %80 : vector<16x1xf32> to vector<16x16xf32>
    %82 = arith.mulf %77, %81 : vector<16x16xf32>
    %83 = arith.truncf %82 : vector<16x16xf32> to vector<16x16xbf16>
    %cst_29 = arith.constant dense<0.000000e+00> : vector<16x32xf32>
    %84 = tpu.matmul %83, %71, %cst_29 {dimension_numbers = #tpu.dot_dimension_numbers<[1], [0], [0], [1], [0, 0, 1, 1], [], []>} : vector<16x16xbf16>, vector<16x32xbf16>, vector<16x32xf32> -> vector<16x32xf32>
    %85 = arith.truncf %84 : vector<16x32xf32> to vector<16x32xbf16>
    %c0_30 = arith.constant 0 : index
    %c64 = arith.constant 64 : index
    %86 = vector.load %arg15[%c0_30, %c64] : memref<32x128xbf16, #tpu.memory_space<vmem>>, vector<16x32xbf16>
    tpu.vector_store %arg15[%c0_30, %c64], %85 {strides = array<i32>} : memref<32x128xbf16, #tpu.memory_space<vmem>>, vector<16x32xbf16>,
    %87 = vector.extract_strided_slice %32 {offsets = [0, 96], sizes = [16, 32], strides = [1, 1]} : vector<32x384xbf16> to vector<16x32xbf16>
    %88 = vector.extract_strided_slice %32 {offsets = [0, 224], sizes = [16, 32], strides = [1, 1]} : vector<32x384xbf16> to vector<16x32xbf16>
    %89 = vector.extract_strided_slice %32 {offsets = [0, 352], sizes = [16, 32], strides = [1, 1]} : vector<32x384xbf16> to vector<16x32xbf16>
    "tpu.trace_start"() <{level = 10 : i32, message = "qd,kd->qk"}> : () -> ()
    %cst_31 = arith.constant dense<0.000000e+00> : vector<16x16xf32>
    %90 = tpu.matmul %87, %88, %cst_31 {dimension_numbers = #tpu.dot_dimension_numbers<[1], [1], [0], [0], [0, 0, 1, 0], [], []>} : vector<16x32xbf16>, vector<16x32xbf16>, vector<16x16xf32> -> vector<16x16xf32>
    "tpu.trace_stop"() : () -> ()
    %cst_32 = arith.constant dense<0xFF800000> : vector<16xf32>
    %91 = vector.multi_reduction <maximumf>, %90, %cst_32 [1] : vector<16x16xf32> to vector<16xf32>
    %92 = vector.shape_cast %91 : vector<16xf32> to vector<16x1xf32>
    %93 = vector.broadcast %92 : vector<16x1xf32> to vector<16x16xf32>
    %94 = arith.subf %90, %93 : vector<16x16xf32>
    %95 = math.exp %94 : vector<16x16xf32>
    %cst_33 = arith.constant dense<0.000000e+00> : vector<16xf32>
    %96 = vector.multi_reduction <add>, %95, %cst_33 [1] : vector<16x16xf32> to vector<16xf32>
    %97 = vector.shape_cast %96 : vector<16xf32> to vector<16x1xf32>
    %98 = tpu.reciprocal %97 {approx = true} : vector<16x1xf32> -> vector<16x1xf32>
    %99 = vector.broadcast %98 : vector<16x1xf32> to vector<16x16xf32>
    %100 = arith.mulf %95, %99 : vector<16x16xf32>
    %101 = arith.truncf %100 : vector<16x16xf32> to vector<16x16xbf16>
    %cst_34 = arith.constant dense<0.000000e+00> : vector<16x32xf32>
    %102 = tpu.matmul %101, %89, %cst_34 {dimension_numbers = #tpu.dot_dimension_numbers<[1], [0], [0], [1], [0, 0, 1, 1], [], []>} : vector<16x16xbf16>, vector<16x32xbf16>, vector<16x32xf32> -> vector<16x32xf32>
    %103 = arith.truncf %102 : vector<16x32xf32> to vector<16x32xbf16>
    %c0_35 = arith.constant 0 : index
    %c96 = arith.constant 96 : index
    %104 = vector.load %arg15[%c0_35, %c96] : memref<32x128xbf16, #tpu.memory_space<vmem>>, vector<16x32xbf16>
    tpu.vector_store %arg15[%c0_35, %c96], %103 {strides = array<i32>} : memref<32x128xbf16, #tpu.memory_space<vmem>>, vector<16x32xbf16>,
    %105 = vector.extract_strided_slice %32 {offsets = [16, 0], sizes = [16, 32], strides = [1, 1]} : vector<32x384xbf16> to vector<16x32xbf16>
    %106 = vector.extract_strided_slice %32 {offsets = [16, 128], sizes = [16, 32], strides = [1, 1]} : vector<32x384xbf16> to vector<16x32xbf16>
    %107 = vector.extract_strided_slice %32 {offsets = [16, 256], sizes = [16, 32], strides = [1, 1]} : vector<32x384xbf16> to vector<16x32xbf16>
    "tpu.trace_start"() <{level = 10 : i32, message = "qd,kd->qk"}> : () -> ()
    %cst_36 = arith.constant dense<0.000000e+00> : vector<16x16xf32>
    %108 = tpu.matmul %105, %106, %cst_36 {dimension_numbers = #tpu.dot_dimension_numbers<[1], [1], [0], [0], [0, 0, 1, 0], [], []>} : vector<16x32xbf16>, vector<16x32xbf16>, vector<16x16xf32> -> vector<16x16xf32>
    "tpu.trace_stop"() : () -> ()
    %cst_37 = arith.constant dense<0xFF800000> : vector<16xf32>
    %109 = vector.multi_reduction <maximumf>, %108, %cst_37 [1] : vector<16x16xf32> to vector<16xf32>
    %110 = vector.shape_cast %109 : vector<16xf32> to vector<16x1xf32>
    %111 = vector.broadcast %110 : vector<16x1xf32> to vector<16x16xf32>
    %112 = arith.subf %108, %111 : vector<16x16xf32>
    %113 = math.exp %112 : vector<16x16xf32>
    %cst_38 = arith.constant dense<0.000000e+00> : vector<16xf32>
    %114 = vector.multi_reduction <add>, %113, %cst_38 [1] : vector<16x16xf32> to vector<16xf32>
    %115 = vector.shape_cast %114 : vector<16xf32> to vector<16x1xf32>
    %116 = tpu.reciprocal %115 {approx = true} : vector<16x1xf32> -> vector<16x1xf32>
    %117 = vector.broadcast %116 : vector<16x1xf32> to vector<16x16xf32>
    %118 = arith.mulf %113, %117 : vector<16x16xf32>
    %119 = arith.truncf %118 : vector<16x16xf32> to vector<16x16xbf16>
    %cst_39 = arith.constant dense<0.000000e+00> : vector<16x32xf32>
    %120 = tpu.matmul %119, %107, %cst_39 {dimension_numbers = #tpu.dot_dimension_numbers<[1], [0], [0], [1], [0, 0, 1, 1], [], []>} : vector<16x16xbf16>, vector<16x32xbf16>, vector<16x32xf32> -> vector<16x32xf32>
    %121 = arith.truncf %120 : vector<16x32xf32> to vector<16x32xbf16>
    %c16 = arith.constant 16 : index
    %c0_40 = arith.constant 0 : index
    %122 = vector.load %arg15[%c16, %c0_40] : memref<32x128xbf16, #tpu.memory_space<vmem>>, vector<16x32xbf16>
    tpu.vector_store %arg15[%c16, %c0_40], %121 {strides = array<i32>} : memref<32x128xbf16, #tpu.memory_space<vmem>>, vector<16x32xbf16>,
    %123 = vector.extract_strided_slice %32 {offsets = [16, 32], sizes = [16, 32], strides = [1, 1]} : vector<32x384xbf16> to vector<16x32xbf16>
    %124 = vector.extract_strided_slice %32 {offsets = [16, 160], sizes = [16, 32], strides = [1, 1]} : vector<32x384xbf16> to vector<16x32xbf16>
    %125 = vector.extract_strided_slice %32 {offsets = [16, 288], sizes = [16, 32], strides = [1, 1]} : vector<32x384xbf16> to vector<16x32xbf16>
    "tpu.trace_start"() <{level = 10 : i32, message = "qd,kd->qk"}> : () -> ()
    %cst_41 = arith.constant dense<0.000000e+00> : vector<16x16xf32>
    %126 = tpu.matmul %123, %124, %cst_41 {dimension_numbers = #tpu.dot_dimension_numbers<[1], [1], [0], [0], [0, 0, 1, 0], [], []>} : vector<16x32xbf16>, vector<16x32xbf16>, vector<16x16xf32> -> vector<16x16xf32>
    "tpu.trace_stop"() : () -> ()
    %cst_42 = arith.constant dense<0xFF800000> : vector<16xf32>
    %127 = vector.multi_reduction <maximumf>, %126, %cst_42 [1] : vector<16x16xf32> to vector<16xf32>
    %128 = vector.shape_cast %127 : vector<16xf32> to vector<16x1xf32>
    %129 = vector.broadcast %128 : vector<16x1xf32> to vector<16x16xf32>
    %130 = arith.subf %126, %129 : vector<16x16xf32>
    %131 = math.exp %130 : vector<16x16xf32>
    %cst_43 = arith.constant dense<0.000000e+00> : vector<16xf32>
    %132 = vector.multi_reduction <add>, %131, %cst_43 [1] : vector<16x16xf32> to vector<16xf32>
    %133 = vector.shape_cast %132 : vector<16xf32> to vector<16x1xf32>
    %134 = tpu.reciprocal %133 {approx = true} : vector<16x1xf32> -> vector<16x1xf32>
    %135 = vector.broadcast %134 : vector<16x1xf32> to vector<16x16xf32>
    %136 = arith.mulf %131, %135 : vector<16x16xf32>
    %137 = arith.truncf %136 : vector<16x16xf32> to vector<16x16xbf16>
    %cst_44 = arith.constant dense<0.000000e+00> : vector<16x32xf32>
    %138 = tpu.matmul %137, %125, %cst_44 {dimension_numbers = #tpu.dot_dimension_numbers<[1], [0], [0], [1], [0, 0, 1, 1], [], []>} : vector<16x16xbf16>, vector<16x32xbf16>, vector<16x32xf32> -> vector<16x32xf32>
    %139 = arith.truncf %138 : vector<16x32xf32> to vector<16x32xbf16>
    %c16_45 = arith.constant 16 : index
    %c32_46 = arith.constant 32 : index
    %140 = vector.load %arg15[%c16_45, %c32_46] : memref<32x128xbf16, #tpu.memory_space<vmem>>, vector<16x32xbf16>
    tpu.vector_store %arg15[%c16_45, %c32_46], %139 {strides = array<i32>} : memref<32x128xbf16, #tpu.memory_space<vmem>>, vector<16x32xbf16>,
    %141 = vector.extract_strided_slice %32 {offsets = [16, 64], sizes = [16, 32], strides = [1, 1]} : vector<32x384xbf16> to vector<16x32xbf16>
    %142 = vector.extract_strided_slice %32 {offsets = [16, 192], sizes = [16, 32], strides = [1, 1]} : vector<32x384xbf16> to vector<16x32xbf16>
    %143 = vector.extract_strided_slice %32 {offsets = [16, 320], sizes = [16, 32], strides = [1, 1]} : vector<32x384xbf16> to vector<16x32xbf16>
    "tpu.trace_start"() <{level = 10 : i32, message = "qd,kd->qk"}> : () -> ()
    %cst_47 = arith.constant dense<0.000000e+00> : vector<16x16xf32>
    %144 = tpu.matmul %141, %142, %cst_47 {dimension_numbers = #tpu.dot_dimension_numbers<[1], [1], [0], [0], [0, 0, 1, 0], [], []>} : vector<16x32xbf16>, vector<16x32xbf16>, vector<16x16xf32> -> vector<16x16xf32>
    "tpu.trace_stop"() : () -> ()
    %cst_48 = arith.constant dense<0xFF800000> : vector<16xf32>
    %145 = vector.multi_reduction <maximumf>, %144, %cst_48 [1] : vector<16x16xf32> to vector<16xf32>
    %146 = vector.shape_cast %145 : vector<16xf32> to vector<16x1xf32>
    %147 = vector.broadcast %146 : vector<16x1xf32> to vector<16x16xf32>
    %148 = arith.subf %144, %147 : vector<16x16xf32>
    %149 = math.exp %148 : vector<16x16xf32>
    %cst_49 = arith.constant dense<0.000000e+00> : vector<16xf32>
    %150 = vector.multi_reduction <add>, %149, %cst_49 [1] : vector<16x16xf32> to vector<16xf32>
    %151 = vector.shape_cast %150 : vector<16xf32> to vector<16x1xf32>
    %152 = tpu.reciprocal %151 {approx = true} : vector<16x1xf32> -> vector<16x1xf32>
    %153 = vector.broadcast %152 : vector<16x1xf32> to vector<16x16xf32>
    %154 = arith.mulf %149, %153 : vector<16x16xf32>
    %155 = arith.truncf %154 : vector<16x16xf32> to vector<16x16xbf16>
    %cst_50 = arith.constant dense<0.000000e+00> : vector<16x32xf32>
    %156 = tpu.matmul %155, %143, %cst_50 {dimension_numbers = #tpu.dot_dimension_numbers<[1], [0], [0], [1], [0, 0, 1, 1], [], []>} : vector<16x16xbf16>, vector<16x32xbf16>, vector<16x32xf32> -> vector<16x32xf32>
    %157 = arith.truncf %156 : vector<16x32xf32> to vector<16x32xbf16>
    %c16_51 = arith.constant 16 : index
    %c64_52 = arith.constant 64 : index
    %158 = vector.load %arg15[%c16_51, %c64_52] : memref<32x128xbf16, #tpu.memory_space<vmem>>, vector<16x32xbf16>
    tpu.vector_store %arg15[%c16_51, %c64_52], %157 {strides = array<i32>} : memref<32x128xbf16, #tpu.memory_space<vmem>>, vector<16x32xbf16>,
    %159 = vector.extract_strided_slice %32 {offsets = [16, 96], sizes = [16, 32], strides = [1, 1]} : vector<32x384xbf16> to vector<16x32xbf16>
    %160 = vector.extract_strided_slice %32 {offsets = [16, 224], sizes = [16, 32], strides = [1, 1]} : vector<32x384xbf16> to vector<16x32xbf16>
    %161 = vector.extract_strided_slice %32 {offsets = [16, 352], sizes = [16, 32], strides = [1, 1]} : vector<32x384xbf16> to vector<16x32xbf16>
    "tpu.trace_start"() <{level = 10 : i32, message = "qd,kd->qk"}> : () -> ()
    %cst_53 = arith.constant dense<0.000000e+00> : vector<16x16xf32>
    %162 = tpu.matmul %159, %160, %cst_53 {dimension_numbers = #tpu.dot_dimension_numbers<[1], [1], [0], [0], [0, 0, 1, 0], [], []>} : vector<16x32xbf16>, vector<16x32xbf16>, vector<16x16xf32> -> vector<16x16xf32>
    "tpu.trace_stop"() : () -> ()
    %cst_54 = arith.constant dense<0xFF800000> : vector<16xf32>
    %163 = vector.multi_reduction <maximumf>, %162, %cst_54 [1] : vector<16x16xf32> to vector<16xf32>
    %164 = vector.shape_cast %163 : vector<16xf32> to vector<16x1xf32>
    %165 = vector.broadcast %164 : vector<16x1xf32> to vector<16x16xf32>
    %166 = arith.subf %162, %165 : vector<16x16xf32>
    %167 = math.exp %166 : vector<16x16xf32>
    %cst_55 = arith.constant dense<0.000000e+00> : vector<16xf32>
    %168 = vector.multi_reduction <add>, %167, %cst_55 [1] : vector<16x16xf32> to vector<16xf32>
    %169 = vector.shape_cast %168 : vector<16xf32> to vector<16x1xf32>
    %170 = tpu.reciprocal %169 {approx = true} : vector<16x1xf32> -> vector<16x1xf32>
    %171 = vector.broadcast %170 : vector<16x1xf32> to vector<16x16xf32>
    %172 = arith.mulf %167, %171 : vector<16x16xf32>
    %173 = arith.truncf %172 : vector<16x16xf32> to vector<16x16xbf16>
    %cst_56 = arith.constant dense<0.000000e+00> : vector<16x32xf32>
    %174 = tpu.matmul %173, %161, %cst_56 {dimension_numbers = #tpu.dot_dimension_numbers<[1], [0], [0], [1], [0, 0, 1, 1], [], []>} : vector<16x16xbf16>, vector<16x32xbf16>, vector<16x32xf32> -> vector<16x32xf32>
    %175 = arith.truncf %174 : vector<16x32xf32> to vector<16x32xbf16>
    %c16_57 = arith.constant 16 : index
    %c96_58 = arith.constant 96 : index
    %176 = vector.load %arg15[%c16_57, %c96_58] : memref<32x128xbf16, #tpu.memory_space<vmem>>, vector<16x32xbf16>
    tpu.vector_store %arg15[%c16_57, %c96_58], %175 {strides = array<i32>} : memref<32x128xbf16, #tpu.memory_space<vmem>>, vector<16x32xbf16>,
    %c0_59 = arith.constant 0 : index
    %c0_60 = arith.constant 0 : index
    %177 = vector.load %arg15[%c0_59, %c0_60] : memref<32x128xbf16, #tpu.memory_space<vmem>>, vector<32x128xbf16>
    %c0_61 = arith.constant 0 : index
    %c0_62 = arith.constant 0 : index
    %178 = vector.load %arg6[%c0_61, %c0_62] : memref<128x128xbf16, #tpu.memory_space<vmem>>, vector<128x128xbf16>
    %cst_63 = arith.constant dense<0.000000e+00> : vector<32x128xf32>
    %179 = tpu.matmul %177, %178, %cst_63 {dimension_numbers = #tpu.dot_dimension_numbers<[1], [0], [0], [1], [0, 0, 1, 1], [], []>} : vector<32x128xbf16>, vector<128x128xbf16>, vector<32x128xf32> -> vector<32x128xf32>
    %c0_64 = arith.constant 0 : index
    %c0_65 = arith.constant 0 : index
    %180 = vector.load %arg7[%c0_64, %c0_65] : memref<1x128xf32, #tpu.memory_space<vmem>>, vector<1x128xf32>
    %181 = vector.broadcast %180 : vector<1x128xf32> to vector<32x128xf32>
    %182 = arith.addf %179, %181 : vector<32x128xf32>
    %183 = arith.addf %182, %1 : vector<32x128xf32>
    %c0_66 = arith.constant 0 : index
    %c0_67 = arith.constant 0 : index
    %184 = vector.load %arg8[%c0_66, %c0_67] : memref<1x128xf32, #tpu.memory_space<vmem>>, vector<1x128xf32>
    %c0_68 = arith.constant 0 : index
    %c0_69 = arith.constant 0 : index
    %185 = vector.load %arg9[%c0_68, %c0_69] : memref<1x128xf32, #tpu.memory_space<vmem>>, vector<1x128xf32>
    %cst_70 = arith.constant dense<0.000000e+00> : vector<32xf32>
    %186 = vector.multi_reduction <add>, %183, %cst_70 [1] : vector<32x128xf32> to vector<32xf32>
    %187 = vector.shape_cast %186 : vector<32xf32> to vector<32x1xf32>
    %cst_71 = arith.constant 1.280000e+02 : f32
    %188 = vector.broadcast %cst_71 : f32 to vector<32x1xf32>
    %189 = arith.divf %187, %188 : vector<32x1xf32>
    %190 = vector.broadcast %189 : vector<32x1xf32> to vector<32x128xf32>
    %191 = arith.subf %183, %190 : vector<32x128xf32>
    %192 = arith.mulf %191, %191 : vector<32x128xf32>
    %cst_72 = arith.constant dense<0.000000e+00> : vector<32xf32>
    %193 = vector.multi_reduction <add>, %192, %cst_72 [1] : vector<32x128xf32> to vector<32xf32>
    %194 = vector.shape_cast %193 : vector<32xf32> to vector<32x1xf32>
    %cst_73 = arith.constant 1.280000e+02 : f32
    %195 = vector.broadcast %cst_73 : f32 to vector<32x1xf32>
    %196 = arith.divf %194, %195 : vector<32x1xf32>
    %197 = vector.broadcast %189 : vector<32x1xf32> to vector<32x128xf32>
    %198 = arith.subf %183, %197 : vector<32x128xf32>
    %cst_74 = arith.constant 9.99999974E-6 : f32
    %199 = vector.broadcast %cst_74 : f32 to vector<32x1xf32>
    %200 = arith.addf %196, %199 : vector<32x1xf32>
    %201 = math.rsqrt %200 : vector<32x1xf32>
    %202 = vector.broadcast %201 : vector<32x1xf32> to vector<32x128xf32>
    %203 = arith.mulf %198, %202 : vector<32x128xf32>
    %204 = vector.broadcast %184 : vector<1x128xf32> to vector<32x128xf32>
    %205 = arith.mulf %203, %204 : vector<32x128xf32>
    %206 = vector.broadcast %185 : vector<1x128xf32> to vector<32x128xf32>
    %207 = arith.addf %205, %206 : vector<32x128xf32>
    %208 = arith.truncf %207 : vector<32x128xf32> to vector<32x128xbf16>
    %c0_75 = arith.constant 0 : index
    %c0_76 = arith.constant 0 : index
    %209 = vector.load %arg10[%c0_75, %c0_76] : memref<128x256xbf16, #tpu.memory_space<vmem>>, vector<128x256xbf16>
    %cst_77 = arith.constant dense<0.000000e+00> : vector<32x256xf32>
    %210 = tpu.matmul %208, %209, %cst_77 {dimension_numbers = #tpu.dot_dimension_numbers<[1], [0], [0], [1], [0, 0, 1, 1], [], []>} : vector<32x128xbf16>, vector<128x256xbf16>, vector<32x256xf32> -> vector<32x256xf32>
    %c0_78 = arith.constant 0 : index
    %c0_79 = arith.constant 0 : index
    %211 = vector.load %arg11[%c0_78, %c0_79] : memref<1x256xf32, #tpu.memory_space<vmem>>, vector<1x256xf32>
    %212 = vector.broadcast %211 : vector<1x256xf32> to vector<32x256xf32>
    %213 = arith.addf %210, %212 : vector<32x256xf32>
    %cst_80 = arith.constant 5.000000e-01 : f32
    %214 = vector.broadcast %cst_80 : f32 to vector<32x256xf32>
    %215 = arith.mulf %214, %213 : vector<32x256xf32>
    %cst_81 = arith.constant 0.707106769 : f32
    %216 = vector.broadcast %cst_81 : f32 to vector<32x256xf32>
    %217 = arith.mulf %213, %216 : vector<32x256xf32>
    %218 = math.erf %217 : vector<32x256xf32>
    %cst_82 = arith.constant 1.000000e+00 : f32
    %219 = vector.broadcast %cst_82 : f32 to vector<32x256xf32>
    %220 = arith.addf %219, %218 : vector<32x256xf32>
    %221 = arith.mulf %215, %220 : vector<32x256xf32>
    %222 = arith.truncf %221 : vector<32x256xf32> to vector<32x256xbf16>
    %c0_83 = arith.constant 0 : index
    %c0_84 = arith.constant 0 : index
    %223 = vector.load %arg12[%c0_83, %c0_84] : memref<256x128xbf16, #tpu.memory_space<vmem>>, vector<256x128xbf16>
    %cst_85 = arith.constant dense<0.000000e+00> : vector<32x128xf32>
    %224 = tpu.matmul %222, %223, %cst_85 {dimension_numbers = #tpu.dot_dimension_numbers<[1], [0], [0], [1], [0, 0, 1, 1], [], []>} : vector<32x256xbf16>, vector<256x128xbf16>, vector<32x128xf32> -> vector<32x128xf32>
    %c0_86 = arith.constant 0 : index
    %c0_87 = arith.constant 0 : index
    %225 = vector.load %arg13[%c0_86, %c0_87] : memref<1x128xf32, #tpu.memory_space<vmem>>, vector<1x128xf32>
    %226 = vector.broadcast %225 : vector<1x128xf32> to vector<32x128xf32>
    %227 = arith.addf %224, %226 : vector<32x128xf32>
    %228 = arith.addf %227, %183 : vector<32x128xf32>
    %229 = vector.shape_cast %228 : vector<32x128xf32> to vector<2x16x128xf32>
    %c0_88 = arith.constant 0 : index
    %c0_89 = arith.constant 0 : index
    %c0_90 = arith.constant 0 : index
    %230 = vector.load %arg14[%c0_88, %c0_89, %c0_90] : memref<2x16x128xf32, #tpu.memory_space<vmem>>, vector<2x16x128xf32>
    tpu.vector_store %arg14[%c0_88, %c0_89, %c0_90], %229 {strides = array<i32>} : memref<2x16x128xf32, #tpu.memory_space<vmem>>, vector<2x16x128xf32>,
    return
  }
  func.func @transform_0(%arg0: i32) -> (i32, i32, i32) {
    %c0_i32 = arith.constant 0 : i32
    %c0_i32_0 = arith.constant 0 : i32
    %c0_i32_1 = arith.constant 0 : i32
    return %arg0, %c0_i32, %c0_i32_0 : i32, i32, i32
  }
  func.func @transform_1(%arg0: i32) -> (i32, i32) {
    %c0_i32 = arith.constant 0 : i32
    %c0_i32_0 = arith.constant 0 : i32
    %c0_i32_1 = arith.constant 0 : i32
    return %c0_i32, %c0_i32_0 : i32, i32
  }
  func.func @transform_2(%arg0: i32) -> (i32, i32) {
    %c0_i32 = arith.constant 0 : i32
    %c0_i32_0 = arith.constant 0 : i32
    %c0_i32_1 = arith.constant 0 : i32
    return %c0_i32, %c0_i32_0 : i32, i32
  }
  func.func @transform_3(%arg0: i32) -> (i32, i32) {
    %c0_i32 = arith.constant 0 : i32
    %c0_i32_0 = arith.constant 0 : i32
    %c0_i32_1 = arith.constant 0 : i32
    return %c0_i32, %c0_i32_0 : i32, i32
  }
  func.func @transform_4(%arg0: i32) -> (i32, i32) {
    %c0_i32 = arith.constant 0 : i32
    %c0_i32_0 = arith.constant 0 : i32
    %c0_i32_1 = arith.constant 0 : i32
    return %c0_i32, %c0_i32_0 : i32, i32
  }
  func.func @transform_5(%arg0: i32) -> (i32, i32) {
    %c0_i32 = arith.constant 0 : i32
    %c0_i32_0 = arith.constant 0 : i32
    %c0_i32_1 = arith.constant 0 : i32
    return %c0_i32, %c0_i32_0 : i32, i32
  }
  func.func @transform_6(%arg0: i32) -> (i32, i32) {
    %c0_i32 = arith.constant 0 : i32
    %c0_i32_0 = arith.constant 0 : i32
    %c0_i32_1 = arith.constant 0 : i32
    return %c0_i32, %c0_i32_0 : i32, i32
  }
  func.func @transform_7(%arg0: i32) -> (i32, i32) {
    %c0_i32 = arith.constant 0 : i32
    %c0_i32_0 = arith.constant 0 : i32
    %c0_i32_1 = arith.constant 0 : i32
    return %c0_i32, %c0_i32_0 : i32, i32
  }
  func.func @transform_8(%arg0: i32) -> (i32, i32) {
    %c0_i32 = arith.constant 0 : i32
    %c0_i32_0 = arith.constant 0 : i32
    %c0_i32_1 = arith.constant 0 : i32
    return %c0_i32, %c0_i32_0 : i32, i32
  }
  func.func @transform_9(%arg0: i32) -> (i32, i32) {
    %c0_i32 = arith.constant 0 : i32
    %c0_i32_0 = arith.constant 0 : i32
    %c0_i32_1 = arith.constant 0 : i32
    return %c0_i32, %c0_i32_0 : i32, i32
  }
  func.func @transform_10(%arg0: i32) -> (i32, i32) {
    %c0_i32 = arith.constant 0 : i32
    %c0_i32_0 = arith.constant 0 : i32
    %c0_i32_1 = arith.constant 0 : i32
    return %c0_i32, %c0_i32_0 : i32, i32
  }
  func.func @transform_11(%arg0: i32) -> (i32, i32) {
    %c0_i32 = arith.constant 0 : i32
    %c0_i32_0 = arith.constant 0 : i32
    %c0_i32_1 = arith.constant 0 : i32
    return %c0_i32, %c0_i32_0 : i32, i32
  }
  func.func @transform_12(%arg0: i32) -> (i32, i32) {
    %c0_i32 = arith.constant 0 : i32
    %c0_i32_0 = arith.constant 0 : i32
    %c0_i32_1 = arith.constant 0 : i32
    return %c0_i32, %c0_i32_0 : i32, i32
  }
  func.func @transform_13(%arg0: i32) -> (i32, i32, i32) {
    %c0_i32 = arith.constant 0 : i32
    %c0_i32_0 = arith.constant 0 : i32
    %c0_i32_1 = arith.constant 0 : i32
    return %arg0, %c0_i32, %c0_i32_0 : i32, i32, i32
  }
}

module attributes {stable_mosaic.version = 11 : i64} {
  func.func @encoder_block_kernel(%arg0: i32, %arg1: memref<2x16x128xf32, #tpu.memory_space<vmem>>, %arg2: memref<1x128xf32, #tpu.memory_space<vmem>>, %arg3: memref<1x128xf32, #tpu.memory_space<vmem>>, %arg4: memref<128x384xbf16, #tpu.memory_space<vmem>>, %arg5: memref<1x384xf32, #tpu.memory_space<vmem>>, %arg6: memref<128x128xbf16, #tpu.memory_space<vmem>>, %arg7: memref<1x128xf32, #tpu.memory_space<vmem>>, %arg8: memref<1x128xf32, #tpu.memory_space<vmem>>, %arg9: memref<1x128xf32, #tpu.memory_space<vmem>>, %arg10: memref<128x256xbf16, #tpu.memory_space<vmem>>, %arg11: memref<1x256xf32, #tpu.memory_space<vmem>>, %arg12: memref<256x128xbf16, #tpu.memory_space<vmem>>, %arg13: memref<1x128xf32, #tpu.memory_space<vmem>>, %arg14: memref<2x16x128xf32, #tpu.memory_space<vmem>>, %arg15: memref<32x128xbf16, #tpu.memory_space<vmem>>) attributes {dimension_semantics = [#tpu.dimension_semantics<parallel>], iteration_bounds = array<i64: 1>, scalar_prefetch = 0 : i64, scratch_operands = 1 : i64, tpu.core_type = #tpu.core_type<tc>, window_params = [{transform_indices = @transform_0, window_bounds = array<i64: 2, 16, 128>}, {pipeline_mode = #tpu.pipeline_mode<synchronous>, transform_indices = @transform_1, window_bounds = array<i64: 1, 128>}, {pipeline_mode = #tpu.pipeline_mode<synchronous>, transform_indices = @transform_2, window_bounds = array<i64: 1, 128>}, {pipeline_mode = #tpu.pipeline_mode<synchronous>, transform_indices = @transform_3, window_bounds = array<i64: 128, 384>}, {pipeline_mode = #tpu.pipeline_mode<synchronous>, transform_indices = @transform_4, window_bounds = array<i64: 1, 384>}, {pipeline_mode = #tpu.pipeline_mode<synchronous>, transform_indices = @transform_5, window_bounds = array<i64: 128, 128>}, {pipeline_mode = #tpu.pipeline_mode<synchronous>, transform_indices = @transform_6, window_bounds = array<i64: 1, 128>}, {pipeline_mode = #tpu.pipeline_mode<synchronous>, transform_indices = @transform_7, window_bounds = array<i64: 1, 128>}, {pipeline_mode = #tpu.pipeline_mode<synchronous>, transform_indices = @transform_8, window_bounds = array<i64: 1, 128>}, {pipeline_mode = #tpu.pipeline_mode<synchronous>, transform_indices = @transform_9, window_bounds = array<i64: 128, 256>}, {pipeline_mode = #tpu.pipeline_mode<synchronous>, transform_indices = @transform_10, window_bounds = array<i64: 1, 256>}, {pipeline_mode = #tpu.pipeline_mode<synchronous>, transform_indices = @transform_11, window_bounds = array<i64: 256, 128>}, {pipeline_mode = #tpu.pipeline_mode<synchronous>, transform_indices = @transform_12, window_bounds = array<i64: 1, 128>}, {transform_indices = @transform_13, window_bounds = array<i64: 2, 16, 128>}]} {
    %c0 = arith.constant 0 : index
    %c0_0 = arith.constant 0 : index
    %c0_1 = arith.constant 0 : index
    %0 = vector.load %arg1[%c0, %c0_0, %c0_1] : memref<2x16x128xf32, #tpu.memory_space<vmem>>, vector<2x16x128xf32>
    %1 = vector.shape_cast %0 : vector<2x16x128xf32> to vector<32x128xf32>
    %c0_2 = arith.constant 0 : index
    %c0_3 = arith.constant 0 : index
    %2 = vector.load %arg2[%c0_2, %c0_3] : memref<1x128xf32, #tpu.memory_space<vmem>>, vector<1x128xf32>
    %c0_4 = arith.constant 0 : index
    %c0_5 = arith.constant 0 : index
    %3 = vector.load %arg3[%c0_4, %c0_5] : memref<1x128xf32, #tpu.memory_space<vmem>>, vector<1x128xf32>
    %cst = arith.constant dense<0.000000e+00> : vector<32xf32>
    %4 = vector.multi_reduction <add>, %1, %cst [1] : vector<32x128xf32> to vector<32xf32>
    %5 = vector.shape_cast %4 : vector<32xf32> to vector<32x1xf32>
    %cst_6 = arith.constant 1.280000e+02 : f32
    %6 = vector.broadcast %cst_6 : f32 to vector<32x1xf32>
    %7 = arith.divf %5, %6 : vector<32x1xf32>
    %8 = vector.broadcast %7 : vector<32x1xf32> to vector<32x128xf32>
    %9 = arith.subf %1, %8 : vector<32x128xf32>
    %10 = arith.mulf %9, %9 : vector<32x128xf32>
    %cst_7 = arith.constant dense<0.000000e+00> : vector<32xf32>
    %11 = vector.multi_reduction <add>, %10, %cst_7 [1] : vector<32x128xf32> to vector<32xf32>
    %12 = vector.shape_cast %11 : vector<32xf32> to vector<32x1xf32>
    %cst_8 = arith.constant 1.280000e+02 : f32
    %13 = vector.broadcast %cst_8 : f32 to vector<32x1xf32>
    %14 = arith.divf %12, %13 : vector<32x1xf32>
    %15 = vector.broadcast %7 : vector<32x1xf32> to vector<32x128xf32>
    %16 = arith.subf %1, %15 : vector<32x128xf32>
    %cst_9 = arith.constant 9.99999974E-6 : f32
    %17 = vector.broadcast %cst_9 : f32 to vector<32x1xf32>
    %18 = arith.addf %14, %17 : vector<32x1xf32>
    %19 = math.rsqrt %18 : vector<32x1xf32>
    %20 = vector.broadcast %19 : vector<32x1xf32> to vector<32x128xf32>
    %21 = arith.mulf %16, %20 : vector<32x128xf32>
    %22 = vector.broadcast %2 : vector<1x128xf32> to vector<32x128xf32>
    %23 = arith.mulf %21, %22 : vector<32x128xf32>
    %24 = vector.broadcast %3 : vector<1x128xf32> to vector<32x128xf32>
    %25 = arith.addf %23, %24 : vector<32x128xf32>
    %26 = arith.truncf %25 : vector<32x128xf32> to vector<32x128xbf16>
    %c0_10 = arith.constant 0 : index
    %c0_11 = arith.constant 0 : index
    %27 = vector.load %arg4[%c0_10, %c0_11] : memref<128x384xbf16, #tpu.memory_space<vmem>>, vector<128x384xbf16>
    %cst_12 = arith.constant dense<0.000000e+00> : vector<32x384xf32>
    %28 = tpu.matmul %26, %27, %cst_12 {dimension_numbers = #tpu.dot_dimension_numbers<[1], [0], [0], [1], [0, 0, 1, 1], [], []>} : vector<32x128xbf16>, vector<128x384xbf16>, vector<32x384xf32> -> vector<32x384xf32>
    %c0_13 = arith.constant 0 : index
    %c0_14 = arith.constant 0 : index
    %29 = vector.load %arg5[%c0_13, %c0_14] : memref<1x384xf32, #tpu.memory_space<vmem>>, vector<1x384xf32>
    %30 = vector.broadcast %29 : vector<1x384xf32> to vector<32x384xf32>
    %31 = arith.addf %28, %30 : vector<32x384xf32>
    %32 = arith.truncf %31 : vector<32x384xf32> to vector<32x384xbf16>
    %33 = vector.extract_strided_slice %32 {offsets = [0, 0], sizes = [16, 32], strides = [1, 1]} : vector<32x384xbf16> to vector<16x32xbf16>
    %34 = vector.extract_strided_slice %32 {offsets = [0, 128], sizes = [16, 32], strides = [1, 1]} : vector<32x384xbf16> to vector<16x32xbf16>
    %35 = vector.extract_strided_slice %32 {offsets = [0, 256], sizes = [16, 32], strides = [1, 1]} : vector<32x384xbf16> to vector<16x32xbf16>
    "tpu.trace_start"() <{level = 10 : i32, message = "qd,kd->qk"}> : () -> ()
    %cst_15 = arith.constant dense<0.000000e+00> : vector<16x16xf32>
    %36 = tpu.matmul %33, %34, %cst_15 {dimension_numbers = #tpu.dot_dimension_numbers<[1], [1], [0], [0], [0, 0, 1, 0], [], []>} : vector<16x32xbf16>, vector<16x32xbf16>, vector<16x16xf32> -> vector<16x16xf32>
    "tpu.trace_stop"() : () -> ()
    %cst_16 = arith.constant dense<0xFF800000> : vector<16xf32>
    %37 = vector.multi_reduction <maximumf>, %36, %cst_16 [1] : vector<16x16xf32> to vector<16xf32>
    %38 = vector.shape_cast %37 : vector<16xf32> to vector<16x1xf32>
    %39 = vector.broadcast %38 : vector<16x1xf32> to vector<16x16xf32>
    %40 = arith.subf %36, %39 : vector<16x16xf32>
    %41 = math.exp %40 : vector<16x16xf32>
    %cst_17 = arith.constant dense<0.000000e+00> : vector<16xf32>
    %42 = vector.multi_reduction <add>, %41, %cst_17 [1] : vector<16x16xf32> to vector<16xf32>
    %43 = vector.shape_cast %42 : vector<16xf32> to vector<16x1xf32>
    %44 = tpu.reciprocal %43 {approx = true} : vector<16x1xf32> -> vector<16x1xf32>
    %45 = vector.broadcast %44 : vector<16x1xf32> to vector<16x16xf32>
    %46 = arith.mulf %41, %45 : vector<16x16xf32>
    %47 = arith.truncf %46 : vector<16x16xf32> to vector<16x16xbf16>
    %cst_18 = arith.constant dense<0.000000e+00> : vector<16x32xf32>
    %48 = tpu.matmul %47, %35, %cst_18 {dimension_numbers = #tpu.dot_dimension_numbers<[1], [0], [0], [1], [0, 0, 1, 1], [], []>} : vector<16x16xbf16>, vector<16x32xbf16>, vector<16x32xf32> -> vector<16x32xf32>
    %49 = arith.truncf %48 : vector<16x32xf32> to vector<16x32xbf16>
    %c0_19 = arith.constant 0 : index
    %c0_20 = arith.constant 0 : index
    %50 = vector.load %arg15[%c0_19, %c0_20] : memref<32x128xbf16, #tpu.memory_space<vmem>>, vector<16x32xbf16>
    tpu.vector_store %arg15[%c0_19, %c0_20], %49 {strides = array<i32>} : memref<32x128xbf16, #tpu.memory_space<vmem>>, vector<16x32xbf16>,
    %51 = vector.extract_strided_slice %32 {offsets = [0, 32], sizes = [16, 32], strides = [1, 1]} : vector<32x384xbf16> to vector<16x32xbf16>
    %52 = vector.extract_strided_slice %32 {offsets = [0, 160], sizes = [16, 32], strides = [1, 1]} : vector<32x384xbf16> to vector<16x32xbf16>
    %53 = vector.extract_strided_slice %32 {offsets = [0, 288], sizes = [16, 32], strides = [1, 1]} : vector<32x384xbf16> to vector<16x32xbf16>
    "tpu.trace_start"() <{level = 10 : i32, message = "qd,kd->qk"}> : () -> ()
    %cst_21 = arith.constant dense<0.000000e+00> : vector<16x16xf32>
    %54 = tpu.matmul %51, %52, %cst_21 {dimension_numbers = #tpu.dot_dimension_numbers<[1], [1], [0], [0], [0, 0, 1, 0], [], []>} : vector<16x32xbf16>, vector<16x32xbf16>, vector<16x16xf32> -> vector<16x16xf32>
    "tpu.trace_stop"() : () -> ()
    %cst_22 = arith.constant dense<0xFF800000> : vector<16xf32>
    %55 = vector.multi_reduction <maximumf>, %54, %cst_22 [1] : vector<16x16xf32> to vector<16xf32>
    %56 = vector.shape_cast %55 : vector<16xf32> to vector<16x1xf32>
    %57 = vector.broadcast %56 : vector<16x1xf32> to vector<16x16xf32>
    %58 = arith.subf %54, %57 : vector<16x16xf32>
    %59 = math.exp %58 : vector<16x16xf32>
    %cst_23 = arith.constant dense<0.000000e+00> : vector<16xf32>
    %60 = vector.multi_reduction <add>, %59, %cst_23 [1] : vector<16x16xf32> to vector<16xf32>
    %61 = vector.shape_cast %60 : vector<16xf32> to vector<16x1xf32>
    %62 = tpu.reciprocal %61 {approx = true} : vector<16x1xf32> -> vector<16x1xf32>
    %63 = vector.broadcast %62 : vector<16x1xf32> to vector<16x16xf32>
    %64 = arith.mulf %59, %63 : vector<16x16xf32>
    %65 = arith.truncf %64 : vector<16x16xf32> to vector<16x16xbf16>
    %cst_24 = arith.constant dense<0.000000e+00> : vector<16x32xf32>
    %66 = tpu.matmul %65, %53, %cst_24 {dimension_numbers = #tpu.dot_dimension_numbers<[1], [0], [0], [1], [0, 0, 1, 1], [], []>} : vector<16x16xbf16>, vector<16x32xbf16>, vector<16x32xf32> -> vector<16x32xf32>
    %67 = arith.truncf %66 : vector<16x32xf32> to vector<16x32xbf16>
    %c0_25 = arith.constant 0 : index
    %c32 = arith.constant 32 : index
    %68 = vector.load %arg15[%c0_25, %c32] : memref<32x128xbf16, #tpu.memory_space<vmem>>, vector<16x32xbf16>
    tpu.vector_store %arg15[%c0_25, %c32], %67 {strides = array<i32>} : memref<32x128xbf16, #tpu.memory_space<vmem>>, vector<16x32xbf16>,
    %69 = vector.extract_strided_slice %32 {offsets = [0, 64], sizes = [16, 32], strides = [1, 1]} : vector<32x384xbf16> to vector<16x32xbf16>
    %70 = vector.extract_strided_slice %32 {offsets = [0, 192], sizes = [16, 32], strides = [1, 1]} : vector<32x384xbf16> to vector<16x32xbf16>
    %71 = vector.extract_strided_slice %32 {offsets = [0, 320], sizes = [16, 32], strides = [1, 1]} : vector<32x384xbf16> to vector<16x32xbf16>
    "tpu.trace_start"() <{level = 10 : i32, message = "qd,kd->qk"}> : () -> ()
    %cst_26 = arith.constant dense<0.000000e+00> : vector<16x16xf32>
    %72 = tpu.matmul %69, %70, %cst_26 {dimension_numbers = #tpu.dot_dimension_numbers<[1], [1], [0], [0], [0, 0, 1, 0], [], []>} : vector<16x32xbf16>, vector<16x32xbf16>, vector<16x16xf32> -> vector<16x16xf32>
    "tpu.trace_stop"() : () -> ()
    %cst_27 = arith.constant dense<0xFF800000> : vector<16xf32>
    %73 = vector.multi_reduction <maximumf>, %72, %cst_27 [1] : vector<16x16xf32> to vector<16xf32>
    %74 = vector.shape_cast %73 : vector<16xf32> to vector<16x1xf32>
    %75 = vector.broadcast %74 : vector<16x1xf32> to vector<16x16xf32>
    %76 = arith.subf %72, %75 : vector<16x16xf32>
    %77 = math.exp %76 : vector<16x16xf32>
    %cst_28 = arith.constant dense<0.000000e+00> : vector<16xf32>
    %78 = vector.multi_reduction <add>, %77, %cst_28 [1] : vector<16x16xf32> to vector<16xf32>
    %79 = vector.shape_cast %78 : vector<16xf32> to vector<16x1xf32>
    %80 = tpu.reciprocal %79 {approx = true} : vector<16x1xf32> -> vector<16x1xf32>
    %81 = vector.broadcast %80 : vector<16x1xf32> to vector<16x16xf32>
    %82 = arith.mulf %77, %81 : vector<16x16xf32>
    %83 = arith.truncf %82 : vector<16x16xf32> to vector<16x16xbf16>
    %cst_29 = arith.constant dense<0.000000e+00> : vector<16x32xf32>
    %84 = tpu.matmul %83, %71, %cst_29 {dimension_numbers = #tpu.dot_dimension_numbers<[1], [0], [0], [1], [0, 0, 1, 1], [], []>} : vector<16x16xbf16>, vector<16x32xbf16>, vector<16x32xf32> -> vector<16x32xf32>
    %85 = arith.truncf %84 : vector<16x32xf32> to vector<16x32xbf16>
    %c0_30 = arith.constant 0 : index
    %c64 = arith.constant 64 : index
    %86 = vector.load %arg15[%c0_30, %c64] : memref<32x128xbf16, #tpu.memory_space<vmem>>, vector<16x32xbf16>
    tpu.vector_store %arg15[%c0_30, %c64], %85 {strides = array<i32>} : memref<32x128xbf16, #tpu.memory_space<vmem>>, vector<16x32xbf16>,
    %87 = vector.extract_strided_slice %32 {offsets = [0, 96], sizes = [16, 32], strides = [1, 1]} : vector<32x384xbf16> to vector<16x32xbf16>
    %88 = vector.extract_strided_slice %32 {offsets = [0, 224], sizes = [16, 32], strides = [1, 1]} : vector<32x384xbf16> to vector<16x32xbf16>
    %89 = vector.extract_strided_slice %32 {offsets = [0, 352], sizes = [16, 32], strides = [1, 1]} : vector<32x384xbf16> to vector<16x32xbf16>
    "tpu.trace_start"() <{level = 10 : i32, message = "qd,kd->qk"}> : () -> ()
    %cst_31 = arith.constant dense<0.000000e+00> : vector<16x16xf32>
    %90 = tpu.matmul %87, %88, %cst_31 {dimension_numbers = #tpu.dot_dimension_numbers<[1], [1], [0], [0], [0, 0, 1, 0], [], []>} : vector<16x32xbf16>, vector<16x32xbf16>, vector<16x16xf32> -> vector<16x16xf32>
    "tpu.trace_stop"() : () -> ()
    %cst_32 = arith.constant dense<0xFF800000> : vector<16xf32>
    %91 = vector.multi_reduction <maximumf>, %90, %cst_32 [1] : vector<16x16xf32> to vector<16xf32>
    %92 = vector.shape_cast %91 : vector<16xf32> to vector<16x1xf32>
    %93 = vector.broadcast %92 : vector<16x1xf32> to vector<16x16xf32>
    %94 = arith.subf %90, %93 : vector<16x16xf32>
    %95 = math.exp %94 : vector<16x16xf32>
    %cst_33 = arith.constant dense<0.000000e+00> : vector<16xf32>
    %96 = vector.multi_reduction <add>, %95, %cst_33 [1] : vector<16x16xf32> to vector<16xf32>
    %97 = vector.shape_cast %96 : vector<16xf32> to vector<16x1xf32>
    %98 = tpu.reciprocal %97 {approx = true} : vector<16x1xf32> -> vector<16x1xf32>
    %99 = vector.broadcast %98 : vector<16x1xf32> to vector<16x16xf32>
    %100 = arith.mulf %95, %99 : vector<16x16xf32>
    %101 = arith.truncf %100 : vector<16x16xf32> to vector<16x16xbf16>
    %cst_34 = arith.constant dense<0.000000e+00> : vector<16x32xf32>
    %102 = tpu.matmul %101, %89, %cst_34 {dimension_numbers = #tpu.dot_dimension_numbers<[1], [0], [0], [1], [0, 0, 1, 1], [], []>} : vector<16x16xbf16>, vector<16x32xbf16>, vector<16x32xf32> -> vector<16x32xf32>
    %103 = arith.truncf %102 : vector<16x32xf32> to vector<16x32xbf16>
    %c0_35 = arith.constant 0 : index
    %c96 = arith.constant 96 : index
    %104 = vector.load %arg15[%c0_35, %c96] : memref<32x128xbf16, #tpu.memory_space<vmem>>, vector<16x32xbf16>
    tpu.vector_store %arg15[%c0_35, %c96], %103 {strides = array<i32>} : memref<32x128xbf16, #tpu.memory_space<vmem>>, vector<16x32xbf16>,
    %105 = vector.extract_strided_slice %32 {offsets = [16, 0], sizes = [16, 32], strides = [1, 1]} : vector<32x384xbf16> to vector<16x32xbf16>
    %106 = vector.extract_strided_slice %32 {offsets = [16, 128], sizes = [16, 32], strides = [1, 1]} : vector<32x384xbf16> to vector<16x32xbf16>
    %107 = vector.extract_strided_slice %32 {offsets = [16, 256], sizes = [16, 32], strides = [1, 1]} : vector<32x384xbf16> to vector<16x32xbf16>
    "tpu.trace_start"() <{level = 10 : i32, message = "qd,kd->qk"}> : () -> ()
    %cst_36 = arith.constant dense<0.000000e+00> : vector<16x16xf32>
    %108 = tpu.matmul %105, %106, %cst_36 {dimension_numbers = #tpu.dot_dimension_numbers<[1], [1], [0], [0], [0, 0, 1, 0], [], []>} : vector<16x32xbf16>, vector<16x32xbf16>, vector<16x16xf32> -> vector<16x16xf32>
    "tpu.trace_stop"() : () -> ()
    %cst_37 = arith.constant dense<0xFF800000> : vector<16xf32>
    %109 = vector.multi_reduction <maximumf>, %108, %cst_37 [1] : vector<16x16xf32> to vector<16xf32>
    %110 = vector.shape_cast %109 : vector<16xf32> to vector<16x1xf32>
    %111 = vector.broadcast %110 : vector<16x1xf32> to vector<16x16xf32>
    %112 = arith.subf %108, %111 : vector<16x16xf32>
    %113 = math.exp %112 : vector<16x16xf32>
    %cst_38 = arith.constant dense<0.000000e+00> : vector<16xf32>
    %114 = vector.multi_reduction <add>, %113, %cst_38 [1] : vector<16x16xf32> to vector<16xf32>
    %115 = vector.shape_cast %114 : vector<16xf32> to vector<16x1xf32>
    %116 = tpu.reciprocal %115 {approx = true} : vector<16x1xf32> -> vector<16x1xf32>
    %117 = vector.broadcast %116 : vector<16x1xf32> to vector<16x16xf32>
    %118 = arith.mulf %113, %117 : vector<16x16xf32>
    %119 = arith.truncf %118 : vector<16x16xf32> to vector<16x16xbf16>
    %cst_39 = arith.constant dense<0.000000e+00> : vector<16x32xf32>
    %120 = tpu.matmul %119, %107, %cst_39 {dimension_numbers = #tpu.dot_dimension_numbers<[1], [0], [0], [1], [0, 0, 1, 1], [], []>} : vector<16x16xbf16>, vector<16x32xbf16>, vector<16x32xf32> -> vector<16x32xf32>
    %121 = arith.truncf %120 : vector<16x32xf32> to vector<16x32xbf16>
    %c16 = arith.constant 16 : index
    %c0_40 = arith.constant 0 : index
    %122 = vector.load %arg15[%c16, %c0_40] : memref<32x128xbf16, #tpu.memory_space<vmem>>, vector<16x32xbf16>
    tpu.vector_store %arg15[%c16, %c0_40], %121 {strides = array<i32>} : memref<32x128xbf16, #tpu.memory_space<vmem>>, vector<16x32xbf16>,
    %123 = vector.extract_strided_slice %32 {offsets = [16, 32], sizes = [16, 32], strides = [1, 1]} : vector<32x384xbf16> to vector<16x32xbf16>
    %124 = vector.extract_strided_slice %32 {offsets = [16, 160], sizes = [16, 32], strides = [1, 1]} : vector<32x384xbf16> to vector<16x32xbf16>
    %125 = vector.extract_strided_slice %32 {offsets = [16, 288], sizes = [16, 32], strides = [1, 1]} : vector<32x384xbf16> to vector<16x32xbf16>
    "tpu.trace_start"() <{level = 10 : i32, message = "qd,kd->qk"}> : () -> ()
    %cst_41 = arith.constant dense<0.000000e+00> : vector<16x16xf32>
    %126 = tpu.matmul %123, %124, %cst_41 {dimension_numbers = #tpu.dot_dimension_numbers<[1], [1], [0], [0], [0, 0, 1, 0], [], []>} : vector<16x32xbf16>, vector<16x32xbf16>, vector<16x16xf32> -> vector<16x16xf32>
    "tpu.trace_stop"() : () -> ()
    %cst_42 = arith.constant dense<0xFF800000> : vector<16xf32>
    %127 = vector.multi_reduction <maximumf>, %126, %cst_42 [1] : vector<16x16xf32> to vector<16xf32>
    %128 = vector.shape_cast %127 : vector<16xf32> to vector<16x1xf32>
    %129 = vector.broadcast %128 : vector<16x1xf32> to vector<16x16xf32>
    %130 = arith.subf %126, %129 : vector<16x16xf32>
    %131 = math.exp %130 : vector<16x16xf32>
    %cst_43 = arith.constant dense<0.000000e+00> : vector<16xf32>
    %132 = vector.multi_reduction <add>, %131, %cst_43 [1] : vector<16x16xf32> to vector<16xf32>
    %133 = vector.shape_cast %132 : vector<16xf32> to vector<16x1xf32>
    %134 = tpu.reciprocal %133 {approx = true} : vector<16x1xf32> -> vector<16x1xf32>
    %135 = vector.broadcast %134 : vector<16x1xf32> to vector<16x16xf32>
    %136 = arith.mulf %131, %135 : vector<16x16xf32>
    %137 = arith.truncf %136 : vector<16x16xf32> to vector<16x16xbf16>
    %cst_44 = arith.constant dense<0.000000e+00> : vector<16x32xf32>
    %138 = tpu.matmul %137, %125, %cst_44 {dimension_numbers = #tpu.dot_dimension_numbers<[1], [0], [0], [1], [0, 0, 1, 1], [], []>} : vector<16x16xbf16>, vector<16x32xbf16>, vector<16x32xf32> -> vector<16x32xf32>
    %139 = arith.truncf %138 : vector<16x32xf32> to vector<16x32xbf16>
    %c16_45 = arith.constant 16 : index
    %c32_46 = arith.constant 32 : index
    %140 = vector.load %arg15[%c16_45, %c32_46] : memref<32x128xbf16, #tpu.memory_space<vmem>>, vector<16x32xbf16>
    tpu.vector_store %arg15[%c16_45, %c32_46], %139 {strides = array<i32>} : memref<32x128xbf16, #tpu.memory_space<vmem>>, vector<16x32xbf16>,
    %141 = vector.extract_strided_slice %32 {offsets = [16, 64], sizes = [16, 32], strides = [1, 1]} : vector<32x384xbf16> to vector<16x32xbf16>
    %142 = vector.extract_strided_slice %32 {offsets = [16, 192], sizes = [16, 32], strides = [1, 1]} : vector<32x384xbf16> to vector<16x32xbf16>
    %143 = vector.extract_strided_slice %32 {offsets = [16, 320], sizes = [16, 32], strides = [1, 1]} : vector<32x384xbf16> to vector<16x32xbf16>
    "tpu.trace_start"() <{level = 10 : i32, message = "qd,kd->qk"}> : () -> ()
    %cst_47 = arith.constant dense<0.000000e+00> : vector<16x16xf32>
    %144 = tpu.matmul %141, %142, %cst_47 {dimension_numbers = #tpu.dot_dimension_numbers<[1], [1], [0], [0], [0, 0, 1, 0], [], []>} : vector<16x32xbf16>, vector<16x32xbf16>, vector<16x16xf32> -> vector<16x16xf32>
    "tpu.trace_stop"() : () -> ()
    %cst_48 = arith.constant dense<0xFF800000> : vector<16xf32>
    %145 = vector.multi_reduction <maximumf>, %144, %cst_48 [1] : vector<16x16xf32> to vector<16xf32>
    %146 = vector.shape_cast %145 : vector<16xf32> to vector<16x1xf32>
    %147 = vector.broadcast %146 : vector<16x1xf32> to vector<16x16xf32>
    %148 = arith.subf %144, %147 : vector<16x16xf32>
    %149 = math.exp %148 : vector<16x16xf32>
    %cst_49 = arith.constant dense<0.000000e+00> : vector<16xf32>
    %150 = vector.multi_reduction <add>, %149, %cst_49 [1] : vector<16x16xf32> to vector<16xf32>
    %151 = vector.shape_cast %150 : vector<16xf32> to vector<16x1xf32>
    %152 = tpu.reciprocal %151 {approx = true} : vector<16x1xf32> -> vector<16x1xf32>
    %153 = vector.broadcast %152 : vector<16x1xf32> to vector<16x16xf32>
    %154 = arith.mulf %149, %153 : vector<16x16xf32>
    %155 = arith.truncf %154 : vector<16x16xf32> to vector<16x16xbf16>
    %cst_50 = arith.constant dense<0.000000e+00> : vector<16x32xf32>
    %156 = tpu.matmul %155, %143, %cst_50 {dimension_numbers = #tpu.dot_dimension_numbers<[1], [0], [0], [1], [0, 0, 1, 1], [], []>} : vector<16x16xbf16>, vector<16x32xbf16>, vector<16x32xf32> -> vector<16x32xf32>
    %157 = arith.truncf %156 : vector<16x32xf32> to vector<16x32xbf16>
    %c16_51 = arith.constant 16 : index
    %c64_52 = arith.constant 64 : index
    %158 = vector.load %arg15[%c16_51, %c64_52] : memref<32x128xbf16, #tpu.memory_space<vmem>>, vector<16x32xbf16>
    tpu.vector_store %arg15[%c16_51, %c64_52], %157 {strides = array<i32>} : memref<32x128xbf16, #tpu.memory_space<vmem>>, vector<16x32xbf16>,
    %159 = vector.extract_strided_slice %32 {offsets = [16, 96], sizes = [16, 32], strides = [1, 1]} : vector<32x384xbf16> to vector<16x32xbf16>
    %160 = vector.extract_strided_slice %32 {offsets = [16, 224], sizes = [16, 32], strides = [1, 1]} : vector<32x384xbf16> to vector<16x32xbf16>
    %161 = vector.extract_strided_slice %32 {offsets = [16, 352], sizes = [16, 32], strides = [1, 1]} : vector<32x384xbf16> to vector<16x32xbf16>
    "tpu.trace_start"() <{level = 10 : i32, message = "qd,kd->qk"}> : () -> ()
    %cst_53 = arith.constant dense<0.000000e+00> : vector<16x16xf32>
    %162 = tpu.matmul %159, %160, %cst_53 {dimension_numbers = #tpu.dot_dimension_numbers<[1], [1], [0], [0], [0, 0, 1, 0], [], []>} : vector<16x32xbf16>, vector<16x32xbf16>, vector<16x16xf32> -> vector<16x16xf32>
    "tpu.trace_stop"() : () -> ()
    %cst_54 = arith.constant dense<0xFF800000> : vector<16xf32>
    %163 = vector.multi_reduction <maximumf>, %162, %cst_54 [1] : vector<16x16xf32> to vector<16xf32>
    %164 = vector.shape_cast %163 : vector<16xf32> to vector<16x1xf32>
    %165 = vector.broadcast %164 : vector<16x1xf32> to vector<16x16xf32>
    %166 = arith.subf %162, %165 : vector<16x16xf32>
    %167 = math.exp %166 : vector<16x16xf32>
    %cst_55 = arith.constant dense<0.000000e+00> : vector<16xf32>
    %168 = vector.multi_reduction <add>, %167, %cst_55 [1] : vector<16x16xf32> to vector<16xf32>
    %169 = vector.shape_cast %168 : vector<16xf32> to vector<16x1xf32>
    %170 = tpu.reciprocal %169 {approx = true} : vector<16x1xf32> -> vector<16x1xf32>
    %171 = vector.broadcast %170 : vector<16x1xf32> to vector<16x16xf32>
    %172 = arith.mulf %167, %171 : vector<16x16xf32>
    %173 = arith.truncf %172 : vector<16x16xf32> to vector<16x16xbf16>
    %cst_56 = arith.constant dense<0.000000e+00> : vector<16x32xf32>
    %174 = tpu.matmul %173, %161, %cst_56 {dimension_numbers = #tpu.dot_dimension_numbers<[1], [0], [0], [1], [0, 0, 1, 1], [], []>} : vector<16x16xbf16>, vector<16x32xbf16>, vector<16x32xf32> -> vector<16x32xf32>
    %175 = arith.truncf %174 : vector<16x32xf32> to vector<16x32xbf16>
    %c16_57 = arith.constant 16 : index
    %c96_58 = arith.constant 96 : index
    %176 = vector.load %arg15[%c16_57, %c96_58] : memref<32x128xbf16, #tpu.memory_space<vmem>>, vector<16x32xbf16>
    tpu.vector_store %arg15[%c16_57, %c96_58], %175 {strides = array<i32>} : memref<32x128xbf16, #tpu.memory_space<vmem>>, vector<16x32xbf16>,
    %c0_59 = arith.constant 0 : index
    %c0_60 = arith.constant 0 : index
    %177 = vector.load %arg15[%c0_59, %c0_60] : memref<32x128xbf16, #tpu.memory_space<vmem>>, vector<32x128xbf16>
    %c0_61 = arith.constant 0 : index
    %c0_62 = arith.constant 0 : index
    %178 = vector.load %arg6[%c0_61, %c0_62] : memref<128x128xbf16, #tpu.memory_space<vmem>>, vector<128x128xbf16>
    %cst_63 = arith.constant dense<0.000000e+00> : vector<32x128xf32>
    %179 = tpu.matmul %177, %178, %cst_63 {dimension_numbers = #tpu.dot_dimension_numbers<[1], [0], [0], [1], [0, 0, 1, 1], [], []>} : vector<32x128xbf16>, vector<128x128xbf16>, vector<32x128xf32> -> vector<32x128xf32>
    %c0_64 = arith.constant 0 : index
    %c0_65 = arith.constant 0 : index
    %180 = vector.load %arg7[%c0_64, %c0_65] : memref<1x128xf32, #tpu.memory_space<vmem>>, vector<1x128xf32>
    %181 = vector.broadcast %180 : vector<1x128xf32> to vector<32x128xf32>
    %182 = arith.addf %179, %181 : vector<32x128xf32>
    %183 = arith.addf %182, %1 : vector<32x128xf32>
    %c0_66 = arith.constant 0 : index
    %c0_67 = arith.constant 0 : index
    %184 = vector.load %arg8[%c0_66, %c0_67] : memref<1x128xf32, #tpu.memory_space<vmem>>, vector<1x128xf32>
    %c0_68 = arith.constant 0 : index
    %c0_69 = arith.constant 0 : index
    %185 = vector.load %arg9[%c0_68, %c0_69] : memref<1x128xf32, #tpu.memory_space<vmem>>, vector<1x128xf32>
    %cst_70 = arith.constant dense<0.000000e+00> : vector<32xf32>
    %186 = vector.multi_reduction <add>, %183, %cst_70 [1] : vector<32x128xf32> to vector<32xf32>
    %187 = vector.shape_cast %186 : vector<32xf32> to vector<32x1xf32>
    %cst_71 = arith.constant 1.280000e+02 : f32
    %188 = vector.broadcast %cst_71 : f32 to vector<32x1xf32>
    %189 = arith.divf %187, %188 : vector<32x1xf32>
    %190 = vector.broadcast %189 : vector<32x1xf32> to vector<32x128xf32>
    %191 = arith.subf %183, %190 : vector<32x128xf32>
    %192 = arith.mulf %191, %191 : vector<32x128xf32>
    %cst_72 = arith.constant dense<0.000000e+00> : vector<32xf32>
    %193 = vector.multi_reduction <add>, %192, %cst_72 [1] : vector<32x128xf32> to vector<32xf32>
    %194 = vector.shape_cast %193 : vector<32xf32> to vector<32x1xf32>
    %cst_73 = arith.constant 1.280000e+02 : f32
    %195 = vector.broadcast %cst_73 : f32 to vector<32x1xf32>
    %196 = arith.divf %194, %195 : vector<32x1xf32>
    %197 = vector.broadcast %189 : vector<32x1xf32> to vector<32x128xf32>
    %198 = arith.subf %183, %197 : vector<32x128xf32>
    %cst_74 = arith.constant 9.99999974E-6 : f32
    %199 = vector.broadcast %cst_74 : f32 to vector<32x1xf32>
    %200 = arith.addf %196, %199 : vector<32x1xf32>
    %201 = math.rsqrt %200 : vector<32x1xf32>
    %202 = vector.broadcast %201 : vector<32x1xf32> to vector<32x128xf32>
    %203 = arith.mulf %198, %202 : vector<32x128xf32>
    %204 = vector.broadcast %184 : vector<1x128xf32> to vector<32x128xf32>
    %205 = arith.mulf %203, %204 : vector<32x128xf32>
    %206 = vector.broadcast %185 : vector<1x128xf32> to vector<32x128xf32>
    %207 = arith.addf %205, %206 : vector<32x128xf32>
    %208 = arith.truncf %207 : vector<32x128xf32> to vector<32x128xbf16>
    %c0_75 = arith.constant 0 : index
    %c0_76 = arith.constant 0 : index
    %209 = vector.load %arg10[%c0_75, %c0_76] : memref<128x256xbf16, #tpu.memory_space<vmem>>, vector<128x256xbf16>
    %cst_77 = arith.constant dense<0.000000e+00> : vector<32x256xf32>
    %210 = tpu.matmul %208, %209, %cst_77 {dimension_numbers = #tpu.dot_dimension_numbers<[1], [0], [0], [1], [0, 0, 1, 1], [], []>} : vector<32x128xbf16>, vector<128x256xbf16>, vector<32x256xf32> -> vector<32x256xf32>
    %c0_78 = arith.constant 0 : index
    %c0_79 = arith.constant 0 : index
    %211 = vector.load %arg11[%c0_78, %c0_79] : memref<1x256xf32, #tpu.memory_space<vmem>>, vector<1x256xf32>
    %212 = vector.broadcast %211 : vector<1x256xf32> to vector<32x256xf32>
    %213 = arith.addf %210, %212 : vector<32x256xf32>
    %cst_80 = arith.constant 5.000000e-01 : f32
    %214 = vector.broadcast %cst_80 : f32 to vector<32x256xf32>
    %215 = arith.mulf %214, %213 : vector<32x256xf32>
    %cst_81 = arith.constant 0.707106769 : f32
    %216 = vector.broadcast %cst_81 : f32 to vector<32x256xf32>
    %217 = arith.mulf %213, %216 : vector<32x256xf32>
    %218 = math.erf %217 : vector<32x256xf32>
    %cst_82 = arith.constant 1.000000e+00 : f32
    %219 = vector.broadcast %cst_82 : f32 to vector<32x256xf32>
    %220 = arith.addf %219, %218 : vector<32x256xf32>
    %221 = arith.mulf %215, %220 : vector<32x256xf32>
    %222 = arith.truncf %221 : vector<32x256xf32> to vector<32x256xbf16>
    %c0_83 = arith.constant 0 : index
    %c0_84 = arith.constant 0 : index
    %223 = vector.load %arg12[%c0_83, %c0_84] : memref<256x128xbf16, #tpu.memory_space<vmem>>, vector<256x128xbf16>
    %cst_85 = arith.constant dense<0.000000e+00> : vector<32x128xf32>
    %224 = tpu.matmul %222, %223, %cst_85 {dimension_numbers = #tpu.dot_dimension_numbers<[1], [0], [0], [1], [0, 0, 1, 1], [], []>} : vector<32x256xbf16>, vector<256x128xbf16>, vector<32x128xf32> -> vector<32x128xf32>
    %c0_86 = arith.constant 0 : index
    %c0_87 = arith.constant 0 : index
    %225 = vector.load %arg13[%c0_86, %c0_87] : memref<1x128xf32, #tpu.memory_space<vmem>>, vector<1x128xf32>
    %226 = vector.broadcast %225 : vector<1x128xf32> to vector<32x128xf32>
    %227 = arith.addf %224, %226 : vector<32x128xf32>
    %228 = arith.addf %227, %183 : vector<32x128xf32>
    %229 = vector.shape_cast %228 : vector<32x128xf32> to vector<2x16x128xf32>
    %c0_88 = arith.constant 0 : index
    %c0_89 = arith.constant 0 : index
    %c0_90 = arith.constant 0 : index
    %230 = vector.load %arg14[%c0_88, %c0_89, %c0_90] : memref<2x16x128xf32, #tpu.memory_space<vmem>>, vector<2x16x128xf32>
    tpu.vector_store %arg14[%c0_88, %c0_89, %c0_90], %229 {strides = array<i32>} : memref<2x16x128xf32, #tpu.memory_space<vmem>>, vector<2x16x128xf32>,
    return
  }
  func.func @transform_0(%arg0: i32) -> (i32, i32, i32) {
    %c0_i32 = arith.constant 0 : i32
    %c0_i32_0 = arith.constant 0 : i32
    %c0_i32_1 = arith.constant 0 : i32
    return %arg0, %c0_i32, %c0_i32_0 : i32, i32, i32
  }
  func.func @transform_1(%arg0: i32) -> (i32, i32) {
    %c0_i32 = arith.constant 0 : i32
    %c0_i32_0 = arith.constant 0 : i32
    %c0_i32_1 = arith.constant 0 : i32
    return %c0_i32, %c0_i32_0 : i32, i32
  }
  func.func @transform_2(%arg0: i32) -> (i32, i32) {
    %c0_i32 = arith.constant 0 : i32
    %c0_i32_0 = arith.constant 0 : i32
    %c0_i32_1 = arith.constant 0 : i32
    return %c0_i32, %c0_i32_0 : i32, i32
  }
  func.func @transform_3(%arg0: i32) -> (i32, i32) {
    %c0_i32 = arith.constant 0 : i32
    %c0_i32_0 = arith.constant 0 : i32
    %c0_i32_1 = arith.constant 0 : i32
    return %c0_i32, %c0_i32_0 : i32, i32
  }
  func.func @transform_4(%arg0: i32) -> (i32, i32) {
    %c0_i32 = arith.constant 0 : i32
    %c0_i32_0 = arith.constant 0 : i32
    %c0_i32_1 = arith.constant 0 : i32
    return %c0_i32, %c0_i32_0 : i32, i32
  }
  func.func @transform_5(%arg0: i32) -> (i32, i32) {
    %c0_i32 = arith.constant 0 : i32
    %c0_i32_0 = arith.constant 0 : i32
    %c0_i32_1 = arith.constant 0 : i32
    return %c0_i32, %c0_i32_0 : i32, i32
  }
  func.func @transform_6(%arg0: i32) -> (i32, i32) {
    %c0_i32 = arith.constant 0 : i32
    %c0_i32_0 = arith.constant 0 : i32
    %c0_i32_1 = arith.constant 0 : i32
    return %c0_i32, %c0_i32_0 : i32, i32
  }
  func.func @transform_7(%arg0: i32) -> (i32, i32) {
    %c0_i32 = arith.constant 0 : i32
    %c0_i32_0 = arith.constant 0 : i32
    %c0_i32_1 = arith.constant 0 : i32
    return %c0_i32, %c0_i32_0 : i32, i32
  }
  func.func @transform_8(%arg0: i32) -> (i32, i32) {
    %c0_i32 = arith.constant 0 : i32
    %c0_i32_0 = arith.constant 0 : i32
    %c0_i32_1 = arith.constant 0 : i32
    return %c0_i32, %c0_i32_0 : i32, i32
  }
  func.func @transform_9(%arg0: i32) -> (i32, i32) {
    %c0_i32 = arith.constant 0 : i32
    %c0_i32_0 = arith.constant 0 : i32
    %c0_i32_1 = arith.constant 0 : i32
    return %c0_i32, %c0_i32_0 : i32, i32
  }
  func.func @transform_10(%arg0: i32) -> (i32, i32) {
    %c0_i32 = arith.constant 0 : i32
    %c0_i32_0 = arith.constant 0 : i32
    %c0_i32_1 = arith.constant 0 : i32
    return %c0_i32, %c0_i32_0 : i32, i32
  }
  func.func @transform_11(%arg0: i32) -> (i32, i32) {
    %c0_i32 = arith.constant 0 : i32
    %c0_i32_0 = arith.constant 0 : i32
    %c0_i32_1 = arith.constant 0 : i32
    return %c0_i32, %c0_i32_0 : i32, i32
  }
  func.func @transform_12(%arg0: i32) -> (i32, i32) {
    %c0_i32 = arith.constant 0 : i32
    %c0_i32_0 = arith.constant 0 : i32
    %c0_i32_1 = arith.constant 0 : i32
    return %c0_i32, %c0_i32_0 : i32, i32
  }
  func.func @transform_13(%arg0: i32) -> (i32, i32, i32) {
    %c0_i32 = arith.constant 0 : i32
    %c0_i32_0 = arith.constant 0 : i32
    %c0_i32_1 = arith.constant 0 : i32
    return %arg0, %c0_i32, %c0_i32_0 : i32, i32, i32
  }
}

</mosaic_0001>

<llo_original>
// kernel: tpu_custom_call.1
$region0: #{tpu_custom_call.1}
  #allocation0 [shape = 'u32[]', space=smem, size = 0x4, offset = 0x4, fixed_abs, tag = 'smem constant byte address 0x4 - core index']
  #allocation1 [shape = 'u32[72,128]{1,0:T(1,128)}', space=vmem, size = 0x9000, scoped, tag = 'internal scratch']
  #allocation2 [shape = 'bf16[32,128]{1,0:T(8,128)(2,1)}', space=vmem, size = 0x2000, scoped, tag = 'scratch operand']
  %s0 = inlined_call_operand.hbm [shape: f32[2,16,128], index: 0, kind: input, shape index: {}]
  %s1 = inlined_call_operand.hbm [shape: f32[1,128], index: 1, kind: input, shape index: {}]
  %s2 = inlined_call_operand.hbm [shape: f32[1,128], index: 2, kind: input, shape index: {}]
  %s3 = inlined_call_operand.hbm [shape: bf16[128,384], index: 3, kind: input, shape index: {}]
  %s4 = inlined_call_operand.vmem [shape: f32[1,384], index: 4, kind: input, shape index: {}]
  %s5 = inlined_call_operand.hbm [shape: bf16[128,128], index: 5, kind: input, shape index: {}]
  %s6 = inlined_call_operand.hbm [shape: f32[1,128], index: 6, kind: input, shape index: {}]
  %s7 = inlined_call_operand.vmem [shape: f32[1,128], index: 7, kind: input, shape index: {}]
  %s8 = inlined_call_operand.vmem [shape: f32[1,128], index: 8, kind: input, shape index: {}]
  %s9 = inlined_call_operand.hbm [shape: bf16[128,256], index: 9, kind: input, shape index: {}]
  %s10 = inlined_call_operand.vmem [shape: f32[1,256], index: 10, kind: input, shape index: {}]
  %s11 = inlined_call_operand.hbm [shape: bf16[256,128], index: 11, kind: input, shape index: {}]
  %s12 = inlined_call_operand.vmem [shape: f32[1,128], index: 12, kind: input, shape index: {}]
  %s13 = inlined_call_operand.hbm [shape: f32[2,16,128], index: 13, kind: output, shape index: {}]
  %s14 = sld [smem:[#allocation0]]
  $region94: #{tpu_custom_call.1} parent=0
    _
  %s16 = ssub.s32 1, %s14
  %s17 = scalar_select 0, %s16, %s14
  $region1: #{tpu_custom_call.1} parent=0
    #allocation3 [shape = 'u8[16384]{0}', space=vmem, size = 0x4000, scoped, tag = 'input window, operand 0, single buffered']
    #allocation4 [shape = 's32[1]{0}', space=sflag, size = 0x4, scoped, tag = 'scoped memory for tpu_custom_call.1']
    #allocation5 [shape = 's32[1]{0}', space=sflag, size = 0x4, scoped, tag = 'scoped memory for tpu_custom_call.1']
    #allocation6 [shape = 'u8[512]{0}', space=vmem, size = 0x400, scoped, tag = 'input window, operand 1, single buffered']
    #allocation7 [shape = 's32[1]{0}', space=sflag, size = 0x4, scoped, tag = 'scoped memory for tpu_custom_call.1']
    #allocation8 [shape = 'u8[512]{0}', space=vmem, size = 0x400, scoped, tag = 'input window, operand 2, single buffered']
    #allocation9 [shape = 'u8[98304]{0}', space=vmem, size = 0x18000, scoped, tag = 'input window, operand 3, single buffered']
    #allocation10 [shape = 's32[1]{0}', space=sflag, size = 0x4, scoped, tag = 'scoped memory for tpu_custom_call.1']
    #allocation11 [shape = 'u8[32768]{0}', space=vmem, size = 0x8000, scoped, tag = 'input window, operand 5, single buffered']
    #allocation12 [shape = 'u8[512]{0}', space=vmem, size = 0x400, scoped, tag = 'input window, operand 6, single buffered']
    #allocation13 [shape = 's32[1]{0}', space=sflag, size = 0x4, scoped, tag = 'scoped memory for tpu_custom_call.1']
    #allocation14 [shape = 'u8[65536]{0}', space=vmem, size = 0x10000, scoped, tag = 'input window, operand 9, single buffered']
    #allocation15 [shape = 'u8[65536]{0}', space=vmem, size = 0x10000, scoped, tag = 'input window, operand 11, single buffered']
    #allocation16 [shape = 's32[1]{0}', space=sflag, size = 0x4, scoped, tag = 'scoped memory for tpu_custom_call.1']
    #allocation17 [shape = 'u8[16384]{0}', space=vmem, size = 0x4000, scoped, tag = 'output window, operand 0, single buffered']
    %18 = vsyncpa [#allocation4], 0
    %19 = vsyncpa [#allocation7], 0
    %20 = vsyncpa [#allocation10], 0
    %21 = vsyncpa [#allocation13], 0
    %22 = vsyncpa [#allocation16], 0
    %23 = vsyncpa [#allocation5], 0
    // Predicated region
    $region2: #{tpu_custom_call.1} parent=1 // pred_check
      _
    $region3: #{tpu_custom_call.1} parent=1 // pred_check_branch
      %25 = sbr.rel (0) target = $region5
    $region4: #{tpu_custom_call.1} parent=1 // pred_region
      %27 = vsyncadd [#allocation4], 0
      %s28 = sshll.u32 %s0, 4
      %s29 = int_to_ptr.hbm [resolvable:$true] %s28
      %s30 = sshll.u32 [#allocation3], 4
      %s31 = int_to_ptr.vmem [resolvable:$true] %s30
      %36 = dma.hbm_to_vmem [thread:$0]  %s29, 512, %s31, [#allocation4], 128, 128, 8
    $region5: #{tpu_custom_call.1} parent=1 // pred_fallthru
      _
    // Predicated region
    $region6: #{tpu_custom_call.1} parent=1 // pred_check
      _
    $region7: #{tpu_custom_call.1} parent=1 // pred_check_branch
      %38 = sbr.rel (0) target = $region9
    $region8: #{tpu_custom_call.1} parent=1 // pred_region
      %40 = vsyncadd [#allocation7], 0
      %s42 = sshll.u32 %s1, 4
      %s43 = int_to_ptr.hbm [resolvable:$true] %s42
      %s44 = sshll.u32 [#allocation6], 4
      %s45 = int_to_ptr.vmem [resolvable:$true] %s44
      %47 = dma.hbm_to_vmem [thread:$0]  %s43, 16, %s45, [#allocation7]
    $region9: #{tpu_custom_call.1} parent=1 // pred_fallthru
      _
    // Predicated region
    $region10: #{tpu_custom_call.1} parent=1 // pred_check
      _
    $region11: #{tpu_custom_call.1} parent=1 // pred_check_branch
      %49 = sbr.rel (0) target = $region13
    $region12: #{tpu_custom_call.1} parent=1 // pred_region
      %51 = vsyncadd [#allocation7], 0
      %s53 = sshll.u32 %s2, 4
      %s54 = int_to_ptr.hbm [resolvable:$true] %s53
      %s55 = sshll.u32 [#allocation8], 4
      %s56 = int_to_ptr.vmem [resolvable:$true] %s55
      %58 = dma.hbm_to_vmem [thread:$0]  %s54, 16, %s56, [#allocation7]
    $region13: #{tpu_custom_call.1} parent=1 // pred_fallthru
      _
    // Predicated region
    $region14: #{tpu_custom_call.1} parent=1 // pred_check
      _
    $region15: #{tpu_custom_call.1} parent=1 // pred_check_branch
      %60 = sbr.rel (0) target = $region17
    $region16: #{tpu_custom_call.1} parent=1 // pred_region
      %62 = vsyncadd [#allocation10], 0
      %s63 = sshll.u32 %s3, 4
      %s64 = int_to_ptr.hbm [resolvable:$true] %s63
      %s65 = sshll.u32 [#allocation9], 4
      %s66 = int_to_ptr.vmem [resolvable:$true] %s65
      %71 = dma.hbm_to_vmem [thread:$0]  %s64, 3072, %s66, [#allocation10], 192, 192, 12
    $region17: #{tpu_custom_call.1} parent=1 // pred_fallthru
      _
    // Predicated region
    $region18: #{tpu_custom_call.1} parent=1 // pred_check
      _
    $region19: #{tpu_custom_call.1} parent=1 // pred_check_branch
      %73 = sbr.rel (0) target = $region21
    $region20: #{tpu_custom_call.1} parent=1 // pred_region
      _
    $region21: #{tpu_custom_call.1} parent=1 // pred_fallthru
      _
    // Predicated region
    $region22: #{tpu_custom_call.1} parent=1 // pred_check
      _
    $region23: #{tpu_custom_call.1} parent=1 // pred_check_branch
      %75 = sbr.rel (0) target = $region25
    $region24: #{tpu_custom_call.1} parent=1 // pred_region
      %77 = vsyncadd [#allocation10], 0
      %s78 = sshll.u32 %s5, 4
      %s79 = int_to_ptr.hbm [resolvable:$true] %s78
      %s80 = sshll.u32 [#allocation11], 4
      %s81 = int_to_ptr.vmem [resolvable:$true] %s80
      %86 = dma.hbm_to_vmem [thread:$0]  %s79, 1024, %s81, [#allocation10], 64, 64, 4
    $region25: #{tpu_custom_call.1} parent=1 // pred_fallthru
      _
    // Predicated region
    $region26: #{tpu_custom_call.1} parent=1 // pred_check
      _
    $region27: #{tpu_custom_call.1} parent=1 // pred_check_branch
      %88 = sbr.rel (0) target = $region29
    $region28: #{tpu_custom_call.1} parent=1 // pred_region
      %90 = vsyncadd [#allocation13], 0
      %s92 = sshll.u32 %s6, 4
      %s93 = int_to_ptr.hbm [resolvable:$true] %s92
      %s94 = sshll.u32 [#allocation12], 4
      %s95 = int_to_ptr.vmem [resolvable:$true] %s94
      %97 = dma.hbm_to_vmem [thread:$0]  %s93, 16, %s95, [#allocation13]
    $region29: #{tpu_custom_call.1} parent=1 // pred_fallthru
      _
    // Predicated region
    $region30: #{tpu_custom_call.1} parent=1 // pred_check
      _
    $region31: #{tpu_custom_call.1} parent=1 // pred_check_branch
      %99 = sbr.rel (0) target = $region33
    $region32: #{tpu_custom_call.1} parent=1 // pred_region
      _
    $region33: #{tpu_custom_call.1} parent=1 // pred_fallthru
      _
    // Predicated region
    $region34: #{tpu_custom_call.1} parent=1 // pred_check
      _
    $region35: #{tpu_custom_call.1} parent=1 // pred_check_branch
      %101 = sbr.rel (0) target = $region37
    $region36: #{tpu_custom_call.1} parent=1 // pred_region
      _
    $region37: #{tpu_custom_call.1} parent=1 // pred_fallthru
      _
    // Predicated region
    $region38: #{tpu_custom_call.1} parent=1 // pred_check
      _
    $region39: #{tpu_custom_call.1} parent=1 // pred_check_branch
      %103 = sbr.rel (0) target = $region41
    $region40: #{tpu_custom_call.1} parent=1 // pred_region
      %105 = vsyncadd [#allocation13], 0
      %s106 = sshll.u32 %s9, 4
      %s107 = int_to_ptr.hbm [resolvable:$true] %s106
      %s108 = sshll.u32 [#allocation14], 4
      %s109 = int_to_ptr.vmem [resolvable:$true] %s108
      %114 = dma.hbm_to_vmem [thread:$0]  %s107, 2048, %s109, [#allocation13], 128, 128, 8
    $region41: #{tpu_custom_call.1} parent=1 // pred_fallthru
      _
    // Predicated region
    $region42: #{tpu_custom_call.1} parent=1 // pred_check
      _
    $region43: #{tpu_custom_call.1} parent=1 // pred_check_branch
      %116 = sbr.rel (0) target = $region45
    $region44: #{tpu_custom_call.1} parent=1 // pred_region
      _
    $region45: #{tpu_custom_call.1} parent=1 // pred_fallthru
      _
    // Predicated region
    $region46: #{tpu_custom_call.1} parent=1 // pred_check
      _
    $region47: #{tpu_custom_call.1} parent=1 // pred_check_branch
      %118 = sbr.rel (0) target = $region49
    $region48: #{tpu_custom_call.1} parent=1 // pred_region
      %120 = vsyncadd [#allocation16], 0
      %s121 = sshll.u32 %s11, 4
      %s122 = int_to_ptr.hbm [resolvable:$true] %s121
      %s123 = sshll.u32 [#allocation15], 4
      %s124 = int_to_ptr.vmem [resolvable:$true] %s123
      %129 = dma.hbm_to_vmem [thread:$0]  %s122, 2048, %s124, [#allocation16], 64, 64, 4
    $region49: #{tpu_custom_call.1} parent=1 // pred_fallthru
      _
    // Predicated region
    $region50: #{tpu_custom_call.1} parent=1 // pred_check
      _
    $region51: #{tpu_custom_call.1} parent=1 // pred_check_branch
      %131 = sbr.rel (0) target = $region53
    $region52: #{tpu_custom_call.1} parent=1 // pred_region
      _
    $region53: #{tpu_custom_call.1} parent=1 // pred_fallthru
      _
    // Predicated region
    $region54: #{tpu_custom_call.1} parent=1 // pred_check
      _
    $region55: #{tpu_custom_call.1} parent=1 // pred_check_branch
      %133 = sbr.rel (0) target = $region57
    $region56: #{tpu_custom_call.1} parent=1 // pred_region
      %135 = dma.done [#allocation4], 512
    $region57: #{tpu_custom_call.1} parent=1 // pred_fallthru
      _
    // Predicated region
    $region58: #{tpu_custom_call.1} parent=1 // pred_check
      _
    $region59: #{tpu_custom_call.1} parent=1 // pred_check_branch
      %137 = sbr.rel (0) target = $region61
    $region60: #{tpu_custom_call.1} parent=1 // pred_region
      %139 = dma.done [#allocation7], 16
    $region61: #{tpu_custom_call.1} parent=1 // pred_fallthru
      _
    // Predicated region
    $region62: #{tpu_custom_call.1} parent=1 // pred_check
      _
    $region63: #{tpu_custom_call.1} parent=1 // pred_check_branch
      %141 = sbr.rel (0) target = $region65
    $region64: #{tpu_custom_call.1} parent=1 // pred_region
      %143 = dma.done [#allocation7], 16
    $region65: #{tpu_custom_call.1} parent=1 // pred_fallthru
      _
    // Predicated region
    $region66: #{tpu_custom_call.1} parent=1 // pred_check
      _
    $region67: #{tpu_custom_call.1} parent=1 // pred_check_branch
      %145 = sbr.rel (0) target = $region69
    $region68: #{tpu_custom_call.1} parent=1 // pred_region
      %147 = dma.done [#allocation10], 3072
    $region69: #{tpu_custom_call.1} parent=1 // pred_fallthru
      _
    // Predicated region
    $region70: #{tpu_custom_call.1} parent=1 // pred_check
      _
    $region71: #{tpu_custom_call.1} parent=1 // pred_check_branch
      %149 = sbr.rel (0) target = $region73
    $region72: #{tpu_custom_call.1} parent=1 // pred_region
      %151 = dma.done [#allocation10], 1024
    $region73: #{tpu_custom_call.1} parent=1 // pred_fallthru
      _
    // Predicated region
    $region74: #{tpu_custom_call.1} parent=1 // pred_check
      _
    $region75: #{tpu_custom_call.1} parent=1 // pred_check_branch
      %153 = sbr.rel (0) target = $region77
    $region76: #{tpu_custom_call.1} parent=1 // pred_region
      %155 = dma.done [#allocation13], 16
    $region77: #{tpu_custom_call.1} parent=1 // pred_fallthru
      _
    // Predicated region
    $region78: #{tpu_custom_call.1} parent=1 // pred_check
      _
    $region79: #{tpu_custom_call.1} parent=1 // pred_check_branch
      %157 = sbr.rel (0) target = $region81
    $region80: #{tpu_custom_call.1} parent=1 // pred_region
      %159 = dma.done [#allocation13], 2048
    $region81: #{tpu_custom_call.1} parent=1 // pred_fallthru
      _
    // Predicated region
    $region82: #{tpu_custom_call.1} parent=1 // pred_check
      _
    $region83: #{tpu_custom_call.1} parent=1 // pred_check_branch
      %161 = sbr.rel (0) target = $region85
    $region84: #{tpu_custom_call.1} parent=1 // pred_region
      %163 = dma.done [#allocation16], 2048
    $region85: #{tpu_custom_call.1} parent=1 // pred_fallthru
      _
    %v165 = vld [vmem:[#allocation3] sm:$0xff]
    %v166 = vld [vmem:[#allocation3 + $0x8] sm:$0xff]
    %v167 = vld [vmem:[#allocation3 + $0x10] sm:$0xff]
    %v168 = vld [vmem:[#allocation3 + $0x18] sm:$0xff]
    %v169 = vld [vmem:[#allocation6] sm:$0x1]
    %v170 = vld [vmem:[#allocation8] sm:$0x1]
    %171 = vadd.xlane.f32.xlu0 %v165
    %v172 = vpop.xlane.xlu0 %171
    %173 = vadd.xlane.f32.xlu0 %v166
    %v174 = vpop.xlane.xlu0 %173
    %175 = vadd.xlane.f32.xlu0 %v167
    %v176 = vpop.xlane.xlu0 %175
    %177 = vadd.xlane.f32.xlu0 %v168
    %v178 = vpop.xlane.xlu0 %177
    %v179 = vrcp.pop 128.0
    %v180 = vmul.f32 128.0, %v179
    %v181 = vsub.f32 1.0, %v180
    %v182 = vmul.f32 %v179, %v181
    %v183 = vadd.f32 %v179, %v182
    %vm184 = vweird.f32 %v179
    %v185 = vsel %vm184, %v179, %v183
    %v186 = vmul.f32 %v172, %v185
    %v187 = vmul.f32 %v174, %v185
    %v188 = vmul.f32 %v176, %v185
    %v189 = vmul.f32 %v178, %v185
    %v190 = vsub.f32 %v165, %v186
    %v191 = vsub.f32 %v166, %v187
    %v192 = vsub.f32 %v167, %v188
    %v193 = vsub.f32 %v168, %v189
    %v194 = vmul.f32 %v190, %v190
    %v195 = vmul.f32 %v191, %v191
    %v196 = vmul.f32 %v192, %v192
    %v197 = vmul.f32 %v193, %v193
    %198 = vadd.xlane.f32.xlu0 %v194
    %v199 = vpop.xlane.xlu0 %198
    %200 = vadd.xlane.f32.xlu0 %v195
    %v201 = vpop.xlane.xlu0 %200
    %202 = vadd.xlane.f32.xlu0 %v196
    %v203 = vpop.xlane.xlu0 %202
    %204 = vadd.xlane.f32.xlu0 %v197
    %v205 = vpop.xlane.xlu0 %204
    %v206 = vmul.f32 %v199, %v185
    %v207 = vmul.f32 %v201, %v185
    %v208 = vmul.f32 %v203, %v185
    %v209 = vmul.f32 %v205, %v185
    %v210 = vadd.f32 %v206, 1e-05
    %v211 = vadd.f32 %v207, 1e-05
    %v212 = vadd.f32 %v208, 1e-05
    %v213 = vadd.f32 %v209, 1e-05
    %v214 = vrsqrt.pop %v210
    %v215 = vmul.f32 %v214, %v210
    %v216 = vmul.f32 %v215, %v214
    %v217 = vmul.f32 0.5, %v216
    %v218 = vsub.f32 1.5, %v217
    %v219 = vmul.f32 %v214, %v218
    %vm220 = vweird.f32 %v210
    %vm221 = vweird.f32 %v214
    %vm222 = vmor %vm220, %vm221
    %v223 = vsel %vm222, %v214, %v219
    %v224 = vrsqrt.pop %v211
    %v225 = vmul.f32 %v224, %v211
    %v226 = vmul.f32 %v225, %v224
    %v227 = vmul.f32 0.5, %v226
    %v228 = vsub.f32 1.5, %v227
    %v229 = vmul.f32 %v224, %v228
    %vm230 = vweird.f32 %v211
    %vm231 = vweird.f32 %v224
    %vm232 = vmor %vm230, %vm231
    %v233 = vsel %vm232, %v224, %v229
    %v234 = vrsqrt.pop %v212
    %v235 = vmul.f32 %v234, %v212
    %v236 = vmul.f32 %v235, %v234
    %v237 = vmul.f32 0.5, %v236
    %v238 = vsub.f32 1.5, %v237
    %v239 = vmul.f32 %v234, %v238
    %vm240 = vweird.f32 %v212
    %vm241 = vweird.f32 %v234
    %vm242 = vmor %vm240, %vm241
    %v243 = vsel %vm242, %v234, %v239
    %v244 = vrsqrt.pop %v213
    %v245 = vmul.f32 %v244, %v213
    %v246 = vmul.f32 %v245, %v244
    %v247 = vmul.f32 0.5, %v246
    %v248 = vsub.f32 1.5, %v247
    %v249 = vmul.f32 %v244, %v248
    %vm250 = vweird.f32 %v213
    %vm251 = vweird.f32 %v244
    %vm252 = vmor %vm250, %vm251
    %v253 = vsel %vm252, %v244, %v249
    %v254 = vmul.f32 %v190, %v223
    %v255 = vmul.f32 %v191, %v233
    %v256 = vmul.f32 %v192, %v243
    %v257 = vmul.f32 %v193, %v253
    %v259 = vperm.slane %v169, 0
    %v261 = vmul.f32 %v254, %v259
    %v262 = vmul.f32 %v255, %v259
    %v263 = vmul.f32 %v256, %v259
    %v264 = vmul.f32 %v257, %v259
    %v266 = vperm.slane %v170, 0
    %v268 = vadd.f32 %v261, %v266
    %v269 = vadd.f32 %v262, %v266
    %v270 = vadd.f32 %v263, %v266
    %v271 = vadd.f32 %v264, %v266
    %v272 = vpack.c.bf16 %v269, %v268
    %v273 = vpack.c.bf16 %v271, %v270
    %v274 = vld [vmem:[#allocation9] sm:$0xff]
    %v275 = vld [vmem:[#allocation9 + $0x8] sm:$0xf]
    %v276 = vld [vmem:[#allocation9 + $0xc] sm:$0xff]
    %v277 = vld [vmem:[#allocation9 + $0x14] sm:$0xf]
    %v278 = vld [vmem:[#allocation9 + $0x18] sm:$0xff]
    %v279 = vld [vmem:[#allocation9 + $0x20] sm:$0xf]
    %v280 = vld [vmem:[#allocation9 + $0x24] sm:$0xff]
    %v281 = vld [vmem:[#allocation9 + $0x2c] sm:$0xf]
    %v282 = vld [vmem:[#allocation9 + $0x30] sm:$0xff]
    %v283 = vld [vmem:[#allocation9 + $0x38] sm:$0xf]
    %v284 = vld [vmem:[#allocation9 + $0x3c] sm:$0xff]
    %v285 = vld [vmem:[#allocation9 + $0x44] sm:$0xf]
    %v286 = vld [vmem:[#allocation9 + $0x48] sm:$0xff]
    %v287 = vld [vmem:[#allocation9 + $0x50] sm:$0xf]
    %v288 = vld [vmem:[#allocation9 + $0x54] sm:$0xff]
    %v289 = vld [vmem:[#allocation9 + $0x5c] sm:$0xf]
    %v290 = vld [vmem:[#allocation9 + $0x60] sm:$0xff]
    %v291 = vld [vmem:[#allocation9 + $0x68] sm:$0xf]
    %v292 = vld [vmem:[#allocation9 + $0x6c] sm:$0xff]
    %v293 = vld [vmem:[#allocation9 + $0x74] sm:$0xf]
    %v294 = vld [vmem:[#allocation9 + $0x78] sm:$0xff]
    %v295 = vld [vmem:[#allocation9 + $0x80] sm:$0xf]
    %v296 = vld [vmem:[#allocation9 + $0x84] sm:$0xff]
    %v297 = vld [vmem:[#allocation9 + $0x8c] sm:$0xf]
    %v298 = vld [vmem:[#allocation9 + $0x90] sm:$0xff]
    %v299 = vld [vmem:[#allocation9 + $0x98] sm:$0xf]
    %v300 = vld [vmem:[#allocation9 + $0x9c] sm:$0xff]
    %v301 = vld [vmem:[#allocation9 + $0xa4] sm:$0xf]
    %v302 = vld [vmem:[#allocation9 + $0xa8] sm:$0xff]
    %v303 = vld [vmem:[#allocation9 + $0xb0] sm:$0xf]
    %v304 = vld [vmem:[#allocation9 + $0xb4] sm:$0xff]
    %v305 = vld [vmem:[#allocation9 + $0xbc] sm:$0xf]
    %v306 = vld [vmem:[%s4] sm:$0x7]
    %v308 = vperm.slane %v306, 0
    %v309 = vperm.slane %v306, 1
    %v310 = vperm.slane %v306, 2
    %v346 = vunpack.c.l.b16 %v274
    %v347 = vunpack.c.h.b16 %v274
    %v348 = vunpack.c.l.b16 %v275
    %v349 = vunpack.c.l.b16 %v276
    %v350 = vunpack.c.h.b16 %v276
    %v351 = vunpack.c.l.b16 %v277
    %v352 = vunpack.c.l.b16 %v278
    %v353 = vunpack.c.h.b16 %v278
    %v354 = vunpack.c.l.b16 %v279
    %v355 = vunpack.c.l.b16 %v280
    %v356 = vunpack.c.h.b16 %v280
    %v357 = vunpack.c.l.b16 %v281
    %v358 = vunpack.c.l.b16 %v282
    %v359 = vunpack.c.h.b16 %v282
    %v360 = vunpack.c.l.b16 %v283
    %v361 = vunpack.c.l.b16 %v284
    %v362 = vunpack.c.h.b16 %v284
    %v363 = vunpack.c.l.b16 %v285
    %v364 = vunpack.c.l.b16 %v286
    %v365 = vunpack.c.h.b16 %v286
    %v366 = vunpack.c.l.b16 %v287
    %v367 = vunpack.c.l.b16 %v288
    %v368 = vunpack.c.h.b16 %v288
    %v369 = vunpack.c.l.b16 %v289
    %v370 = vunpack.c.l.b16 %v290
    %v371 = vunpack.c.h.b16 %v290
    %v372 = vunpack.c.l.b16 %v291
    %v373 = vunpack.c.l.b16 %v292
    %v374 = vunpack.c.h.b16 %v292
    %v375 = vunpack.c.l.b16 %v293
    %v376 = vunpack.c.l.b16 %v294
    %v377 = vunpack.c.h.b16 %v294
    %v378 = vunpack.c.l.b16 %v295
    %v379 = vunpack.c.l.b16 %v296
    %v380 = vunpack.c.h.b16 %v296
    %v381 = vunpack.c.l.b16 %v297
    %v382 = vunpack.c.l.b16 %v298
    %v383 = vunpack.c.h.b16 %v298
    %v384 = vunpack.c.l.b16 %v299
    %v385 = vunpack.c.l.b16 %v300
    %v386 = vunpack.c.h.b16 %v300
    %v387 = vunpack.c.l.b16 %v301
    %v388 = vunpack.c.l.b16 %v302
    %v389 = vunpack.c.h.b16 %v302
    %v390 = vunpack.c.l.b16 %v303
    %v391 = vunpack.c.l.b16 %v304
    %v392 = vunpack.c.h.b16 %v304
    %v393 = vunpack.c.l.b16 %v305
    %v394 = vpack.c.b16 %v349, %v346
    %v395 = vpack.c.b16 %v350, %v347
    %v396 = vpack.c.b16 %v351, %v348
    %v397 = vpack.c.b16 %v355, %v352
    %v398 = vpack.c.b16 %v356, %v353
    %v399 = vpack.c.b16 %v357, %v354
    %v400 = vpack.c.b16 %v361, %v358
    %v401 = vpack.c.b16 %v362, %v359
    %v402 = vpack.c.b16 %v363, %v360
    %v403 = vpack.c.b16 %v367, %v364
    %v404 = vpack.c.b16 %v368, %v365
    %v405 = vpack.c.b16 %v369, %v366
    %v406 = vpack.c.b16 %v373, %v370
    %v407 = vpack.c.b16 %v374, %v371
    %v408 = vpack.c.b16 %v375, %v372
    %v409 = vpack.c.b16 %v379, %v376
    %v410 = vpack.c.b16 %v380, %v377
    %v411 = vpack.c.b16 %v381, %v378
    %v412 = vpack.c.b16 %v385, %v382
    %v413 = vpack.c.b16 %v386, %v383
    %v414 = vpack.c.b16 %v387, %v384
    %v415 = vpack.c.b16 %v391, %v388
    %v416 = vpack.c.b16 %v392, %v389
    %v417 = vpack.c.b16 %v393, %v390
    %442 = vmatpush.bf16.msra.mxu0 %v415
    %443 = vmatpush.bf16.msra.mxu0 %v412
    %444 = vmatpush.bf16.msra.mxu0 %v409
    %445 = vmatpush.bf16.msra.mxu0 %v406
    %446 = vmatpush.bf16.msra.mxu0 %v403
    %447 = vmatpush.bf16.msra.mxu0 %v400
    %448 = vmatpush.bf16.msra.mxu0 %v397
    %449 = vmatpush.bf16.msra.mxu0 %v394
    %450 = vmatmul.bf16.gmra.mxu0 %v272
    %v451 = vpop.f32.mrf.mxu0
    %v452 = vadd.f32 %v308, %v451
    %v453 = vpop.f32.mrf.mxu0
    %v454 = vadd.f32 %v308, %v453
    %455 = vmatmul.bf16.gmra.mxu0 %v273
    %v456 = vpop.f32.mrf.mxu0
    %v457 = vadd.f32 %v308, %v456
    %v458 = vpop.f32.mrf.mxu0
    %v459 = vadd.f32 %v308, %v458
    %460 = vdwg.mxu0
    %461 = vmatpush.bf16.msra.mxu0 %v416
    %462 = vmatpush.bf16.msra.mxu0 %v413
    %463 = vmatpush.bf16.msra.mxu0 %v410
    %464 = vmatpush.bf16.msra.mxu0 %v407
    %465 = vmatpush.bf16.msra.mxu0 %v404
    %466 = vmatpush.bf16.msra.mxu0 %v401
    %467 = vmatpush.bf16.msra.mxu0 %v398
    %468 = vmatpush.bf16.msra.mxu0 %v395
    %469 = vmatmul.bf16.gmra.mxu0 %v272
    %v470 = vpop.f32.mrf.mxu0
    %v471 = vadd.f32 %v309, %v470
    %v472 = vpop.f32.mrf.mxu0
    %v473 = vadd.f32 %v309, %v472
    %474 = vmatmul.bf16.gmra.mxu0 %v273
    %v475 = vpop.f32.mrf.mxu0
    %v476 = vadd.f32 %v309, %v475
    %v477 = vpop.f32.mrf.mxu0
    %v478 = vadd.f32 %v309, %v477
    %479 = vdwg.mxu0
    %480 = vmatpush.bf16.msra.mxu0 %v417
    %481 = vmatpush.bf16.msra.mxu0 %v414
    %482 = vmatpush.bf16.msra.mxu0 %v411
    %483 = vmatpush.bf16.msra.mxu0 %v408
    %484 = vmatpush.bf16.msra.mxu0 %v405
    %485 = vmatpush.bf16.msra.mxu0 %v402
    %486 = vmatpush.bf16.msra.mxu0 %v399
    %487 = vmatpush.bf16.msra.mxu0 %v396
    %488 = vmatmul.bf16.gmra.mxu0 %v272
    %v489 = vpop.f32.mrf.mxu0
    %v490 = vadd.f32 %v310, %v489
    %v491 = vpop.f32.mrf.mxu0
    %v492 = vadd.f32 %v310, %v491
    %493 = vmatmul.bf16.gmra.mxu0 %v273
    %v494 = vpop.f32.mrf.mxu0
    %v495 = vadd.f32 %v310, %v494
    %v496 = vpop.f32.mrf.mxu0
    %v497 = vadd.f32 %v310, %v496
    %498 = vdwg.mxu0
    %v499 = vpack.c.bf16 %v471, %v452
    %v500 = vpack.c.bf16 %v490, %v490
    %v501 = vpack.c.bf16 %v473, %v454
    %v502 = vpack.c.bf16 %v492, %v492
    %v503 = vpack.c.bf16 %v476, %v457
    %v504 = vpack.c.bf16 %v495, %v495
    %v505 = vpack.c.bf16 %v478, %v459
    %v506 = vpack.c.bf16 %v497, %v497
    %v509 = vunpack.c.l.b16 %v499
    %v510 = vunpack.c.l.b16 %v501
    %v511 = vpack.c.b16 %v510, %v509
    %v512 = vunpack.c.h.b16 %v499
    %v513 = vunpack.c.h.b16 %v501
    %v514 = vpack.c.b16 %v513, %v512
    %vm515 = vcmask 261120
    %v517 = vsel %vm515, %v511, 0
    %v520 = vsel %vm515, %v514, 0
    %522 = vmatpush.bf16.xpose.msra.mxu0 0
    %523 = vmatpush.bf16.xpose.msra.mxu0 0
    %524 = vmatpush.bf16.xpose.msra.mxu0 0
    %525 = vmatpush.bf16.xpose.msra.mxu0 0
    %526 = vmatpush.bf16.xpose.msra.mxu0 0
    %527 = vmatpush.bf16.xpose.msra.mxu0 0
    %528 = vmatpush.bf16.xpose.msra.mxu0 0
    %529 = vmatpush.bf16.xpose.msra.mxu0 %v520
    %530 = vmatmul.bf16.gmra.mxu0 %v517
    %v531 = vpop.f32.mrf.mxu0
    %v532 = vadd.f32 0.0, %v531
    %v533 = vpop.f32.mrf.mxu0
    %v534 = vadd.f32 0.0, %v533
    %535 = vdwg.mxu0
    %vm536 = vcmask 130048
    %v537 = vsel %vm536, %v532, -inf
    %538 = vmax.xlane.f32.xlu0 %v537
    %v539 = vpop.xlane.xlu0 %538
    %v540 = vsel %vm536, %v534, -inf
    %541 = vmax.xlane.f32.xlu0 %v540
    %v542 = vpop.xlane.xlu0 %541
    %v543 = vsub.f32 %v532, %v539
    %v544 = vsub.f32 %v534, %v542
    %v545 = vmul.f32 %v543, 1.442695
    %v546 = vpow.pop %v545
    %v547 = vmul.f32 %v544, 1.442695
    %v548 = vpow.pop %v547
    %v549 = vsel %vm536, %v546, 0.0
    %550 = vadd.xlane.f32.xlu0 %v549
    %v551 = vpop.xlane.xlu0 %550
    %v552 = vsel %vm536, %v548, 0.0
    %553 = vadd.xlane.f32.xlu0 %v552
    %v554 = vpop.xlane.xlu0 %553
    %v555 = vrcp.pop %v551
    %v556 = vrcp.pop %v554
    %v557 = vmul.f32 %v546, %v555
    %v558 = vmul.f32 %v548, %v556
    %v559 = vpack.c.bf16 %v558, %v557
    %v562 = vunpack.c.l.b16 %v500
    %v563 = vunpack.c.l.b16 %v502
    %v564 = vpack.c.b16 %v563, %v562
    %v567 = vsel %vm536, %v559, 0
    %569 = vmatpush.bf16.msra.mxu0 0
    %570 = vmatpush.bf16.msra.mxu0 0
    %571 = vmatpush.bf16.msra.mxu0 0
    %572 = vmatpush.bf16.msra.mxu0 0
    %573 = vmatpush.bf16.msra.mxu0 0
    %574 = vmatpush.bf16.msra.mxu0 0
    %575 = vmatpush.bf16.msra.mxu0 0
    %576 = vmatpush.bf16.msra.mxu0 %v564
    %577 = vmatmul.bf16.gmra.mxu0 %v567
    %v578 = vpop.f32.mrf.mxu0
    %v579 = vadd.f32 0.0, %v578
    %v580 = vpop.f32.mrf.mxu0
    %v581 = vadd.f32 0.0, %v580
    %582 = vdwg.mxu0
    %v583 = vpack.c.bf16 %v579, %v579
    %v584 = vpack.c.bf16 %v581, %v581
    %vm585 = vcmask 257024
    %586 = vst.msk [vmem:[#allocation2] sm:$0xf] %vm585, %v583
    %587 = vst.msk [vmem:[#allocation2 + $0x4] sm:$0xf] %vm585, %v584
    %588 = vrot.lane.b32.xlu0 %v511, 96
    %v589 = vpop.permute.xlu0 %588
    %590 = vrot.lane.b32.xlu0 %v514, 96
    %v591 = vpop.permute.xlu0 %590
    %v593 = vsel %vm515, %v589, 0
    %v596 = vsel %vm515, %v591, 0
    %598 = vmatpush.bf16.xpose.msra.mxu0 0
    %599 = vmatpush.bf16.xpose.msra.mxu0 0
    %600 = vmatpush.bf16.xpose.msra.mxu0 0
    %601 = vmatpush.bf16.xpose.msra.mxu0 0
    %602 = vmatpush.bf16.xpose.msra.mxu0 0
    %603 = vmatpush.bf16.xpose.msra.mxu0 0
    %604 = vmatpush.bf16.xpose.msra.mxu0 0
    %605 = vmatpush.bf16.xpose.msra.mxu0 %v596
    %606 = vmatmul.bf16.gmra.mxu0 %v593
    %v607 = vpop.f32.mrf.mxu0
    %v608 = vadd.f32 0.0, %v607
    %v609 = vpop.f32.mrf.mxu0
    %v610 = vadd.f32 0.0, %v609
    %611 = vdwg.mxu0
    %v612 = vsel %vm536, %v608, -inf
    %613 = vmax.xlane.f32.xlu0 %v612
    %v614 = vpop.xlane.xlu0 %613
    %v615 = vsel %vm536, %v610, -inf
    %616 = vmax.xlane.f32.xlu0 %v615
    %v617 = vpop.xlane.xlu0 %616
    %v618 = vsub.f32 %v608, %v614
    %v619 = vsub.f32 %v610, %v617
    %v620 = vmul.f32 %v618, 1.442695
    %v621 = vpow.pop %v620
    %v622 = vmul.f32 %v619, 1.442695
    %v623 = vpow.pop %v622
    %v624 = vsel %vm536, %v621, 0.0
    %625 = vadd.xlane.f32.xlu0 %v624
    %v626 = vpop.xlane.xlu0 %625
    %v627 = vsel %vm536, %v623, 0.0
    %628 = vadd.xlane.f32.xlu0 %v627
    %v629 = vpop.xlane.xlu0 %628
    %v630 = vrcp.pop %v626
    %v631 = vrcp.pop %v629
    %v632 = vmul.f32 %v621, %v630
    %v633 = vmul.f32 %v623, %v631
    %v634 = vpack.c.bf16 %v633, %v632
    %635 = vrot.lane.b32.xlu0 %v564, 96
    %v636 = vpop.permute.xlu0 %635
    %v639 = vsel %vm536, %v634, 0
    %641 = vmatpush.bf16.msra.mxu0 0
    %642 = vmatpush.bf16.msra.mxu0 0
    %643 = vmatpush.bf16.msra.mxu0 0
    %644 = vmatpush.bf16.msra.mxu0 0
    %645 = vmatpush.bf16.msra.mxu0 0
    %646 = vmatpush.bf16.msra.mxu0 0
    %647 = vmatpush.bf16.msra.mxu0 0
    %648 = vmatpush.bf16.msra.mxu0 %v636
    %649 = vmatmul.bf16.gmra.mxu0 %v639
    %v650 = vpop.f32.mrf.mxu0
    %v651 = vadd.f32 0.0, %v650
    %v652 = vpop.f32.mrf.mxu0
    %v653 = vadd.f32 0.0, %v652
    %654 = vdwg.mxu0
    %v655 = vpack.c.bf16 %v651, %v651
    %v656 = vpack.c.bf16 %v653, %v653
    %659 = vrot.lane.b32.xlu0 %v655, 32
    %v660 = vpop.permute.xlu0 %659
    %661 = vrot.lane.b32.xlu0 %v656, 32
    %v662 = vpop.permute.xlu0 %661
    %vm665 = vcmask 519424
    %666 = vst.msk [vmem:[#allocation2] sm:$0xf] %vm665, %v660
    %667 = vst.msk [vmem:[#allocation2 + $0x4] sm:$0xf] %vm665, %v662
    %668 = vrot.lane.b32.xlu0 %v511, 64
    %v669 = vpop.permute.xlu0 %668
    %670 = vrot.lane.b32.xlu0 %v514, 64
    %v671 = vpop.permute.xlu0 %670
    %v673 = vsel %vm515, %v669, 0
    %v676 = vsel %vm515, %v671, 0
    %678 = vmatpush.bf16.xpose.msra.mxu0 0
    %679 = vmatpush.bf16.xpose.msra.mxu0 0
    %680 = vmatpush.bf16.xpose.msra.mxu0 0
    %681 = vmatpush.bf16.xpose.msra.mxu0 0
    %682 = vmatpush.bf16.xpose.msra.mxu0 0
    %683 = vmatpush.bf16.xpose.msra.mxu0 0
    %684 = vmatpush.bf16.xpose.msra.mxu0 0
    %685 = vmatpush.bf16.xpose.msra.mxu0 %v676
    %686 = vmatmul.bf16.gmra.mxu0 %v673
    %v687 = vpop.f32.mrf.mxu0
    %v688 = vadd.f32 0.0, %v687
    %v689 = vpop.f32.mrf.mxu0
    %v690 = vadd.f32 0.0, %v689
    %691 = vdwg.mxu0
    %v692 = vsel %vm536, %v688, -inf
    %693 = vmax.xlane.f32.xlu0 %v692
    %v694 = vpop.xlane.xlu0 %693
    %v695 = vsel %vm536, %v690, -inf
    %696 = vmax.xlane.f32.xlu0 %v695
    %v697 = vpop.xlane.xlu0 %696
    %v698 = vsub.f32 %v688, %v694
    %v699 = vsub.f32 %v690, %v697
    %v700 = vmul.f32 %v698, 1.442695
    %v701 = vpow.pop %v700
    %v702 = vmul.f32 %v699, 1.442695
    %v703 = vpow.pop %v702
    %v704 = vsel %vm536, %v701, 0.0
    %705 = vadd.xlane.f32.xlu0 %v704
    %v706 = vpop.xlane.xlu0 %705
    %v707 = vsel %vm536, %v703, 0.0
    %708 = vadd.xlane.f32.xlu0 %v707
    %v709 = vpop.xlane.xlu0 %708
    %v710 = vrcp.pop %v706
    %v711 = vrcp.pop %v709
    %v712 = vmul.f32 %v701, %v710
    %v713 = vmul.f32 %v703, %v711
    %v714 = vpack.c.bf16 %v713, %v712
    %715 = vrot.lane.b32.xlu0 %v564, 64
    %v716 = vpop.permute.xlu0 %715
    %v719 = vsel %vm536, %v714, 0
    %721 = vmatpush.bf16.msra.mxu0 0
    %722 = vmatpush.bf16.msra.mxu0 0
    %723 = vmatpush.bf16.msra.mxu0 0
    %724 = vmatpush.bf16.msra.mxu0 0
    %725 = vmatpush.bf16.msra.mxu0 0
    %726 = vmatpush.bf16.msra.mxu0 0
    %727 = vmatpush.bf16.msra.mxu0 0
    %728 = vmatpush.bf16.msra.mxu0 %v716
    %729 = vmatmul.bf16.gmra.mxu0 %v719
    %v730 = vpop.f32.mrf.mxu0
    %v731 = vadd.f32 0.0, %v730
    %v732 = vpop.f32.mrf.mxu0
    %v733 = vadd.f32 0.0, %v732
    %734 = vdwg.mxu0
    %v735 = vpack.c.bf16 %v731, %v731
    %v736 = vpack.c.bf16 %v733, %v733
    %739 = vrot.lane.b32.xlu0 %v735, 64
    %v740 = vpop.permute.xlu0 %739
    %741 = vrot.lane.b32.xlu0 %v736, 64
    %v742 = vpop.permute.xlu0 %741
    %vm745 = vcmask 781824
    %746 = vst.msk [vmem:[#allocation2] sm:$0xf] %vm745, %v740
    %747 = vst.msk [vmem:[#allocation2 + $0x4] sm:$0xf] %vm745, %v742
    %748 = vrot.lane.b32.xlu0 %v511, 32
    %v749 = vpop.permute.xlu0 %748
    %750 = vrot.lane.b32.xlu0 %v514, 32
    %v751 = vpop.permute.xlu0 %750
    %v753 = vsel %vm515, %v749, 0
    %v756 = vsel %vm515, %v751, 0
    %758 = vmatpush.bf16.xpose.msra.mxu0 0
    %759 = vmatpush.bf16.xpose.msra.mxu0 0
    %760 = vmatpush.bf16.xpose.msra.mxu0 0
    %761 = vmatpush.bf16.xpose.msra.mxu0 0
    %762 = vmatpush.bf16.xpose.msra.mxu0 0
    %763 = vmatpush.bf16.xpose.msra.mxu0 0
    %764 = vmatpush.bf16.xpose.msra.mxu0 0
    %765 = vmatpush.bf16.xpose.msra.mxu0 %v756
    %766 = vmatmul.bf16.gmra.mxu0 %v753
    %v767 = vpop.f32.mrf.mxu0
    %v768 = vadd.f32 0.0, %v767
    %v769 = vpop.f32.mrf.mxu0
    %v770 = vadd.f32 0.0, %v769
    %771 = vdwg.mxu0
    %v772 = vsel %vm536, %v768, -inf
    %773 = vmax.xlane.f32.xlu0 %v772
    %v774 = vpop.xlane.xlu0 %773
    %v775 = vsel %vm536, %v770, -inf
    %776 = vmax.xlane.f32.xlu0 %v775
    %v777 = vpop.xlane.xlu0 %776
    %v778 = vsub.f32 %v768, %v774
    %v779 = vsub.f32 %v770, %v777
    %v780 = vmul.f32 %v778, 1.442695
    %v781 = vpow.pop %v780
    %v782 = vmul.f32 %v779, 1.442695
    %v783 = vpow.pop %v782
    %v784 = vsel %vm536, %v781, 0.0
    %785 = vadd.xlane.f32.xlu0 %v784
    %v786 = vpop.xlane.xlu0 %785
    %v787 = vsel %vm536, %v783, 0.0
    %788 = vadd.xlane.f32.xlu0 %v787
    %v789 = vpop.xlane.xlu0 %788
    %v790 = vrcp.pop %v786
    %v791 = vrcp.pop %v789
    %v792 = vmul.f32 %v781, %v790
    %v793 = vmul.f32 %v783, %v791
    %v794 = vpack.c.bf16 %v793, %v792
    %795 = vrot.lane.b32.xlu0 %v564, 32
    %v796 = vpop.permute.xlu0 %795
    %v799 = vsel %vm536, %v794, 0
    %801 = vmatpush.bf16.msra.mxu0 0
    %802 = vmatpush.bf16.msra.mxu0 0
    %803 = vmatpush.bf16.msra.mxu0 0
    %804 = vmatpush.bf16.msra.mxu0 0
    %805 = vmatpush.bf16.msra.mxu0 0
    %806 = vmatpush.bf16.msra.mxu0 0
    %807 = vmatpush.bf16.msra.mxu0 0
    %808 = vmatpush.bf16.msra.mxu0 %v796
    %809 = vmatmul.bf16.gmra.mxu0 %v799
    %v810 = vpop.f32.mrf.mxu0
    %v811 = vadd.f32 0.0, %v810
    %v812 = vpop.f32.mrf.mxu0
    %v813 = vadd.f32 0.0, %v812
    %814 = vdwg.mxu0
    %v815 = vpack.c.bf16 %v811, %v811
    %v816 = vpack.c.bf16 %v813, %v813
    %819 = vrot.lane.b32.xlu0 %v815, 96
    %v820 = vpop.permute.xlu0 %819
    %821 = vrot.lane.b32.xlu0 %v816, 96
    %v822 = vpop.permute.xlu0 %821
    %vm825 = vcmask 1044224
    %826 = vst.msk [vmem:[#allocation2] sm:$0xf] %vm825, %v820
    %827 = vst.msk [vmem:[#allocation2 + $0x4] sm:$0xf] %vm825, %v822
    %v830 = vunpack.c.l.b16 %v503
    %v831 = vunpack.c.l.b16 %v505
    %v832 = vpack.c.b16 %v831, %v830
    %v833 = vunpack.c.h.b16 %v503
    %v834 = vunpack.c.h.b16 %v505
    %v835 = vpack.c.b16 %v834, %v833
    %v837 = vsel %vm515, %v832, 0
    %v840 = vsel %vm515, %v835, 0
    %842 = vmatpush.bf16.xpose.msra.mxu0 0
    %843 = vmatpush.bf16.xpose.msra.mxu0 0
    %844 = vmatpush.bf16.xpose.msra.mxu0 0
    %845 = vmatpush.bf16.xpose.msra.mxu0 0
    %846 = vmatpush.bf16.xpose.msra.mxu0 0
    %847 = vmatpush.bf16.xpose.msra.mxu0 0
    %848 = vmatpush.bf16.xpose.msra.mxu0 0
    %849 = vmatpush.bf16.xpose.msra.mxu0 %v840
    %850 = vmatmul.bf16.gmra.mxu0 %v837
    %v851 = vpop.f32.mrf.mxu0
    %v852 = vadd.f32 0.0, %v851
    %v853 = vpop.f32.mrf.mxu0
    %v854 = vadd.f32 0.0, %v853
    %855 = vdwg.mxu0
    %v856 = vsel %vm536, %v852, -inf
    %857 = vmax.xlane.f32.xlu0 %v856
    %v858 = vpop.xlane.xlu0 %857
    %v859 = vsel %vm536, %v854, -inf
    %860 = vmax.xlane.f32.xlu0 %v859
    %v861 = vpop.xlane.xlu0 %860
    %v862 = vsub.f32 %v852, %v858
    %v863 = vsub.f32 %v854, %v861
    %v864 = vmul.f32 %v862, 1.442695
    %v865 = vpow.pop %v864
    %v866 = vmul.f32 %v863, 1.442695
    %v867 = vpow.pop %v866
    %v868 = vsel %vm536, %v865, 0.0
    %869 = vadd.xlane.f32.xlu0 %v868
    %v870 = vpop.xlane.xlu0 %869
    %v871 = vsel %vm536, %v867, 0.0
    %872 = vadd.xlane.f32.xlu0 %v871
    %v873 = vpop.xlane.xlu0 %872
    %v874 = vrcp.pop %v870
    %v875 = vrcp.pop %v873
    %v876 = vmul.f32 %v865, %v874
    %v877 = vmul.f32 %v867, %v875
    %v878 = vpack.c.bf16 %v877, %v876
    %v881 = vunpack.c.l.b16 %v504
    %v882 = vunpack.c.l.b16 %v506
    %v883 = vpack.c.b16 %v882, %v881
    %v886 = vsel %vm536, %v878, 0
    %888 = vmatpush.bf16.msra.mxu0 0
    %889 = vmatpush.bf16.msra.mxu0 0
    %890 = vmatpush.bf16.msra.mxu0 0
    %891 = vmatpush.bf16.msra.mxu0 0
    %892 = vmatpush.bf16.msra.mxu0 0
    %893 = vmatpush.bf16.msra.mxu0 0
    %894 = vmatpush.bf16.msra.mxu0 0
    %895 = vmatpush.bf16.msra.mxu0 %v883
    %896 = vmatmul.bf16.gmra.mxu0 %v886
    %v897 = vpop.f32.mrf.mxu0
    %v898 = vadd.f32 0.0, %v897
    %v899 = vpop.f32.mrf.mxu0
    %v900 = vadd.f32 0.0, %v899
    %901 = vdwg.mxu0
    %v902 = vpack.c.bf16 %v898, %v898
    %v903 = vpack.c.bf16 %v900, %v900
    %904 = vst.msk [vmem:[#allocation2 + $0x8] sm:$0xf] %vm585, %v902
    %905 = vst.msk [vmem:[#allocation2 + $0xc] sm:$0xf] %vm585, %v903
    %906 = vrot.lane.b32.xlu0 %v832, 96
    %v907 = vpop.permute.xlu0 %906
    %908 = vrot.lane.b32.xlu0 %v835, 96
    %v909 = vpop.permute.xlu0 %908
    %v911 = vsel %vm515, %v907, 0
    %v914 = vsel %vm515, %v909, 0
    %916 = vmatpush.bf16.xpose.msra.mxu0 0
    %917 = vmatpush.bf16.xpose.msra.mxu0 0
    %918 = vmatpush.bf16.xpose.msra.mxu0 0
    %919 = vmatpush.bf16.xpose.msra.mxu0 0
    %920 = vmatpush.bf16.xpose.msra.mxu0 0
    %921 = vmatpush.bf16.xpose.msra.mxu0 0
    %922 = vmatpush.bf16.xpose.msra.mxu0 0
    %923 = vmatpush.bf16.xpose.msra.mxu0 %v914
    %924 = vmatmul.bf16.gmra.mxu0 %v911
    %v925 = vpop.f32.mrf.mxu0
    %v926 = vadd.f32 0.0, %v925
    %v927 = vpop.f32.mrf.mxu0
    %v928 = vadd.f32 0.0, %v927
    %929 = vdwg.mxu0
    %v930 = vsel %vm536, %v926, -inf
    %931 = vmax.xlane.f32.xlu0 %v930
    %v932 = vpop.xlane.xlu0 %931
    %v933 = vsel %vm536, %v928, -inf
    %934 = vmax.xlane.f32.xlu0 %v933
    %v935 = vpop.xlane.xlu0 %934
    %v936 = vsub.f32 %v926, %v932
    %v937 = vsub.f32 %v928, %v935
    %v938 = vmul.f32 %v936, 1.442695
    %v939 = vpow.pop %v938
    %v940 = vmul.f32 %v937, 1.442695
    %v941 = vpow.pop %v940
    %v942 = vsel %vm536, %v939, 0.0
    %943 = vadd.xlane.f32.xlu0 %v942
    %v944 = vpop.xlane.xlu0 %943
    %v945 = vsel %vm536, %v941, 0.0
    %946 = vadd.xlane.f32.xlu0 %v945
    %v947 = vpop.xlane.xlu0 %946
    %v948 = vrcp.pop %v944
    %v949 = vrcp.pop %v947
    %v950 = vmul.f32 %v939, %v948
    %v951 = vmul.f32 %v941, %v949
    %v952 = vpack.c.bf16 %v951, %v950
    %953 = vrot.lane.b32.xlu0 %v883, 96
    %v954 = vpop.permute.xlu0 %953
    %v957 = vsel %vm536, %v952, 0
    %959 = vmatpush.bf16.msra.mxu0 0
    %960 = vmatpush.bf16.msra.mxu0 0
    %961 = vmatpush.bf16.msra.mxu0 0
    %962 = vmatpush.bf16.msra.mxu0 0
    %963 = vmatpush.bf16.msra.mxu0 0
    %964 = vmatpush.bf16.msra.mxu0 0
    %965 = vmatpush.bf16.msra.mxu0 0
    %966 = vmatpush.bf16.msra.mxu0 %v954
    %967 = vmatmul.bf16.gmra.mxu0 %v957
    %v968 = vpop.f32.mrf.mxu0
    %v969 = vadd.f32 0.0, %v968
    %v970 = vpop.f32.mrf.mxu0
    %v971 = vadd.f32 0.0, %v970
    %972 = vdwg.mxu0
    %v973 = vpack.c.bf16 %v969, %v969
    %v974 = vpack.c.bf16 %v971, %v971
    %977 = vrot.lane.b32.xlu0 %v973, 32
    %v978 = vpop.permute.xlu0 %977
    %979 = vrot.lane.b32.xlu0 %v974, 32
    %v980 = vpop.permute.xlu0 %979
    %983 = vst.msk [vmem:[#allocation2 + $0x8] sm:$0xf] %vm665, %v978
    %984 = vst.msk [vmem:[#allocation2 + $0xc] sm:$0xf] %vm665, %v980
    %985 = vrot.lane.b32.xlu0 %v832, 64
    %v986 = vpop.permute.xlu0 %985
    %987 = vrot.lane.b32.xlu0 %v835, 64
    %v988 = vpop.permute.xlu0 %987
    %v990 = vsel %vm515, %v986, 0
    %v993 = vsel %vm515, %v988, 0
    %995 = vmatpush.bf16.xpose.msra.mxu0 0
    %996 = vmatpush.bf16.xpose.msra.mxu0 0
    %997 = vmatpush.bf16.xpose.msra.mxu0 0
    %998 = vmatpush.bf16.xpose.msra.mxu0 0
    %999 = vmatpush.bf16.xpose.msra.mxu0 0
    %1000 = vmatpush.bf16.xpose.msra.mxu0 0
    %1001 = vmatpush.bf16.xpose.msra.mxu0 0
    %1002 = vmatpush.bf16.xpose.msra.mxu0 %v993
    %1003 = vmatmul.bf16.gmra.mxu0 %v990
    %v1004 = vpop.f32.mrf.mxu0
    %v1005 = vadd.f32 0.0, %v1004
    %v1006 = vpop.f32.mrf.mxu0
    %v1007 = vadd.f32 0.0, %v1006
    %1008 = vdwg.mxu0
    %v1009 = vsel %vm536, %v1005, -inf
    %1010 = vmax.xlane.f32.xlu0 %v1009
    %v1011 = vpop.xlane.xlu0 %1010
    %v1012 = vsel %vm536, %v1007, -inf
    %1013 = vmax.xlane.f32.xlu0 %v1012
    %v1014 = vpop.xlane.xlu0 %1013
    %v1015 = vsub.f32 %v1005, %v1011
    %v1016 = vsub.f32 %v1007, %v1014
    %v1017 = vmul.f32 %v1015, 1.442695
    %v1018 = vpow.pop %v1017
    %v1019 = vmul.f32 %v1016, 1.442695
    %v1020 = vpow.pop %v1019
    %v1021 = vsel %vm536, %v1018, 0.0
    %1022 = vadd.xlane.f32.xlu0 %v1021
    %v1023 = vpop.xlane.xlu0 %1022
    %v1024 = vsel %vm536, %v1020, 0.0
    %1025 = vadd.xlane.f32.xlu0 %v1024
    %v1026 = vpop.xlane.xlu0 %1025
    %v1027 = vrcp.pop %v1023
    %v1028 = vrcp.pop %v1026
    %v1029 = vmul.f32 %v1018, %v1027
    %v1030 = vmul.f32 %v1020, %v1028
    %v1031 = vpack.c.bf16 %v1030, %v1029
    %1032 = vrot.lane.b32.xlu0 %v883, 64
    %v1033 = vpop.permute.xlu0 %1032
    %v1036 = vsel %vm536, %v1031, 0
    %1038 = vmatpush.bf16.msra.mxu0 0
    %1039 = vmatpush.bf16.msra.mxu0 0
    %1040 = vmatpush.bf16.msra.mxu0 0
    %1041 = vmatpush.bf16.msra.mxu0 0
    %1042 = vmatpush.bf16.msra.mxu0 0
    %1043 = vmatpush.bf16.msra.mxu0 0
    %1044 = vmatpush.bf16.msra.mxu0 0
    %1045 = vmatpush.bf16.msra.mxu0 %v1033
    %1046 = vmatmul.bf16.gmra.mxu0 %v1036
    %v1047 = vpop.f32.mrf.mxu0
    %v1048 = vadd.f32 0.0, %v1047
    %v1049 = vpop.f32.mrf.mxu0
    %v1050 = vadd.f32 0.0, %v1049
    %1051 = vdwg.mxu0
    %v1052 = vpack.c.bf16 %v1048, %v1048
    %v1053 = vpack.c.bf16 %v1050, %v1050
    %1056 = vrot.lane.b32.xlu0 %v1052, 64
    %v1057 = vpop.permute.xlu0 %1056
    %1058 = vrot.lane.b32.xlu0 %v1053, 64
    %v1059 = vpop.permute.xlu0 %1058
    %1062 = vst.msk [vmem:[#allocation2 + $0x8] sm:$0xf] %vm745, %v1057
    %1063 = vst.msk [vmem:[#allocation2 + $0xc] sm:$0xf] %vm745, %v1059
    %1064 = vrot.lane.b32.xlu0 %v832, 32
    %v1065 = vpop.permute.xlu0 %1064
    %1066 = vrot.lane.b32.xlu0 %v835, 32
    %v1067 = vpop.permute.xlu0 %1066
    %v1069 = vsel %vm515, %v1065, 0
    %v1072 = vsel %vm515, %v1067, 0
    %1074 = vmatpush.bf16.xpose.msra.mxu0 0
    %1075 = vmatpush.bf16.xpose.msra.mxu0 0
    %1076 = vmatpush.bf16.xpose.msra.mxu0 0
    %1077 = vmatpush.bf16.xpose.msra.mxu0 0
    %1078 = vmatpush.bf16.xpose.msra.mxu0 0
    %1079 = vmatpush.bf16.xpose.msra.mxu0 0
    %1080 = vmatpush.bf16.xpose.msra.mxu0 0
    %1081 = vmatpush.bf16.xpose.msra.mxu0 %v1072
    %1082 = vmatmul.bf16.gmra.mxu0 %v1069
    %v1083 = vpop.f32.mrf.mxu0
    %v1084 = vadd.f32 0.0, %v1083
    %v1085 = vpop.f32.mrf.mxu0
    %v1086 = vadd.f32 0.0, %v1085
    %1087 = vdwg.mxu0
    %v1088 = vsel %vm536, %v1084, -inf
    %1089 = vmax.xlane.f32.xlu0 %v1088
    %v1090 = vpop.xlane.xlu0 %1089
    %v1091 = vsel %vm536, %v1086, -inf
    %1092 = vmax.xlane.f32.xlu0 %v1091
    %v1093 = vpop.xlane.xlu0 %1092
    %v1094 = vsub.f32 %v1084, %v1090
    %v1095 = vsub.f32 %v1086, %v1093
    %v1096 = vmul.f32 %v1094, 1.442695
    %v1097 = vpow.pop %v1096
    %v1098 = vmul.f32 %v1095, 1.442695
    %v1099 = vpow.pop %v1098
    %v1100 = vsel %vm536, %v1097, 0.0
    %1101 = vadd.xlane.f32.xlu0 %v1100
    %v1102 = vpop.xlane.xlu0 %1101
    %v1103 = vsel %vm536, %v1099, 0.0
    %1104 = vadd.xlane.f32.xlu0 %v1103
    %v1105 = vpop.xlane.xlu0 %1104
    %v1106 = vrcp.pop %v1102
    %v1107 = vrcp.pop %v1105
    %v1108 = vmul.f32 %v1097, %v1106
    %v1109 = vmul.f32 %v1099, %v1107
    %v1110 = vpack.c.bf16 %v1109, %v1108
    %1111 = vrot.lane.b32.xlu0 %v883, 32
    %v1112 = vpop.permute.xlu0 %1111
    %v1115 = vsel %vm536, %v1110, 0
    %1117 = vmatpush.bf16.msra.mxu0 0
    %1118 = vmatpush.bf16.msra.mxu0 0
    %1119 = vmatpush.bf16.msra.mxu0 0
    %1120 = vmatpush.bf16.msra.mxu0 0
    %1121 = vmatpush.bf16.msra.mxu0 0
    %1122 = vmatpush.bf16.msra.mxu0 0
    %1123 = vmatpush.bf16.msra.mxu0 0
    %1124 = vmatpush.bf16.msra.mxu0 %v1112
    %1125 = vmatmul.bf16.gmra.mxu0 %v1115
    %v1126 = vpop.f32.mrf.mxu0
    %v1127 = vadd.f32 0.0, %v1126
    %v1128 = vpop.f32.mrf.mxu0
    %v1129 = vadd.f32 0.0, %v1128
    %1130 = vdwg.mxu0
    %v1131 = vpack.c.bf16 %v1127, %v1127
    %v1132 = vpack.c.bf16 %v1129, %v1129
    %1135 = vrot.lane.b32.xlu0 %v1131, 96
    %v1136 = vpop.permute.xlu0 %1135
    %1137 = vrot.lane.b32.xlu0 %v1132, 96
    %v1138 = vpop.permute.xlu0 %1137
    %1141 = vst.msk [vmem:[#allocation2 + $0x8] sm:$0xf] %vm825, %v1136
    %1142 = vst.msk [vmem:[#allocation2 + $0xc] sm:$0xf] %vm825, %v1138
    %v1143 = vld [vmem:[#allocation2] sm:$0xf]
    %v1144 = vld [vmem:[#allocation2 + $0x4] sm:$0xf]
    %v1145 = vld [vmem:[#allocation2 + $0x8] sm:$0xf]
    %v1146 = vld [vmem:[#allocation2 + $0xc] sm:$0xf]
    %v1147 = vld [vmem:[#allocation11] sm:$0xf]
    %v1148 = vld [vmem:[#allocation11 + $0x4] sm:$0xf]
    %v1149 = vld [vmem:[#allocation11 + $0x8] sm:$0xf]
    %v1150 = vld [vmem:[#allocation11 + $0xc] sm:$0xf]
    %v1151 = vld [vmem:[#allocation11 + $0x10] sm:$0xf]
    %v1152 = vld [vmem:[#allocation11 + $0x14] sm:$0xf]
    %v1153 = vld [vmem:[#allocation11 + $0x18] sm:$0xf]
    %v1154 = vld [vmem:[#allocation11 + $0x1c] sm:$0xf]
    %v1155 = vld [vmem:[#allocation11 + $0x20] sm:$0xf]
    %v1156 = vld [vmem:[#allocation11 + $0x24] sm:$0xf]
    %v1157 = vld [vmem:[#allocation11 + $0x28] sm:$0xf]
    %v1158 = vld [vmem:[#allocation11 + $0x2c] sm:$0xf]
    %v1159 = vld [vmem:[#allocation11 + $0x30] sm:$0xf]
    %v1160 = vld [vmem:[#allocation11 + $0x34] sm:$0xf]
    %v1161 = vld [vmem:[#allocation11 + $0x38] sm:$0xf]
    %v1162 = vld [vmem:[#allocation11 + $0x3c] sm:$0xf]
    %v1163 = vld [vmem:[#allocation12] sm:$0x1]
    %v1165 = vperm.slane %v1163, 0
    %v1171 = vunpack.c.l.b16 %v1143
    %v1172 = vunpack.c.l.b16 %v1144
    %v1173 = vunpack.c.l.b16 %v1145
    %v1174 = vunpack.c.l.b16 %v1146
    %v1175 = vpack.c.b16 %v1172, %v1171
    %v1176 = vpack.c.b16 %v1174, %v1173
    %v1195 = vunpack.c.l.b16 %v1147
    %v1196 = vunpack.c.l.b16 %v1148
    %v1197 = vunpack.c.l.b16 %v1149
    %v1198 = vunpack.c.l.b16 %v1150
    %v1199 = vunpack.c.l.b16 %v1151
    %v1200 = vunpack.c.l.b16 %v1152
    %v1201 = vunpack.c.l.b16 %v1153
    %v1202 = vunpack.c.l.b16 %v1154
    %v1203 = vunpack.c.l.b16 %v1155
    %v1204 = vunpack.c.l.b16 %v1156
    %v1205 = vunpack.c.l.b16 %v1157
    %v1206 = vunpack.c.l.b16 %v1158
    %v1207 = vunpack.c.l.b16 %v1159
    %v1208 = vunpack.c.l.b16 %v1160
    %v1209 = vunpack.c.l.b16 %v1161
    %v1210 = vunpack.c.l.b16 %v1162
    %v1211 = vpack.c.b16 %v1196, %v1195
    %v1212 = vpack.c.b16 %v1198, %v1197
    %v1213 = vpack.c.b16 %v1200, %v1199
    %v1214 = vpack.c.b16 %v1202, %v1201
    %v1215 = vpack.c.b16 %v1204, %v1203
    %v1216 = vpack.c.b16 %v1206, %v1205
    %v1217 = vpack.c.b16 %v1208, %v1207
    %v1218 = vpack.c.b16 %v1210, %v1209
    %1227 = vmatpush.bf16.msra.mxu0 %v1218
    %1228 = vmatpush.bf16.msra.mxu0 %v1217
    %1229 = vmatpush.bf16.msra.mxu0 %v1216
    %1230 = vmatpush.bf16.msra.mxu0 %v1215
    %1231 = vmatpush.bf16.msra.mxu0 %v1214
    %1232 = vmatpush.bf16.msra.mxu0 %v1213
    %1233 = vmatpush.bf16.msra.mxu0 %v1212
    %1234 = vmatpush.bf16.msra.mxu0 %v1211
    %1235 = vmatmul.bf16.gmra.mxu0 %v1175
    %v1236 = vpop.f32.mrf.mxu0
    %v1237 = vadd.f32 %v1165, %v1236
    %v1238 = vpop.f32.mrf.mxu0
    %v1239 = vadd.f32 %v1165, %v1238
    %1240 = vmatmul.bf16.gmra.mxu0 %v1176
    %v1241 = vpop.f32.mrf.mxu0
    %v1242 = vadd.f32 %v1165, %v1241
    %v1243 = vpop.f32.mrf.mxu0
    %v1244 = vadd.f32 %v1165, %v1243
    %1245 = vdwg.mxu0
    %v1246 = vadd.f32 %v1237, %v165
    %v1247 = vadd.f32 %v1239, %v166
    %v1248 = vadd.f32 %v1242, %v167
    %v1249 = vadd.f32 %v1244, %v168
    %v1250 = vld [vmem:[%s7] sm:$0x1]
    %v1251 = vld [vmem:[%s8] sm:$0x1]
    %1252 = vadd.xlane.f32.xlu0 %v1246
    %v1253 = vpop.xlane.xlu0 %1252
    %1254 = vadd.xlane.f32.xlu0 %v1247
    %v1255 = vpop.xlane.xlu0 %1254
    %1256 = vadd.xlane.f32.xlu0 %v1248
    %v1257 = vpop.xlane.xlu0 %1256
    %1258 = vadd.xlane.f32.xlu0 %v1249
    %v1259 = vpop.xlane.xlu0 %1258
    %v1260 = vmul.f32 %v1253, %v185
    %v1261 = vmul.f32 %v1255, %v185
    %v1262 = vmul.f32 %v1257, %v185
    %v1263 = vmul.f32 %v1259, %v185
    %v1264 = vsub.f32 %v1246, %v1260
    %v1265 = vsub.f32 %v1247, %v1261
    %v1266 = vsub.f32 %v1248, %v1262
    %v1267 = vsub.f32 %v1249, %v1263
    %v1268 = vmul.f32 %v1264, %v1264
    %v1269 = vmul.f32 %v1265, %v1265
    %v1270 = vmul.f32 %v1266, %v1266
    %v1271 = vmul.f32 %v1267, %v1267
    %1272 = vadd.xlane.f32.xlu0 %v1268
    %v1273 = vpop.xlane.xlu0 %1272
    %1274 = vadd.xlane.f32.xlu0 %v1269
    %v1275 = vpop.xlane.xlu0 %1274
    %1276 = vadd.xlane.f32.xlu0 %v1270
    %v1277 = vpop.xlane.xlu0 %1276
    %1278 = vadd.xlane.f32.xlu0 %v1271
    %v1279 = vpop.xlane.xlu0 %1278
    %v1280 = vmul.f32 %v1273, %v185
    %v1281 = vmul.f32 %v1275, %v185
    %v1282 = vmul.f32 %v1277, %v185
    %v1283 = vmul.f32 %v1279, %v185
    %v1284 = vadd.f32 %v1280, 1e-05
    %v1285 = vadd.f32 %v1281, 1e-05
    %v1286 = vadd.f32 %v1282, 1e-05
    %v1287 = vadd.f32 %v1283, 1e-05
    %v1288 = vrsqrt.pop %v1284
    %v1289 = vmul.f32 %v1288, %v1284
    %v1290 = vmul.f32 %v1289, %v1288
    %v1291 = vmul.f32 0.5, %v1290
    %v1292 = vsub.f32 1.5, %v1291
    %v1293 = vmul.f32 %v1288, %v1292
    %vm1294 = vweird.f32 %v1284
    %vm1295 = vweird.f32 %v1288
    %vm1296 = vmor %vm1294, %vm1295
    %v1297 = vsel %vm1296, %v1288, %v1293
    %v1298 = vrsqrt.pop %v1285
    %v1299 = vmul.f32 %v1298, %v1285
    %v1300 = vmul.f32 %v1299, %v1298
    %v1301 = vmul.f32 0.5, %v1300
    %v1302 = vsub.f32 1.5, %v1301
    %v1303 = vmul.f32 %v1298, %v1302
    %vm1304 = vweird.f32 %v1285
    %vm1305 = vweird.f32 %v1298
    %vm1306 = vmor %vm1304, %vm1305
    %v1307 = vsel %vm1306, %v1298, %v1303
    %v1308 = vrsqrt.pop %v1286
    %v1309 = vmul.f32 %v1308, %v1286
    %v1310 = vmul.f32 %v1309, %v1308
    %v1311 = vmul.f32 0.5, %v1310
    %v1312 = vsub.f32 1.5, %v1311
    %v1313 = vmul.f32 %v1308, %v1312
    %vm1314 = vweird.f32 %v1286
    %vm1315 = vweird.f32 %v1308
    %vm1316 = vmor %vm1314, %vm1315
    %v1317 = vsel %vm1316, %v1308, %v1313
    %v1318 = vrsqrt.pop %v1287
    %v1319 = vmul.f32 %v1318, %v1287
    %v1320 = vmul.f32 %v1319, %v1318
    %v1321 = vmul.f32 0.5, %v1320
    %v1322 = vsub.f32 1.5, %v1321
    %v1323 = vmul.f32 %v1318, %v1322
    %vm1324 = vweird.f32 %v1287
    %vm1325 = vweird.f32 %v1318
    %vm1326 = vmor %vm1324, %vm1325
    %v1327 = vsel %vm1326, %v1318, %v1323
    %v1328 = vmul.f32 %v1264, %v1297
    %v1329 = vmul.f32 %v1265, %v1307
    %v1330 = vmul.f32 %v1266, %v1317
    %v1331 = vmul.f32 %v1267, %v1327
    %v1333 = vperm.slane %v1250, 0
    %v1335 = vmul.f32 %v1328, %v1333
    %v1336 = vmul.f32 %v1329, %v1333
    %v1337 = vmul.f32 %v1330, %v1333
    %v1338 = vmul.f32 %v1331, %v1333
    %v1340 = vperm.slane %v1251, 0
    %v1342 = vadd.f32 %v1335, %v1340
    %v1343 = vadd.f32 %v1336, %v1340
    %v1344 = vadd.f32 %v1337, %v1340
    %v1345 = vadd.f32 %v1338, %v1340
    %v1346 = vpack.c.bf16 %v1343, %v1342
    %v1347 = vpack.c.bf16 %v1345, %v1344
    %v1348 = vld [vmem:[#allocation14] sm:$0xff]
    %v1349 = vld [vmem:[#allocation14 + $0x8] sm:$0xff]
    %v1350 = vld [vmem:[#allocation14 + $0x10] sm:$0xff]
    %v1351 = vld [vmem:[#allocation14 + $0x18] sm:$0xff]
    %v1352 = vld [vmem:[#allocation14 + $0x20] sm:$0xff]
    %v1353 = vld [vmem:[#allocation14 + $0x28] sm:$0xff]
    %v1354 = vld [vmem:[#allocation14 + $0x30] sm:$0xff]
    %v1355 = vld [vmem:[#allocation14 + $0x38] sm:$0xff]
    %v1356 = vld [vmem:[#allocation14 + $0x40] sm:$0xff]
    %v1357 = vld [vmem:[#allocation14 + $0x48] sm:$0xff]
    %v1358 = vld [vmem:[#allocation14 + $0x50] sm:$0xff]
    %v1359 = vld [vmem:[#allocation14 + $0x58] sm:$0xff]
    %v1360 = vld [vmem:[#allocation14 + $0x60] sm:$0xff]
    %v1361 = vld [vmem:[#allocation14 + $0x68] sm:$0xff]
    %v1362 = vld [vmem:[#allocation14 + $0x70] sm:$0xff]
    %v1363 = vld [vmem:[#allocation14 + $0x78] sm:$0xff]
    %v1364 = vld [vmem:[%s10] sm:$0x3]
    %v1366 = vperm.slane %v1364, 0
    %v1367 = vperm.slane %v1364, 1
    %v1386 = vunpack.c.l.b16 %v1348
    %v1387 = vunpack.c.h.b16 %v1348
    %v1388 = vunpack.c.l.b16 %v1349
    %v1389 = vunpack.c.h.b16 %v1349
    %v1390 = vunpack.c.l.b16 %v1350
    %v1391 = vunpack.c.h.b16 %v1350
    %v1392 = vunpack.c.l.b16 %v1351
    %v1393 = vunpack.c.h.b16 %v1351
    %v1394 = vunpack.c.l.b16 %v1352
    %v1395 = vunpack.c.h.b16 %v1352
    %v1396 = vunpack.c.l.b16 %v1353
    %v1397 = vunpack.c.h.b16 %v1353
    %v1398 = vunpack.c.l.b16 %v1354
    %v1399 = vunpack.c.h.b16 %v1354
    %v1400 = vunpack.c.l.b16 %v1355
    %v1401 = vunpack.c.h.b16 %v1355
    %v1402 = vunpack.c.l.b16 %v1356
    %v1403 = vunpack.c.h.b16 %v1356
    %v1404 = vunpack.c.l.b16 %v1357
    %v1405 = vunpack.c.h.b16 %v1357
    %v1406 = vunpack.c.l.b16 %v1358
    %v1407 = vunpack.c.h.b16 %v1358
    %v1408 = vunpack.c.l.b16 %v1359
    %v1409 = vunpack.c.h.b16 %v1359
    %v1410 = vunpack.c.l.b16 %v1360
    %v1411 = vunpack.c.h.b16 %v1360
    %v1412 = vunpack.c.l.b16 %v1361
    %v1413 = vunpack.c.h.b16 %v1361
    %v1414 = vunpack.c.l.b16 %v1362
    %v1415 = vunpack.c.h.b16 %v1362
    %v1416 = vunpack.c.l.b16 %v1363
    %v1417 = vunpack.c.h.b16 %v1363
    %v1418 = vpack.c.b16 %v1388, %v1386
    %v1419 = vpack.c.b16 %v1389, %v1387
    %v1420 = vpack.c.b16 %v1392, %v1390
    %v1421 = vpack.c.b16 %v1393, %v1391
    %v1422 = vpack.c.b16 %v1396, %v1394
    %v1423 = vpack.c.b16 %v1397, %v1395
    %v1424 = vpack.c.b16 %v1400, %v1398
    %v1425 = vpack.c.b16 %v1401, %v1399
    %v1426 = vpack.c.b16 %v1404, %v1402
    %v1427 = vpack.c.b16 %v1405, %v1403
    %v1428 = vpack.c.b16 %v1408, %v1406
    %v1429 = vpack.c.b16 %v1409, %v1407
    %v1430 = vpack.c.b16 %v1412, %v1410
    %v1431 = vpack.c.b16 %v1413, %v1411
    %v1432 = vpack.c.b16 %v1416, %v1414
    %v1433 = vpack.c.b16 %v1417, %v1415
    %1450 = vmatpush.bf16.msra.mxu0 %v1432
    %1451 = vmatpush.bf16.msra.mxu0 %v1430
    %1452 = vmatpush.bf16.msra.mxu0 %v1428
    %1453 = vmatpush.bf16.msra.mxu0 %v1426
    %1454 = vmatpush.bf16.msra.mxu0 %v1424
    %1455 = vmatpush.bf16.msra.mxu0 %v1422
    %1456 = vmatpush.bf16.msra.mxu0 %v1420
    %1457 = vmatpush.bf16.msra.mxu0 %v1418
    %1458 = vmatmul.bf16.gmra.mxu0 %v1346
    %v1459 = vpop.f32.mrf.mxu0
    %v1460 = vadd.f32 %v1366, %v1459
    %v1461 = vpop.f32.mrf.mxu0
    %v1462 = vadd.f32 %v1366, %v1461
    %1463 = vmatmul.bf16.gmra.mxu0 %v1347
    %v1464 = vpop.f32.mrf.mxu0
    %v1465 = vadd.f32 %v1366, %v1464
    %v1466 = vpop.f32.mrf.mxu0
    %v1467 = vadd.f32 %v1366, %v1466
    %1468 = vdwg.mxu0
    %1469 = vmatpush.bf16.msra.mxu0 %v1433
    %1470 = vmatpush.bf16.msra.mxu0 %v1431
    %1471 = vmatpush.bf16.msra.mxu0 %v1429
    %1472 = vmatpush.bf16.msra.mxu0 %v1427
    %1473 = vmatpush.bf16.msra.mxu0 %v1425
    %1474 = vmatpush.bf16.msra.mxu0 %v1423
    %1475 = vmatpush.bf16.msra.mxu0 %v1421
    %1476 = vmatpush.bf16.msra.mxu0 %v1419
    %1477 = vmatmul.bf16.gmra.mxu0 %v1346
    %v1478 = vpop.f32.mrf.mxu0
    %v1479 = vadd.f32 %v1367, %v1478
    %v1480 = vpop.f32.mrf.mxu0
    %v1481 = vadd.f32 %v1367, %v1480
    %1482 = vmatmul.bf16.gmra.mxu0 %v1347
    %v1483 = vpop.f32.mrf.mxu0
    %v1484 = vadd.f32 %v1367, %v1483
    %v1485 = vpop.f32.mrf.mxu0
    %v1486 = vadd.f32 %v1367, %v1485
    %1487 = vdwg.mxu0
    %v1488 = vmul.f32 %v1460, 0.5
    %v1489 = vmul.f32 %v1479, 0.5
    %v1490 = vmul.f32 %v1462, 0.5
    %v1491 = vmul.f32 %v1481, 0.5
    %v1492 = vmul.f32 %v1465, 0.5
    %v1493 = vmul.f32 %v1484, 0.5
    %v1494 = vmul.f32 %v1467, 0.5
    %v1495 = vmul.f32 %v1486, 0.5
    %v1496 = vmul.f32 %v1460, 0.70710677
    %v1497 = vmul.f32 %v1479, 0.70710677
    %v1498 = vmul.f32 %v1462, 0.70710677
    %v1499 = vmul.f32 %v1481, 0.70710677
    %v1500 = vmul.f32 %v1465, 0.70710677
    %v1501 = vmul.f32 %v1484, 0.70710677
    %v1502 = vmul.f32 %v1467, 0.70710677
    %v1503 = vmul.f32 %v1486, 0.70710677
    %v1504 = vmul.f32 %v1496, %v1496
    %v1505 = vmin.f32 16.0, %v1504
    %v1506 = vmul.f32 %v1505, 2.1237322e-06
    %v1507 = vadd.f32 %v1506, 0.00028619796
    %v1508 = vmul.f32 %v1505, %v1507
    %v1509 = vadd.f32 %v1508, 0.0036580483
    %v1510 = vmul.f32 %v1505, %v1509
    %v1511 = vadd.f32 %v1510, 0.05243302
    %v1512 = vmul.f32 %v1505, %v1511
    %v1513 = vadd.f32 %v1512, 0.18741608
    %v1514 = vmul.f32 %v1505, %v1513
    %v1515 = vadd.f32 %v1514, 1.1283791
    %v1516 = vmul.f32 %v1496, %v1515
    %v1517 = vmul.f32 %v1505, 3.8918573e-05
    %v1518 = vadd.f32 %v1517, 0.001143296
    %v1519 = vmul.f32 %v1505, %v1518
    %v1520 = vadd.f32 %v1519, 0.014752088
    %v1521 = vmul.f32 %v1505, %v1520
    %v1522 = vadd.f32 %v1521, 0.112945676
    %v1523 = vmul.f32 %v1505, %v1522
    %v1524 = vadd.f32 %v1523, 0.4994258
    %v1525 = vmul.f32 %v1505, %v1524
    %v1526 = vadd.f32 %v1525, 1.0
    %v1527 = vrcp.pop %v1526
    %v1528 = vmul.f32 %v1526, %v1527
    %v1529 = vsub.f32 1.0, %v1528
    %v1530 = vmul.f32 %v1527, %v1529
    %v1531 = vadd.f32 %v1527, %v1530
    %vm1532 = vweird.f32 %v1526
    %vm1533 = vweird.f32 %v1527
    %vm1534 = vmor %vm1532, %vm1533
    %v1535 = vsel %vm1534, %v1527, %v1531
    %v1536 = vand.u32 2147483647, %v1526
    %vm1537 = vcmp.eq.f32.partialorder %v1536, 8.507059e+37
    %v1538 = vand.u32 %v1526, 2147483648
    %v1539 = vor.u32 1.1754944e-38, %v1538
    %v1540 = vsel %vm1537, %v1539, %v1535
    %v1541 = vmul.f32 %v1516, %v1540
    %v1542 = vmin.f32 %v1541, 1.0
    %v1543 = vmax.f32 %v1542, -1.0
    %v1544 = vmul.f32 %v1497, %v1497
    %v1545 = vmin.f32 16.0, %v1544
    %v1546 = vmul.f32 %v1545, 2.1237322e-06
    %v1547 = vadd.f32 %v1546, 0.00028619796
    %v1548 = vmul.f32 %v1545, %v1547
    %v1549 = vadd.f32 %v1548, 0.0036580483
    %v1550 = vmul.f32 %v1545, %v1549
    %v1551 = vadd.f32 %v1550, 0.05243302
    %v1552 = vmul.f32 %v1545, %v1551
    %v1553 = vadd.f32 %v1552, 0.18741608
    %v1554 = vmul.f32 %v1545, %v1553
    %v1555 = vadd.f32 %v1554, 1.1283791
    %v1556 = vmul.f32 %v1497, %v1555
    %v1557 = vmul.f32 %v1545, 3.8918573e-05
    %v1558 = vadd.f32 %v1557, 0.001143296
    %v1559 = vmul.f32 %v1545, %v1558
    %v1560 = vadd.f32 %v1559, 0.014752088
    %v1561 = vmul.f32 %v1545, %v1560
    %v1562 = vadd.f32 %v1561, 0.112945676
    %v1563 = vmul.f32 %v1545, %v1562
    %v1564 = vadd.f32 %v1563, 0.4994258
    %v1565 = vmul.f32 %v1545, %v1564
    %v1566 = vadd.f32 %v1565, 1.0
    %v1567 = vrcp.pop %v1566
    %v1568 = vmul.f32 %v1566, %v1567
    %v1569 = vsub.f32 1.0, %v1568
    %v1570 = vmul.f32 %v1567, %v1569
    %v1571 = vadd.f32 %v1567, %v1570
    %vm1572 = vweird.f32 %v1566
    %vm1573 = vweird.f32 %v1567
    %vm1574 = vmor %vm1572, %vm1573
    %v1575 = vsel %vm1574, %v1567, %v1571
    %v1576 = vand.u32 2147483647, %v1566
    %vm1577 = vcmp.eq.f32.partialorder %v1576, 8.507059e+37
    %v1578 = vand.u32 %v1566, 2147483648
    %v1579 = vor.u32 1.1754944e-38, %v1578
    %v1580 = vsel %vm1577, %v1579, %v1575
    %v1581 = vmul.f32 %v1556, %v1580
    %v1582 = vmin.f32 %v1581, 1.0
    %v1583 = vmax.f32 %v1582, -1.0
    %v1584 = vmul.f32 %v1498, %v1498
    %v1585 = vmin.f32 16.0, %v1584
    %v1586 = vmul.f32 %v1585, 2.1237322e-06
    %v1587 = vadd.f32 %v1586, 0.00028619796
    %v1588 = vmul.f32 %v1585, %v1587
    %v1589 = vadd.f32 %v1588, 0.0036580483
    %v1590 = vmul.f32 %v1585, %v1589
    %v1591 = vadd.f32 %v1590, 0.05243302
    %v1592 = vmul.f32 %v1585, %v1591
    %v1593 = vadd.f32 %v1592, 0.18741608
    %v1594 = vmul.f32 %v1585, %v1593
    %v1595 = vadd.f32 %v1594, 1.1283791
    %v1596 = vmul.f32 %v1498, %v1595
    %v1597 = vmul.f32 %v1585, 3.8918573e-05
    %v1598 = vadd.f32 %v1597, 0.001143296
    %v1599 = vmul.f32 %v1585, %v1598
    %v1600 = vadd.f32 %v1599, 0.014752088
    %v1601 = vmul.f32 %v1585, %v1600
    %v1602 = vadd.f32 %v1601, 0.112945676
    %v1603 = vmul.f32 %v1585, %v1602
    %v1604 = vadd.f32 %v1603, 0.4994258
    %v1605 = vmul.f32 %v1585, %v1604
    %v1606 = vadd.f32 %v1605, 1.0
    %v1607 = vrcp.pop %v1606
    %v1608 = vmul.f32 %v1606, %v1607
    %v1609 = vsub.f32 1.0, %v1608
    %v1610 = vmul.f32 %v1607, %v1609
    %v1611 = vadd.f32 %v1607, %v1610
    %vm1612 = vweird.f32 %v1606
    %vm1613 = vweird.f32 %v1607
    %vm1614 = vmor %vm1612, %vm1613
    %v1615 = vsel %vm1614, %v1607, %v1611
    %v1616 = vand.u32 2147483647, %v1606
    %vm1617 = vcmp.eq.f32.partialorder %v1616, 8.507059e+37
    %v1618 = vand.u32 %v1606, 2147483648
    %v1619 = vor.u32 1.1754944e-38, %v1618
    %v1620 = vsel %vm1617, %v1619, %v1615
    %v1621 = vmul.f32 %v1596, %v1620
    %v1622 = vmin.f32 %v1621, 1.0
    %v1623 = vmax.f32 %v1622, -1.0
    %v1624 = vmul.f32 %v1499, %v1499
    %v1625 = vmin.f32 16.0, %v1624
    %v1626 = vmul.f32 %v1625, 2.1237322e-06
    %v1627 = vadd.f32 %v1626, 0.00028619796
    %v1628 = vmul.f32 %v1625, %v1627
    %v1629 = vadd.f32 %v1628, 0.0036580483
    %v1630 = vmul.f32 %v1625, %v1629
    %v1631 = vadd.f32 %v1630, 0.05243302
    %v1632 = vmul.f32 %v1625, %v1631
    %v1633 = vadd.f32 %v1632, 0.18741608
    %v1634 = vmul.f32 %v1625, %v1633
    %v1635 = vadd.f32 %v1634, 1.1283791
    %v1636 = vmul.f32 %v1499, %v1635
    %v1637 = vmul.f32 %v1625, 3.8918573e-05
    %v1638 = vadd.f32 %v1637, 0.001143296
    %v1639 = vmul.f32 %v1625, %v1638
    %v1640 = vadd.f32 %v1639, 0.014752088
    %v1641 = vmul.f32 %v1625, %v1640
    %v1642 = vadd.f32 %v1641, 0.112945676
    %v1643 = vmul.f32 %v1625, %v1642
    %v1644 = vadd.f32 %v1643, 0.4994258
    %v1645 = vmul.f32 %v1625, %v1644
    %v1646 = vadd.f32 %v1645, 1.0
    %v1647 = vrcp.pop %v1646
    %v1648 = vmul.f32 %v1646, %v1647
    %v1649 = vsub.f32 1.0, %v1648
    %v1650 = vmul.f32 %v1647, %v1649
    %v1651 = vadd.f32 %v1647, %v1650
    %vm1652 = vweird.f32 %v1646
    %vm1653 = vweird.f32 %v1647
    %vm1654 = vmor %vm1652, %vm1653
    %v1655 = vsel %vm1654, %v1647, %v1651
    %v1656 = vand.u32 2147483647, %v1646
    %vm1657 = vcmp.eq.f32.partialorder %v1656, 8.507059e+37
    %v1658 = vand.u32 %v1646, 2147483648
    %v1659 = vor.u32 1.1754944e-38, %v1658
    %v1660 = vsel %vm1657, %v1659, %v1655
    %v1661 = vmul.f32 %v1636, %v1660
    %v1662 = vmin.f32 %v1661, 1.0
    %v1663 = vmax.f32 %v1662, -1.0
    %v1664 = vmul.f32 %v1500, %v1500
    %v1665 = vmin.f32 16.0, %v1664
    %v1666 = vmul.f32 %v1665, 2.1237322e-06
    %v1667 = vadd.f32 %v1666, 0.00028619796
    %v1668 = vmul.f32 %v1665, %v1667
    %v1669 = vadd.f32 %v1668, 0.0036580483
    %v1670 = vmul.f32 %v1665, %v1669
    %v1671 = vadd.f32 %v1670, 0.05243302
    %v1672 = vmul.f32 %v1665, %v1671
    %v1673 = vadd.f32 %v1672, 0.18741608
    %v1674 = vmul.f32 %v1665, %v1673
    %v1675 = vadd.f32 %v1674, 1.1283791
    %v1676 = vmul.f32 %v1500, %v1675
    %v1677 = vmul.f32 %v1665, 3.8918573e-05
    %v1678 = vadd.f32 %v1677, 0.001143296
    %v1679 = vmul.f32 %v1665, %v1678
    %v1680 = vadd.f32 %v1679, 0.014752088
    %v1681 = vmul.f32 %v1665, %v1680
    %v1682 = vadd.f32 %v1681, 0.112945676
    %v1683 = vmul.f32 %v1665, %v1682
    %v1684 = vadd.f32 %v1683, 0.4994258
    %v1685 = vmul.f32 %v1665, %v1684
    %v1686 = vadd.f32 %v1685, 1.0
    %v1687 = vrcp.pop %v1686
    %v1688 = vmul.f32 %v1686, %v1687
    %v1689 = vsub.f32 1.0, %v1688
    %v1690 = vmul.f32 %v1687, %v1689
    %v1691 = vadd.f32 %v1687, %v1690
    %vm1692 = vweird.f32 %v1686
    %vm1693 = vweird.f32 %v1687
    %vm1694 = vmor %vm1692, %vm1693
    %v1695 = vsel %vm1694, %v1687, %v1691
    %v1696 = vand.u32 2147483647, %v1686
    %vm1697 = vcmp.eq.f32.partialorder %v1696, 8.507059e+37
    %v1698 = vand.u32 %v1686, 2147483648
    %v1699 = vor.u32 1.1754944e-38, %v1698
    %v1700 = vsel %vm1697, %v1699, %v1695
    %v1701 = vmul.f32 %v1676, %v1700
    %v1702 = vmin.f32 %v1701, 1.0
    %v1703 = vmax.f32 %v1702, -1.0
    %v1704 = vmul.f32 %v1501, %v1501
    %v1705 = vmin.f32 16.0, %v1704
    %v1706 = vmul.f32 %v1705, 2.1237322e-06
    %v1707 = vadd.f32 %v1706, 0.00028619796
    %v1708 = vmul.f32 %v1705, %v1707
    %v1709 = vadd.f32 %v1708, 0.0036580483
    %v1710 = vmul.f32 %v1705, %v1709
    %v1711 = vadd.f32 %v1710, 0.05243302
    %v1712 = vmul.f32 %v1705, %v1711
    %v1713 = vadd.f32 %v1712, 0.18741608
    %v1714 = vmul.f32 %v1705, %v1713
    %v1715 = vadd.f32 %v1714, 1.1283791
    %v1716 = vmul.f32 %v1501, %v1715
    %v1717 = vmul.f32 %v1705, 3.8918573e-05
    %v1718 = vadd.f32 %v1717, 0.001143296
    %v1719 = vmul.f32 %v1705, %v1718
    %v1720 = vadd.f32 %v1719, 0.014752088
    %v1721 = vmul.f32 %v1705, %v1720
    %v1722 = vadd.f32 %v1721, 0.112945676
    %v1723 = vmul.f32 %v1705, %v1722
    %v1724 = vadd.f32 %v1723, 0.4994258
    %v1725 = vmul.f32 %v1705, %v1724
    %v1726 = vadd.f32 %v1725, 1.0
    %v1727 = vrcp.pop %v1726
    %v1728 = vmul.f32 %v1726, %v1727
    %v1729 = vsub.f32 1.0, %v1728
    %v1730 = vmul.f32 %v1727, %v1729
    %v1731 = vadd.f32 %v1727, %v1730
    %vm1732 = vweird.f32 %v1726
    %vm1733 = vweird.f32 %v1727
    %vm1734 = vmor %vm1732, %vm1733
    %v1735 = vsel %vm1734, %v1727, %v1731
    %v1736 = vand.u32 2147483647, %v1726
    %vm1737 = vcmp.eq.f32.partialorder %v1736, 8.507059e+37
    %v1738 = vand.u32 %v1726, 2147483648
    %v1739 = vor.u32 1.1754944e-38, %v1738
    %v1740 = vsel %vm1737, %v1739, %v1735
    %v1741 = vmul.f32 %v1716, %v1740
    %v1742 = vmin.f32 %v1741, 1.0
    %v1743 = vmax.f32 %v1742, -1.0
    %v1744 = vmul.f32 %v1502, %v1502
    %v1745 = vmin.f32 16.0, %v1744
    %v1746 = vmul.f32 %v1745, 2.1237322e-06
    %v1747 = vadd.f32 %v1746, 0.00028619796
    %v1748 = vmul.f32 %v1745, %v1747
    %v1749 = vadd.f32 %v1748, 0.0036580483
    %v1750 = vmul.f32 %v1745, %v1749
    %v1751 = vadd.f32 %v1750, 0.05243302
    %v1752 = vmul.f32 %v1745, %v1751
    %v1753 = vadd.f32 %v1752, 0.18741608
    %v1754 = vmul.f32 %v1745, %v1753
    %v1755 = vadd.f32 %v1754, 1.1283791
    %v1756 = vmul.f32 %v1502, %v1755
    %v1757 = vmul.f32 %v1745, 3.8918573e-05
    %v1758 = vadd.f32 %v1757, 0.001143296
    %v1759 = vmul.f32 %v1745, %v1758
    %v1760 = vadd.f32 %v1759, 0.014752088
    %v1761 = vmul.f32 %v1745, %v1760
    %v1762 = vadd.f32 %v1761, 0.112945676
    %v1763 = vmul.f32 %v1745, %v1762
    %v1764 = vadd.f32 %v1763, 0.4994258
    %v1765 = vmul.f32 %v1745, %v1764
    %v1766 = vadd.f32 %v1765, 1.0
    %v1767 = vrcp.pop %v1766
    %v1768 = vmul.f32 %v1766, %v1767
    %v1769 = vsub.f32 1.0, %v1768
    %v1770 = vmul.f32 %v1767, %v1769
    %v1771 = vadd.f32 %v1767, %v1770
    %vm1772 = vweird.f32 %v1766
    %vm1773 = vweird.f32 %v1767
    %vm1774 = vmor %vm1772, %vm1773
    %v1775 = vsel %vm1774, %v1767, %v1771
    %v1776 = vand.u32 2147483647, %v1766
    %vm1777 = vcmp.eq.f32.partialorder %v1776, 8.507059e+37
    %v1778 = vand.u32 %v1766, 2147483648
    %v1779 = vor.u32 1.1754944e-38, %v1778
    %v1780 = vsel %vm1777, %v1779, %v1775
    %v1781 = vmul.f32 %v1756, %v1780
    %v1782 = vmin.f32 %v1781, 1.0
    %v1783 = vmax.f32 %v1782, -1.0
    %v1784 = vmul.f32 %v1503, %v1503
    %v1785 = vmin.f32 16.0, %v1784
    %v1786 = vmul.f32 %v1785, 2.1237322e-06
    %v1787 = vadd.f32 %v1786, 0.00028619796
    %v1788 = vmul.f32 %v1785, %v1787
    %v1789 = vadd.f32 %v1788, 0.0036580483
    %v1790 = vmul.f32 %v1785, %v1789
    %v1791 = vadd.f32 %v1790, 0.05243302
    %v1792 = vmul.f32 %v1785, %v1791
    %v1793 = vadd.f32 %v1792, 0.18741608
    %v1794 = vmul.f32 %v1785, %v1793
    %v1795 = vadd.f32 %v1794, 1.1283791
    %v1796 = vmul.f32 %v1503, %v1795
    %v1797 = vmul.f32 %v1785, 3.8918573e-05
    %v1798 = vadd.f32 %v1797, 0.001143296
    %v1799 = vmul.f32 %v1785, %v1798
    %v1800 = vadd.f32 %v1799, 0.014752088
    %v1801 = vmul.f32 %v1785, %v1800
    %v1802 = vadd.f32 %v1801, 0.112945676
    %v1803 = vmul.f32 %v1785, %v1802
    %v1804 = vadd.f32 %v1803, 0.4994258
    %v1805 = vmul.f32 %v1785, %v1804
    %v1806 = vadd.f32 %v1805, 1.0
    %v1807 = vrcp.pop %v1806
    %v1808 = vmul.f32 %v1806, %v1807
    %v1809 = vsub.f32 1.0, %v1808
    %v1810 = vmul.f32 %v1807, %v1809
    %v1811 = vadd.f32 %v1807, %v1810
    %vm1812 = vweird.f32 %v1806
    %vm1813 = vweird.f32 %v1807
    %vm1814 = vmor %vm1812, %vm1813
    %v1815 = vsel %vm1814, %v1807, %v1811
    %v1816 = vand.u32 2147483647, %v1806
    %vm1817 = vcmp.eq.f32.partialorder %v1816, 8.507059e+37
    %v1818 = vand.u32 %v1806, 2147483648
    %v1819 = vor.u32 1.1754944e-38, %v1818
    %v1820 = vsel %vm1817, %v1819, %v1815
    %v1821 = vmul.f32 %v1796, %v1820
    %v1822 = vmin.f32 %v1821, 1.0
    %v1823 = vmax.f32 %v1822, -1.0
    %v1824 = vadd.f32 %v1543, 1.0
    %v1825 = vadd.f32 %v1583, 1.0
    %v1826 = vadd.f32 %v1623, 1.0
    %v1827 = vadd.f32 %v1663, 1.0
    %v1828 = vadd.f32 %v1703, 1.0
    %v1829 = vadd.f32 %v1743, 1.0
    %v1830 = vadd.f32 %v1783, 1.0
    %v1831 = vadd.f32 %v1823, 1.0
    %v1832 = vmul.f32 %v1488, %v1824
    %v1833 = vmul.f32 %v1489, %v1825
    %v1834 = vmul.f32 %v1490, %v1826
    %v1835 = vmul.f32 %v1491, %v1827
    %v1836 = vmul.f32 %v1492, %v1828
    %v1837 = vmul.f32 %v1493, %v1829
    %v1838 = vmul.f32 %v1494, %v1830
    %v1839 = vmul.f32 %v1495, %v1831
    %v1840 = vpack.c.bf16 %v1834, %v1832
    %v1841 = vpack.c.bf16 %v1835, %v1833
    %v1842 = vpack.c.bf16 %v1838, %v1836
    %v1843 = vpack.c.bf16 %v1839, %v1837
    %v1844 = vld [vmem:[#allocation15] sm:$0xf]
    %v1845 = vld [vmem:[#allocation15 + $0x4] sm:$0xf]
    %v1846 = vld [vmem:[#allocation15 + $0x8] sm:$0xf]
    %v1847 = vld [vmem:[#allocation15 + $0xc] sm:$0xf]
    %v1848 = vld [vmem:[#allocation15 + $0x10] sm:$0xf]
    %v1849 = vld [vmem:[#allocation15 + $0x14] sm:$0xf]
    %v1850 = vld [vmem:[#allocation15 + $0x18] sm:$0xf]
    %v1851 = vld [vmem:[#allocation15 + $0x1c] sm:$0xf]
    %v1852 = vld [vmem:[#allocation15 + $0x20] sm:$0xf]
    %v1853 = vld [vmem:[#allocation15 + $0x24] sm:$0xf]
    %v1854 = vld [vmem:[#allocation15 + $0x28] sm:$0xf]
    %v1855 = vld [vmem:[#allocation15 + $0x2c] sm:$0xf]
    %v1856 = vld [vmem:[#allocation15 + $0x30] sm:$0xf]
    %v1857 = vld [vmem:[#allocation15 + $0x34] sm:$0xf]
    %v1858 = vld [vmem:[#allocation15 + $0x38] sm:$0xf]
    %v1859 = vld [vmem:[#allocation15 + $0x3c] sm:$0xf]
    %v1860 = vld [vmem:[#allocation15 + $0x40] sm:$0xf]
    %v1861 = vld [vmem:[#allocation15 + $0x44] sm:$0xf]
    %v1862 = vld [vmem:[#allocation15 + $0x48] sm:$0xf]
    %v1863 = vld [vmem:[#allocation15 + $0x4c] sm:$0xf]
    %v1864 = vld [vmem:[#allocation15 + $0x50] sm:$0xf]
    %v1865 = vld [vmem:[#allocation15 + $0x54] sm:$0xf]
    %v1866 = vld [vmem:[#allocation15 + $0x58] sm:$0xf]
    %v1867 = vld [vmem:[#allocation15 + $0x5c] sm:$0xf]
    %v1868 = vld [vmem:[#allocation15 + $0x60] sm:$0xf]
    %v1869 = vld [vmem:[#allocation15 + $0x64] sm:$0xf]
    %v1870 = vld [vmem:[#allocation15 + $0x68] sm:$0xf]
    %v1871 = vld [vmem:[#allocation15 + $0x6c] sm:$0xf]
    %v1872 = vld [vmem:[#allocation15 + $0x70] sm:$0xf]
    %v1873 = vld [vmem:[#allocation15 + $0x74] sm:$0xf]
    %v1874 = vld [vmem:[#allocation15 + $0x78] sm:$0xf]
    %v1875 = vld [vmem:[#allocation15 + $0x7c] sm:$0xf]
    %v1876 = vld [vmem:[%s12] sm:$0x1]
    %v1878 = vperm.slane %v1876, 0
    %v1912 = vunpack.c.l.b16 %v1844
    %v1913 = vunpack.c.l.b16 %v1845
    %v1914 = vunpack.c.l.b16 %v1846
    %v1915 = vunpack.c.l.b16 %v1847
    %v1916 = vunpack.c.l.b16 %v1848
    %v1917 = vunpack.c.l.b16 %v1849
    %v1918 = vunpack.c.l.b16 %v1850
    %v1919 = vunpack.c.l.b16 %v1851
    %v1920 = vunpack.c.l.b16 %v1852
    %v1921 = vunpack.c.l.b16 %v1853
    %v1922 = vunpack.c.l.b16 %v1854
    %v1923 = vunpack.c.l.b16 %v1855
    %v1924 = vunpack.c.l.b16 %v1856
    %v1925 = vunpack.c.l.b16 %v1857
    %v1926 = vunpack.c.l.b16 %v1858
    %v1927 = vunpack.c.l.b16 %v1859
    %v1928 = vunpack.c.l.b16 %v1860
    %v1929 = vunpack.c.l.b16 %v1861
    %v1930 = vunpack.c.l.b16 %v1862
    %v1931 = vunpack.c.l.b16 %v1863
    %v1932 = vunpack.c.l.b16 %v1864
    %v1933 = vunpack.c.l.b16 %v1865
    %v1934 = vunpack.c.l.b16 %v1866
    %v1935 = vunpack.c.l.b16 %v1867
    %v1936 = vunpack.c.l.b16 %v1868
    %v1937 = vunpack.c.l.b16 %v1869
    %v1938 = vunpack.c.l.b16 %v1870
    %v1939 = vunpack.c.l.b16 %v1871
    %v1940 = vunpack.c.l.b16 %v1872
    %v1941 = vunpack.c.l.b16 %v1873
    %v1942 = vunpack.c.l.b16 %v1874
    %v1943 = vunpack.c.l.b16 %v1875
    %v1944 = vpack.c.b16 %v1913, %v1912
    %v1945 = vpack.c.b16 %v1915, %v1914
    %v1946 = vpack.c.b16 %v1917, %v1916
    %v1947 = vpack.c.b16 %v1919, %v1918
    %v1948 = vpack.c.b16 %v1921, %v1920
    %v1949 = vpack.c.b16 %v1923, %v1922
    %v1950 = vpack.c.b16 %v1925, %v1924
    %v1951 = vpack.c.b16 %v1927, %v1926
    %v1952 = vpack.c.b16 %v1929, %v1928
    %v1953 = vpack.c.b16 %v1931, %v1930
    %v1954 = vpack.c.b16 %v1933, %v1932
    %v1955 = vpack.c.b16 %v1935, %v1934
    %v1956 = vpack.c.b16 %v1937, %v1936
    %v1957 = vpack.c.b16 %v1939, %v1938
    %v1958 = vpack.c.b16 %v1941, %v1940
    %v1959 = vpack.c.b16 %v1943, %v1942
    %1976 = vmatpush.bf16.msra.mxu0 %v1951
    %1977 = vmatpush.bf16.msra.mxu0 %v1950
    %1978 = vmatpush.bf16.msra.mxu0 %v1949
    %1979 = vmatpush.bf16.msra.mxu0 %v1948
    %1980 = vmatpush.bf16.msra.mxu0 %v1947
    %1981 = vmatpush.bf16.msra.mxu0 %v1946
    %1982 = vmatpush.bf16.msra.mxu0 %v1945
    %1983 = vmatpush.bf16.msra.mxu0 %v1944
    %1984 = vmatmul.bf16.gmra.mxu0 %v1840
    %v1985 = vpop.f32.mrf.mxu0
    %v1986 = vadd.f32 %v1878, %v1985
    %v1987 = vpop.f32.mrf.mxu0
    %v1988 = vadd.f32 %v1878, %v1987
    %1989 = vmatmul.bf16.gmra.mxu0 %v1842
    %v1990 = vpop.f32.mrf.mxu0
    %v1991 = vadd.f32 %v1878, %v1990
    %v1992 = vpop.f32.mrf.mxu0
    %v1993 = vadd.f32 %v1878, %v1992
    %1994 = vdwg.mxu0
    %1995 = vmatpush.bf16.msra.mxu0 %v1959
    %1996 = vmatpush.bf16.msra.mxu0 %v1958
    %1997 = vmatpush.bf16.msra.mxu0 %v1957
    %1998 = vmatpush.bf16.msra.mxu0 %v1956
    %1999 = vmatpush.bf16.msra.mxu0 %v1955
    %2000 = vmatpush.bf16.msra.mxu0 %v1954
    %2001 = vmatpush.bf16.msra.mxu0 %v1953
    %2002 = vmatpush.bf16.msra.mxu0 %v1952
    %2003 = vmatmul.bf16.gmra.mxu0 %v1841
    %v2004 = vpop.f32.mrf.mxu0
    %v2005 = vadd.f32 %v1986, %v2004
    %v2006 = vpop.f32.mrf.mxu0
    %v2007 = vadd.f32 %v1988, %v2006
    %2008 = vmatmul.bf16.gmra.mxu0 %v1843
    %v2009 = vpop.f32.mrf.mxu0
    %v2010 = vadd.f32 %v1991, %v2009
    %v2011 = vpop.f32.mrf.mxu0
    %v2012 = vadd.f32 %v1993, %v2011
    %2013 = vdwg.mxu0
    %v2014 = vadd.f32 %v2005, %v1246
    %v2015 = vadd.f32 %v2007, %v1247
    %v2016 = vadd.f32 %v2010, %v1248
    %v2017 = vadd.f32 %v2012, %v1249
    %2018 = vst [vmem:[#allocation17] sm:$0xff] %v2014
    %2019 = vst [vmem:[#allocation17 + $0x8] sm:$0xff] %v2015
    %2020 = vst [vmem:[#allocation17 + $0x10] sm:$0xff] %v2016
    %2021 = vst [vmem:[#allocation17 + $0x18] sm:$0xff] %v2017
    // Predicated region
    $region86: #{tpu_custom_call.1} parent=1 // pred_check
      _
    $region87: #{tpu_custom_call.1} parent=1 // pred_check_branch
      %2023 = sbr.rel (0) target = $region89
    $region88: #{tpu_custom_call.1} parent=1 // pred_region
      %2025 = vsyncadd [#allocation5], 0
      %s2026 = sshll.u32 [#allocation17], 4
      %s2027 = int_to_ptr.vmem [resolvable:$true] %s2026
      %s2028 = sshll.u32 %s13, 4
      %s2029 = int_to_ptr.hbm [resolvable:$true] %s2028
      %2034 = dma.vmem_to_hbm [thread:$0]  %s2027, 512, %s2029, [#allocation5], 128, 128, 8
    $region89: #{tpu_custom_call.1} parent=1 // pred_fallthru
      _
    // Predicated region
    $region90: #{tpu_custom_call.1} parent=1 // pred_check
      _
    $region91: #{tpu_custom_call.1} parent=1 // pred_check_branch
      %2036 = sbr.rel (0) target = $region93
    $region92: #{tpu_custom_call.1} parent=1 // pred_region
      %2038 = dma.done [#allocation5], 512
    $region93: #{tpu_custom_call.1} parent=1 // pred_fallthru
      _
    %2039 = vsyncpa [#allocation4], 1
    %2040 = vsyncpa [#allocation7], 1
    %2041 = vsyncpa [#allocation10], 1
    %2042 = vsyncpa [#allocation13], 1
    %2043 = vsyncpa [#allocation16], 1
    %2044 = vsyncpa [#allocation5], 1

// kernel: tpu_custom_call.1
$region0: #{tpu_custom_call.1}
  #allocation0 [shape = 'u32[]', space=smem, size = 0x4, offset = 0x4, fixed_abs, tag = 'smem constant byte address 0x4 - core index']
  #allocation1 [shape = 'u32[72,128]{1,0:T(1,128)}', space=vmem, size = 0x9000, scoped, tag = 'internal scratch']
  #allocation2 [shape = 'bf16[32,128]{1,0:T(8,128)(2,1)}', space=vmem, size = 0x2000, scoped, tag = 'scratch operand']
  %s0 = inlined_call_operand.hbm [shape: f32[2,16,128], index: 0, kind: input, shape index: {}]
  %s1 = inlined_call_operand.hbm [shape: f32[1,128], index: 1, kind: input, shape index: {}]
  %s2 = inlined_call_operand.hbm [shape: f32[1,128], index: 2, kind: input, shape index: {}]
  %s3 = inlined_call_operand.hbm [shape: bf16[128,384], index: 3, kind: input, shape index: {}]
  %s4 = inlined_call_operand.vmem [shape: f32[1,384], index: 4, kind: input, shape index: {}]
  %s5 = inlined_call_operand.hbm [shape: bf16[128,128], index: 5, kind: input, shape index: {}]
  %s6 = inlined_call_operand.hbm [shape: f32[1,128], index: 6, kind: input, shape index: {}]
  %s7 = inlined_call_operand.vmem [shape: f32[1,128], index: 7, kind: input, shape index: {}]
  %s8 = inlined_call_operand.vmem [shape: f32[1,128], index: 8, kind: input, shape index: {}]
  %s9 = inlined_call_operand.hbm [shape: bf16[128,256], index: 9, kind: input, shape index: {}]
  %s10 = inlined_call_operand.vmem [shape: f32[1,256], index: 10, kind: input, shape index: {}]
  %s11 = inlined_call_operand.hbm [shape: bf16[256,128], index: 11, kind: input, shape index: {}]
  %s12 = inlined_call_operand.vmem [shape: f32[1,128], index: 12, kind: input, shape index: {}]
  %s13 = inlined_call_operand.hbm [shape: f32[2,16,128], index: 13, kind: output, shape index: {}]
  %s14 = sld [smem:[#allocation0]]
  $region94: #{tpu_custom_call.1} parent=0
    _
  %s16 = ssub.s32 1, %s14
  %s17 = scalar_select 0, %s16, %s14
  $region1: #{tpu_custom_call.1} parent=0
    #allocation3 [shape = 'u8[16384]{0}', space=vmem, size = 0x4000, scoped, tag = 'input window, operand 0, single buffered']
    #allocation4 [shape = 's32[1]{0}', space=sflag, size = 0x4, scoped, tag = 'scoped memory for tpu_custom_call.1']
    #allocation5 [shape = 's32[1]{0}', space=sflag, size = 0x4, scoped, tag = 'scoped memory for tpu_custom_call.1']
    #allocation6 [shape = 'u8[512]{0}', space=vmem, size = 0x400, scoped, tag = 'input window, operand 1, single buffered']
    #allocation7 [shape = 's32[1]{0}', space=sflag, size = 0x4, scoped, tag = 'scoped memory for tpu_custom_call.1']
    #allocation8 [shape = 'u8[512]{0}', space=vmem, size = 0x400, scoped, tag = 'input window, operand 2, single buffered']
    #allocation9 [shape = 'u8[98304]{0}', space=vmem, size = 0x18000, scoped, tag = 'input window, operand 3, single buffered']
    #allocation10 [shape = 's32[1]{0}', space=sflag, size = 0x4, scoped, tag = 'scoped memory for tpu_custom_call.1']
    #allocation11 [shape = 'u8[32768]{0}', space=vmem, size = 0x8000, scoped, tag = 'input window, operand 5, single buffered']
    #allocation12 [shape = 'u8[512]{0}', space=vmem, size = 0x400, scoped, tag = 'input window, operand 6, single buffered']
    #allocation13 [shape = 's32[1]{0}', space=sflag, size = 0x4, scoped, tag = 'scoped memory for tpu_custom_call.1']
    #allocation14 [shape = 'u8[65536]{0}', space=vmem, size = 0x10000, scoped, tag = 'input window, operand 9, single buffered']
    #allocation15 [shape = 'u8[65536]{0}', space=vmem, size = 0x10000, scoped, tag = 'input window, operand 11, single buffered']
    #allocation16 [shape = 's32[1]{0}', space=sflag, size = 0x4, scoped, tag = 'scoped memory for tpu_custom_call.1']
    #allocation17 [shape = 'u8[16384]{0}', space=vmem, size = 0x4000, scoped, tag = 'output window, operand 0, single buffered']
    %18 = vsyncpa [#allocation4], 0
    %19 = vsyncpa [#allocation7], 0
    %20 = vsyncpa [#allocation10], 0
    %21 = vsyncpa [#allocation13], 0
    %22 = vsyncpa [#allocation16], 0
    %23 = vsyncpa [#allocation5], 0
    // Predicated region
    $region2: #{tpu_custom_call.1} parent=1 // pred_check
      _
    $region3: #{tpu_custom_call.1} parent=1 // pred_check_branch
      %25 = sbr.rel (0) target = $region5
    $region4: #{tpu_custom_call.1} parent=1 // pred_region
      %27 = vsyncadd [#allocation4], 0
      %s28 = sshll.u32 %s0, 4
      %s29 = int_to_ptr.hbm [resolvable:$true] %s28
      %s30 = sshll.u32 [#allocation3], 4
      %s31 = int_to_ptr.vmem [resolvable:$true] %s30
      %36 = dma.hbm_to_vmem [thread:$0]  %s29, 512, %s31, [#allocation4], 128, 128, 8
    $region5: #{tpu_custom_call.1} parent=1 // pred_fallthru
      _
    // Predicated region
    $region6: #{tpu_custom_call.1} parent=1 // pred_check
      _
    $region7: #{tpu_custom_call.1} parent=1 // pred_check_branch
      %38 = sbr.rel (0) target = $region9
    $region8: #{tpu_custom_call.1} parent=1 // pred_region
      %40 = vsyncadd [#allocation7], 0
      %s42 = sshll.u32 %s1, 4
      %s43 = int_to_ptr.hbm [resolvable:$true] %s42
      %s44 = sshll.u32 [#allocation6], 4
      %s45 = int_to_ptr.vmem [resolvable:$true] %s44
      %47 = dma.hbm_to_vmem [thread:$0]  %s43, 16, %s45, [#allocation7]
    $region9: #{tpu_custom_call.1} parent=1 // pred_fallthru
      _
    // Predicated region
    $region10: #{tpu_custom_call.1} parent=1 // pred_check
      _
    $region11: #{tpu_custom_call.1} parent=1 // pred_check_branch
      %49 = sbr.rel (0) target = $region13
    $region12: #{tpu_custom_call.1} parent=1 // pred_region
      %51 = vsyncadd [#allocation7], 0
      %s53 = sshll.u32 %s2, 4
      %s54 = int_to_ptr.hbm [resolvable:$true] %s53
      %s55 = sshll.u32 [#allocation8], 4
      %s56 = int_to_ptr.vmem [resolvable:$true] %s55
      %58 = dma.hbm_to_vmem [thread:$0]  %s54, 16, %s56, [#allocation7]
    $region13: #{tpu_custom_call.1} parent=1 // pred_fallthru
      _
    // Predicated region
    $region14: #{tpu_custom_call.1} parent=1 // pred_check
      _
    $region15: #{tpu_custom_call.1} parent=1 // pred_check_branch
      %60 = sbr.rel (0) target = $region17
    $region16: #{tpu_custom_call.1} parent=1 // pred_region
      %62 = vsyncadd [#allocation10], 0
      %s63 = sshll.u32 %s3, 4
      %s64 = int_to_ptr.hbm [resolvable:$true] %s63
      %s65 = sshll.u32 [#allocation9], 4
      %s66 = int_to_ptr.vmem [resolvable:$true] %s65
      %71 = dma.hbm_to_vmem [thread:$0]  %s64, 3072, %s66, [#allocation10], 192, 192, 12
    $region17: #{tpu_custom_call.1} parent=1 // pred_fallthru
      _
    // Predicated region
    $region18: #{tpu_custom_call.1} parent=1 // pred_check
      _
    $region19: #{tpu_custom_call.1} parent=1 // pred_check_branch
      %73 = sbr.rel (0) target = $region21
    $region20: #{tpu_custom_call.1} parent=1 // pred_region
      _
    $region21: #{tpu_custom_call.1} parent=1 // pred_fallthru
      _
    // Predicated region
    $region22: #{tpu_custom_call.1} parent=1 // pred_check
      _
    $region23: #{tpu_custom_call.1} parent=1 // pred_check_branch
      %75 = sbr.rel (0) target = $region25
    $region24: #{tpu_custom_call.1} parent=1 // pred_region
      %77 = vsyncadd [#allocation10], 0
      %s78 = sshll.u32 %s5, 4
      %s79 = int_to_ptr.hbm [resolvable:$true] %s78
      %s80 = sshll.u32 [#allocation11], 4
      %s81 = int_to_ptr.vmem [resolvable:$true] %s80
      %86 = dma.hbm_to_vmem [thread:$0]  %s79, 1024, %s81, [#allocation10], 64, 64, 4
    $region25: #{tpu_custom_call.1} parent=1 // pred_fallthru
      _
    // Predicated region
    $region26: #{tpu_custom_call.1} parent=1 // pred_check
      _
    $region27: #{tpu_custom_call.1} parent=1 // pred_check_branch
      %88 = sbr.rel (0) target = $region29
    $region28: #{tpu_custom_call.1} parent=1 // pred_region
      %90 = vsyncadd [#allocation13], 0
      %s92 = sshll.u32 %s6, 4
      %s93 = int_to_ptr.hbm [resolvable:$true] %s92
      %s94 = sshll.u32 [#allocation12], 4
      %s95 = int_to_ptr.vmem [resolvable:$true] %s94
      %97 = dma.hbm_to_vmem [thread:$0]  %s93, 16, %s95, [#allocation13]
    $region29: #{tpu_custom_call.1} parent=1 // pred_fallthru
      _
    // Predicated region
    $region30: #{tpu_custom_call.1} parent=1 // pred_check
      _
    $region31: #{tpu_custom_call.1} parent=1 // pred_check_branch
      %99 = sbr.rel (0) target = $region33
    $region32: #{tpu_custom_call.1} parent=1 // pred_region
      _
    $region33: #{tpu_custom_call.1} parent=1 // pred_fallthru
      _
    // Predicated region
    $region34: #{tpu_custom_call.1} parent=1 // pred_check
      _
    $region35: #{tpu_custom_call.1} parent=1 // pred_check_branch
      %101 = sbr.rel (0) target = $region37
    $region36: #{tpu_custom_call.1} parent=1 // pred_region
      _
    $region37: #{tpu_custom_call.1} parent=1 // pred_fallthru
      _
    // Predicated region
    $region38: #{tpu_custom_call.1} parent=1 // pred_check
      _
    $region39: #{tpu_custom_call.1} parent=1 // pred_check_branch
      %103 = sbr.rel (0) target = $region41
    $region40: #{tpu_custom_call.1} parent=1 // pred_region
      %105 = vsyncadd [#allocation13], 0
      %s106 = sshll.u32 %s9, 4
      %s107 = int_to_ptr.hbm [resolvable:$true] %s106
      %s108 = sshll.u32 [#allocation14], 4
      %s109 = int_to_ptr.vmem [resolvable:$true] %s108
      %114 = dma.hbm_to_vmem [thread:$0]  %s107, 2048, %s109, [#allocation13], 128, 128, 8
    $region41: #{tpu_custom_call.1} parent=1 // pred_fallthru
      _
    // Predicated region
    $region42: #{tpu_custom_call.1} parent=1 // pred_check
      _
    $region43: #{tpu_custom_call.1} parent=1 // pred_check_branch
      %116 = sbr.rel (0) target = $region45
    $region44: #{tpu_custom_call.1} parent=1 // pred_region
      _
    $region45: #{tpu_custom_call.1} parent=1 // pred_fallthru
      _
    // Predicated region
    $region46: #{tpu_custom_call.1} parent=1 // pred_check
      _
    $region47: #{tpu_custom_call.1} parent=1 // pred_check_branch
      %118 = sbr.rel (0) target = $region49
    $region48: #{tpu_custom_call.1} parent=1 // pred_region
      %120 = vsyncadd [#allocation16], 0
      %s121 = sshll.u32 %s11, 4
      %s122 = int_to_ptr.hbm [resolvable:$true] %s121
      %s123 = sshll.u32 [#allocation15], 4
      %s124 = int_to_ptr.vmem [resolvable:$true] %s123
      %129 = dma.hbm_to_vmem [thread:$0]  %s122, 2048, %s124, [#allocation16], 64, 64, 4
    $region49: #{tpu_custom_call.1} parent=1 // pred_fallthru
      _
    // Predicated region
    $region50: #{tpu_custom_call.1} parent=1 // pred_check
      _
    $region51: #{tpu_custom_call.1} parent=1 // pred_check_branch
      %131 = sbr.rel (0) target = $region53
    $region52: #{tpu_custom_call.1} parent=1 // pred_region
      _
    $region53: #{tpu_custom_call.1} parent=1 // pred_fallthru
      _
    // Predicated region
    $region54: #{tpu_custom_call.1} parent=1 // pred_check
      _
    $region55: #{tpu_custom_call.1} parent=1 // pred_check_branch
      %133 = sbr.rel (0) target = $region57
    $region56: #{tpu_custom_call.1} parent=1 // pred_region
      %135 = dma.done [#allocation4], 512
    $region57: #{tpu_custom_call.1} parent=1 // pred_fallthru
      _
    // Predicated region
    $region58: #{tpu_custom_call.1} parent=1 // pred_check
      _
    $region59: #{tpu_custom_call.1} parent=1 // pred_check_branch
      %137 = sbr.rel (0) target = $region61
    $region60: #{tpu_custom_call.1} parent=1 // pred_region
      %139 = dma.done [#allocation7], 16
    $region61: #{tpu_custom_call.1} parent=1 // pred_fallthru
      _
    // Predicated region
    $region62: #{tpu_custom_call.1} parent=1 // pred_check
      _
    $region63: #{tpu_custom_call.1} parent=1 // pred_check_branch
      %141 = sbr.rel (0) target = $region65
    $region64: #{tpu_custom_call.1} parent=1 // pred_region
      %143 = dma.done [#allocation7], 16
    $region65: #{tpu_custom_call.1} parent=1 // pred_fallthru
      _
    // Predicated region
    $region66: #{tpu_custom_call.1} parent=1 // pred_check
      _
    $region67: #{tpu_custom_call.1} parent=1 // pred_check_branch
      %145 = sbr.rel (0) target = $region69
    $region68: #{tpu_custom_call.1} parent=1 // pred_region
      %147 = dma.done [#allocation10], 3072
    $region69: #{tpu_custom_call.1} parent=1 // pred_fallthru
      _
    // Predicated region
    $region70: #{tpu_custom_call.1} parent=1 // pred_check
      _
    $region71: #{tpu_custom_call.1} parent=1 // pred_check_branch
      %149 = sbr.rel (0) target = $region73
    $region72: #{tpu_custom_call.1} parent=1 // pred_region
      %151 = dma.done [#allocation10], 1024
    $region73: #{tpu_custom_call.1} parent=1 // pred_fallthru
      _
    // Predicated region
    $region74: #{tpu_custom_call.1} parent=1 // pred_check
      _
    $region75: #{tpu_custom_call.1} parent=1 // pred_check_branch
      %153 = sbr.rel (0) target = $region77
    $region76: #{tpu_custom_call.1} parent=1 // pred_region
      %155 = dma.done [#allocation13], 16
    $region77: #{tpu_custom_call.1} parent=1 // pred_fallthru
      _
    // Predicated region
    $region78: #{tpu_custom_call.1} parent=1 // pred_check
      _
    $region79: #{tpu_custom_call.1} parent=1 // pred_check_branch
      %157 = sbr.rel (0) target = $region81
    $region80: #{tpu_custom_call.1} parent=1 // pred_region
      %159 = dma.done [#allocation13], 2048
    $region81: #{tpu_custom_call.1} parent=1 // pred_fallthru
      _
    // Predicated region
    $region82: #{tpu_custom_call.1} parent=1 // pred_check
      _
    $region83: #{tpu_custom_call.1} parent=1 // pred_check_branch
      %161 = sbr.rel (0) target = $region85
    $region84: #{tpu_custom_call.1} parent=1 // pred_region
      %163 = dma.done [#allocation16], 2048
    $region85: #{tpu_custom_call.1} parent=1 // pred_fallthru
      _
    %v165 = vld [vmem:[#allocation3] sm:$0xff]
    %v166 = vld [vmem:[#allocation3 + $0x8] sm:$0xff]
    %v167 = vld [vmem:[#allocation3 + $0x10] sm:$0xff]
    %v168 = vld [vmem:[#allocation3 + $0x18] sm:$0xff]
    %v169 = vld [vmem:[#allocation6] sm:$0x1]
    %v170 = vld [vmem:[#allocation8] sm:$0x1]
    %171 = vadd.xlane.f32.xlu0 %v165
    %v172 = vpop.xlane.xlu0 %171
    %173 = vadd.xlane.f32.xlu0 %v166
    %v174 = vpop.xlane.xlu0 %173
    %175 = vadd.xlane.f32.xlu0 %v167
    %v176 = vpop.xlane.xlu0 %175
    %177 = vadd.xlane.f32.xlu0 %v168
    %v178 = vpop.xlane.xlu0 %177
    %v179 = vrcp.pop 128.0
    %v180 = vmul.f32 128.0, %v179
    %v181 = vsub.f32 1.0, %v180
    %v182 = vmul.f32 %v179, %v181
    %v183 = vadd.f32 %v179, %v182
    %vm184 = vweird.f32 %v179
    %v185 = vsel %vm184, %v179, %v183
    %v186 = vmul.f32 %v172, %v185
    %v187 = vmul.f32 %v174, %v185
    %v188 = vmul.f32 %v176, %v185
    %v189 = vmul.f32 %v178, %v185
    %v190 = vsub.f32 %v165, %v186
    %v191 = vsub.f32 %v166, %v187
    %v192 = vsub.f32 %v167, %v188
    %v193 = vsub.f32 %v168, %v189
    %v194 = vmul.f32 %v190, %v190
    %v195 = vmul.f32 %v191, %v191
    %v196 = vmul.f32 %v192, %v192
    %v197 = vmul.f32 %v193, %v193
    %198 = vadd.xlane.f32.xlu0 %v194
    %v199 = vpop.xlane.xlu0 %198
    %200 = vadd.xlane.f32.xlu0 %v195
    %v201 = vpop.xlane.xlu0 %200
    %202 = vadd.xlane.f32.xlu0 %v196
    %v203 = vpop.xlane.xlu0 %202
    %204 = vadd.xlane.f32.xlu0 %v197
    %v205 = vpop.xlane.xlu0 %204
    %v206 = vmul.f32 %v199, %v185
    %v207 = vmul.f32 %v201, %v185
    %v208 = vmul.f32 %v203, %v185
    %v209 = vmul.f32 %v205, %v185
    %v210 = vadd.f32 %v206, 1e-05
    %v211 = vadd.f32 %v207, 1e-05
    %v212 = vadd.f32 %v208, 1e-05
    %v213 = vadd.f32 %v209, 1e-05
    %v214 = vrsqrt.pop %v210
    %v215 = vmul.f32 %v214, %v210
    %v216 = vmul.f32 %v215, %v214
    %v217 = vmul.f32 0.5, %v216
    %v218 = vsub.f32 1.5, %v217
    %v219 = vmul.f32 %v214, %v218
    %vm220 = vweird.f32 %v210
    %vm221 = vweird.f32 %v214
    %vm222 = vmor %vm220, %vm221
    %v223 = vsel %vm222, %v214, %v219
    %v224 = vrsqrt.pop %v211
    %v225 = vmul.f32 %v224, %v211
    %v226 = vmul.f32 %v225, %v224
    %v227 = vmul.f32 0.5, %v226
    %v228 = vsub.f32 1.5, %v227
    %v229 = vmul.f32 %v224, %v228
    %vm230 = vweird.f32 %v211
    %vm231 = vweird.f32 %v224
    %vm232 = vmor %vm230, %vm231
    %v233 = vsel %vm232, %v224, %v229
    %v234 = vrsqrt.pop %v212
    %v235 = vmul.f32 %v234, %v212
    %v236 = vmul.f32 %v235, %v234
    %v237 = vmul.f32 0.5, %v236
    %v238 = vsub.f32 1.5, %v237
    %v239 = vmul.f32 %v234, %v238
    %vm240 = vweird.f32 %v212
    %vm241 = vweird.f32 %v234
    %vm242 = vmor %vm240, %vm241
    %v243 = vsel %vm242, %v234, %v239
    %v244 = vrsqrt.pop %v213
    %v245 = vmul.f32 %v244, %v213
    %v246 = vmul.f32 %v245, %v244
    %v247 = vmul.f32 0.5, %v246
    %v248 = vsub.f32 1.5, %v247
    %v249 = vmul.f32 %v244, %v248
    %vm250 = vweird.f32 %v213
    %vm251 = vweird.f32 %v244
    %vm252 = vmor %vm250, %vm251
    %v253 = vsel %vm252, %v244, %v249
    %v254 = vmul.f32 %v190, %v223
    %v255 = vmul.f32 %v191, %v233
    %v256 = vmul.f32 %v192, %v243
    %v257 = vmul.f32 %v193, %v253
    %v259 = vperm.slane %v169, 0
    %v261 = vmul.f32 %v254, %v259
    %v262 = vmul.f32 %v255, %v259
    %v263 = vmul.f32 %v256, %v259
    %v264 = vmul.f32 %v257, %v259
    %v266 = vperm.slane %v170, 0
    %v268 = vadd.f32 %v261, %v266
    %v269 = vadd.f32 %v262, %v266
    %v270 = vadd.f32 %v263, %v266
    %v271 = vadd.f32 %v264, %v266
    %v272 = vpack.c.bf16 %v269, %v268
    %v273 = vpack.c.bf16 %v271, %v270
    %v274 = vld [vmem:[#allocation9] sm:$0xff]
    %v275 = vld [vmem:[#allocation9 + $0x8] sm:$0xf]
    %v276 = vld [vmem:[#allocation9 + $0xc] sm:$0xff]
    %v277 = vld [vmem:[#allocation9 + $0x14] sm:$0xf]
    %v278 = vld [vmem:[#allocation9 + $0x18] sm:$0xff]
    %v279 = vld [vmem:[#allocation9 + $0x20] sm:$0xf]
    %v280 = vld [vmem:[#allocation9 + $0x24] sm:$0xff]
    %v281 = vld [vmem:[#allocation9 + $0x2c] sm:$0xf]
    %v282 = vld [vmem:[#allocation9 + $0x30] sm:$0xff]
    %v283 = vld [vmem:[#allocation9 + $0x38] sm:$0xf]
    %v284 = vld [vmem:[#allocation9 + $0x3c] sm:$0xff]
    %v285 = vld [vmem:[#allocation9 + $0x44] sm:$0xf]
    %v286 = vld [vmem:[#allocation9 + $0x48] sm:$0xff]
    %v287 = vld [vmem:[#allocation9 + $0x50] sm:$0xf]
    %v288 = vld [vmem:[#allocation9 + $0x54] sm:$0xff]
    %v289 = vld [vmem:[#allocation9 + $0x5c] sm:$0xf]
    %v290 = vld [vmem:[#allocation9 + $0x60] sm:$0xff]
    %v291 = vld [vmem:[#allocation9 + $0x68] sm:$0xf]
    %v292 = vld [vmem:[#allocation9 + $0x6c] sm:$0xff]
    %v293 = vld [vmem:[#allocation9 + $0x74] sm:$0xf]
    %v294 = vld [vmem:[#allocation9 + $0x78] sm:$0xff]
    %v295 = vld [vmem:[#allocation9 + $0x80] sm:$0xf]
    %v296 = vld [vmem:[#allocation9 + $0x84] sm:$0xff]
    %v297 = vld [vmem:[#allocation9 + $0x8c] sm:$0xf]
    %v298 = vld [vmem:[#allocation9 + $0x90] sm:$0xff]
    %v299 = vld [vmem:[#allocation9 + $0x98] sm:$0xf]
    %v300 = vld [vmem:[#allocation9 + $0x9c] sm:$0xff]
    %v301 = vld [vmem:[#allocation9 + $0xa4] sm:$0xf]
    %v302 = vld [vmem:[#allocation9 + $0xa8] sm:$0xff]
    %v303 = vld [vmem:[#allocation9 + $0xb0] sm:$0xf]
    %v304 = vld [vmem:[#allocation9 + $0xb4] sm:$0xff]
    %v305 = vld [vmem:[#allocation9 + $0xbc] sm:$0xf]
    %v306 = vld [vmem:[%s4] sm:$0x7]
    %v308 = vperm.slane %v306, 0
    %v309 = vperm.slane %v306, 1
    %v310 = vperm.slane %v306, 2
    %v346 = vunpack.c.l.b16 %v274
    %v347 = vunpack.c.h.b16 %v274
    %v348 = vunpack.c.l.b16 %v275
    %v349 = vunpack.c.l.b16 %v276
    %v350 = vunpack.c.h.b16 %v276
    %v351 = vunpack.c.l.b16 %v277
    %v352 = vunpack.c.l.b16 %v278
    %v353 = vunpack.c.h.b16 %v278
    %v354 = vunpack.c.l.b16 %v279
    %v355 = vunpack.c.l.b16 %v280
    %v356 = vunpack.c.h.b16 %v280
    %v357 = vunpack.c.l.b16 %v281
    %v358 = vunpack.c.l.b16 %v282
    %v359 = vunpack.c.h.b16 %v282
    %v360 = vunpack.c.l.b16 %v283
    %v361 = vunpack.c.l.b16 %v284
    %v362 = vunpack.c.h.b16 %v284
    %v363 = vunpack.c.l.b16 %v285
    %v364 = vunpack.c.l.b16 %v286
    %v365 = vunpack.c.h.b16 %v286
    %v366 = vunpack.c.l.b16 %v287
    %v367 = vunpack.c.l.b16 %v288
    %v368 = vunpack.c.h.b16 %v288
    %v369 = vunpack.c.l.b16 %v289
    %v370 = vunpack.c.l.b16 %v290
    %v371 = vunpack.c.h.b16 %v290
    %v372 = vunpack.c.l.b16 %v291
    %v373 = vunpack.c.l.b16 %v292
    %v374 = vunpack.c.h.b16 %v292
    %v375 = vunpack.c.l.b16 %v293
    %v376 = vunpack.c.l.b16 %v294
    %v377 = vunpack.c.h.b16 %v294
    %v378 = vunpack.c.l.b16 %v295
    %v379 = vunpack.c.l.b16 %v296
    %v380 = vunpack.c.h.b16 %v296
    %v381 = vunpack.c.l.b16 %v297
    %v382 = vunpack.c.l.b16 %v298
    %v383 = vunpack.c.h.b16 %v298
    %v384 = vunpack.c.l.b16 %v299
    %v385 = vunpack.c.l.b16 %v300
    %v386 = vunpack.c.h.b16 %v300
    %v387 = vunpack.c.l.b16 %v301
    %v388 = vunpack.c.l.b16 %v302
    %v389 = vunpack.c.h.b16 %v302
    %v390 = vunpack.c.l.b16 %v303
    %v391 = vunpack.c.l.b16 %v304
    %v392 = vunpack.c.h.b16 %v304
    %v393 = vunpack.c.l.b16 %v305
    %v394 = vpack.c.b16 %v349, %v346
    %v395 = vpack.c.b16 %v350, %v347
    %v396 = vpack.c.b16 %v351, %v348
    %v397 = vpack.c.b16 %v355, %v352
    %v398 = vpack.c.b16 %v356, %v353
    %v399 = vpack.c.b16 %v357, %v354
    %v400 = vpack.c.b16 %v361, %v358
    %v401 = vpack.c.b16 %v362, %v359
    %v402 = vpack.c.b16 %v363, %v360
    %v403 = vpack.c.b16 %v367, %v364
    %v404 = vpack.c.b16 %v368, %v365
    %v405 = vpack.c.b16 %v369, %v366
    %v406 = vpack.c.b16 %v373, %v370
    %v407 = vpack.c.b16 %v374, %v371
    %v408 = vpack.c.b16 %v375, %v372
    %v409 = vpack.c.b16 %v379, %v376
    %v410 = vpack.c.b16 %v380, %v377
    %v411 = vpack.c.b16 %v381, %v378
    %v412 = vpack.c.b16 %v385, %v382
    %v413 = vpack.c.b16 %v386, %v383
    %v414 = vpack.c.b16 %v387, %v384
    %v415 = vpack.c.b16 %v391, %v388
    %v416 = vpack.c.b16 %v392, %v389
    %v417 = vpack.c.b16 %v393, %v390
    %442 = vmatpush.bf16.msra.mxu0 %v415
    %443 = vmatpush.bf16.msra.mxu0 %v412
    %444 = vmatpush.bf16.msra.mxu0 %v409
    %445 = vmatpush.bf16.msra.mxu0 %v406
    %446 = vmatpush.bf16.msra.mxu0 %v403
    %447 = vmatpush.bf16.msra.mxu0 %v400
    %448 = vmatpush.bf16.msra.mxu0 %v397
    %449 = vmatpush.bf16.msra.mxu0 %v394
    %450 = vmatmul.bf16.gmra.mxu0 %v272
    %v451 = vpop.f32.mrf.mxu0
    %v452 = vadd.f32 %v308, %v451
    %v453 = vpop.f32.mrf.mxu0
    %v454 = vadd.f32 %v308, %v453
    %455 = vmatmul.bf16.gmra.mxu0 %v273
    %v456 = vpop.f32.mrf.mxu0
    %v457 = vadd.f32 %v308, %v456
    %v458 = vpop.f32.mrf.mxu0
    %v459 = vadd.f32 %v308, %v458
    %460 = vdwg.mxu0
    %461 = vmatpush.bf16.msra.mxu0 %v416
    %462 = vmatpush.bf16.msra.mxu0 %v413
    %463 = vmatpush.bf16.msra.mxu0 %v410
    %464 = vmatpush.bf16.msra.mxu0 %v407
    %465 = vmatpush.bf16.msra.mxu0 %v404
    %466 = vmatpush.bf16.msra.mxu0 %v401
    %467 = vmatpush.bf16.msra.mxu0 %v398
    %468 = vmatpush.bf16.msra.mxu0 %v395
    %469 = vmatmul.bf16.gmra.mxu0 %v272
    %v470 = vpop.f32.mrf.mxu0
    %v471 = vadd.f32 %v309, %v470
    %v472 = vpop.f32.mrf.mxu0
    %v473 = vadd.f32 %v309, %v472
    %474 = vmatmul.bf16.gmra.mxu0 %v273
    %v475 = vpop.f32.mrf.mxu0
    %v476 = vadd.f32 %v309, %v475
    %v477 = vpop.f32.mrf.mxu0
    %v478 = vadd.f32 %v309, %v477
    %479 = vdwg.mxu0
    %480 = vmatpush.bf16.msra.mxu0 %v417
    %481 = vmatpush.bf16.msra.mxu0 %v414
    %482 = vmatpush.bf16.msra.mxu0 %v411
    %483 = vmatpush.bf16.msra.mxu0 %v408
    %484 = vmatpush.bf16.msra.mxu0 %v405
    %485 = vmatpush.bf16.msra.mxu0 %v402
    %486 = vmatpush.bf16.msra.mxu0 %v399
    %487 = vmatpush.bf16.msra.mxu0 %v396
    %488 = vmatmul.bf16.gmra.mxu0 %v272
    %v489 = vpop.f32.mrf.mxu0
    %v490 = vadd.f32 %v310, %v489
    %v491 = vpop.f32.mrf.mxu0
    %v492 = vadd.f32 %v310, %v491
    %493 = vmatmul.bf16.gmra.mxu0 %v273
    %v494 = vpop.f32.mrf.mxu0
    %v495 = vadd.f32 %v310, %v494
    %v496 = vpop.f32.mrf.mxu0
    %v497 = vadd.f32 %v310, %v496
    %498 = vdwg.mxu0
    %v499 = vpack.c.bf16 %v471, %v452
    %v500 = vpack.c.bf16 %v490, %v490
    %v501 = vpack.c.bf16 %v473, %v454
    %v502 = vpack.c.bf16 %v492, %v492
    %v503 = vpack.c.bf16 %v476, %v457
    %v504 = vpack.c.bf16 %v495, %v495
    %v505 = vpack.c.bf16 %v478, %v459
    %v506 = vpack.c.bf16 %v497, %v497
    %v509 = vunpack.c.l.b16 %v499
    %v510 = vunpack.c.l.b16 %v501
    %v511 = vpack.c.b16 %v510, %v509
    %v512 = vunpack.c.h.b16 %v499
    %v513 = vunpack.c.h.b16 %v501
    %v514 = vpack.c.b16 %v513, %v512
    %vm515 = vcmask 261120
    %v517 = vsel %vm515, %v511, 0
    %v520 = vsel %vm515, %v514, 0
    %522 = vmatpush.bf16.xpose.msra.mxu0 0
    %523 = vmatpush.bf16.xpose.msra.mxu0 0
    %524 = vmatpush.bf16.xpose.msra.mxu0 0
    %525 = vmatpush.bf16.xpose.msra.mxu0 0
    %526 = vmatpush.bf16.xpose.msra.mxu0 0
    %527 = vmatpush.bf16.xpose.msra.mxu0 0
    %528 = vmatpush.bf16.xpose.msra.mxu0 0
    %529 = vmatpush.bf16.xpose.msra.mxu0 %v520
    %530 = vmatmul.bf16.gmra.mxu0 %v517
    %v531 = vpop.f32.mrf.mxu0
    %v532 = vadd.f32 0.0, %v531
    %v533 = vpop.f32.mrf.mxu0
    %v534 = vadd.f32 0.0, %v533
    %535 = vdwg.mxu0
    %vm536 = vcmask 130048
    %v537 = vsel %vm536, %v532, -inf
    %538 = vmax.xlane.f32.xlu0 %v537
    %v539 = vpop.xlane.xlu0 %538
    %v540 = vsel %vm536, %v534, -inf
    %541 = vmax.xlane.f32.xlu0 %v540
    %v542 = vpop.xlane.xlu0 %541
    %v543 = vsub.f32 %v532, %v539
    %v544 = vsub.f32 %v534, %v542
    %v545 = vmul.f32 %v543, 1.442695
    %v546 = vpow.pop %v545
    %v547 = vmul.f32 %v544, 1.442695
    %v548 = vpow.pop %v547
    %v549 = vsel %vm536, %v546, 0.0
    %550 = vadd.xlane.f32.xlu0 %v549
    %v551 = vpop.xlane.xlu0 %550
    %v552 = vsel %vm536, %v548, 0.0
    %553 = vadd.xlane.f32.xlu0 %v552
    %v554 = vpop.xlane.xlu0 %553
    %v555 = vrcp.pop %v551
    %v556 = vrcp.pop %v554
    %v557 = vmul.f32 %v546, %v555
    %v558 = vmul.f32 %v548, %v556
    %v559 = vpack.c.bf16 %v558, %v557
    %v562 = vunpack.c.l.b16 %v500
    %v563 = vunpack.c.l.b16 %v502
    %v564 = vpack.c.b16 %v563, %v562
    %v567 = vsel %vm536, %v559, 0
    %569 = vmatpush.bf16.msra.mxu0 0
    %570 = vmatpush.bf16.msra.mxu0 0
    %571 = vmatpush.bf16.msra.mxu0 0
    %572 = vmatpush.bf16.msra.mxu0 0
    %573 = vmatpush.bf16.msra.mxu0 0
    %574 = vmatpush.bf16.msra.mxu0 0
    %575 = vmatpush.bf16.msra.mxu0 0
    %576 = vmatpush.bf16.msra.mxu0 %v564
    %577 = vmatmul.bf16.gmra.mxu0 %v567
    %v578 = vpop.f32.mrf.mxu0
    %v579 = vadd.f32 0.0, %v578
    %v580 = vpop.f32.mrf.mxu0
    %v581 = vadd.f32 0.0, %v580
    %582 = vdwg.mxu0
    %v583 = vpack.c.bf16 %v579, %v579
    %v584 = vpack.c.bf16 %v581, %v581
    %vm585 = vcmask 257024
    %586 = vst.msk [vmem:[#allocation2] sm:$0xf] %vm585, %v583
    %587 = vst.msk [vmem:[#allocation2 + $0x4] sm:$0xf] %vm585, %v584
    %588 = vrot.lane.b32.xlu0 %v511, 96
    %v589 = vpop.permute.xlu0 %588
    %590 = vrot.lane.b32.xlu0 %v514, 96
    %v591 = vpop.permute.xlu0 %590
    %v593 = vsel %vm515, %v589, 0
    %v596 = vsel %vm515, %v591, 0
    %598 = vmatpush.bf16.xpose.msra.mxu0 0
    %599 = vmatpush.bf16.xpose.msra.mxu0 0
    %600 = vmatpush.bf16.xpose.msra.mxu0 0
    %601 = vmatpush.bf16.xpose.msra.mxu0 0
    %602 = vmatpush.bf16.xpose.msra.mxu0 0
    %603 = vmatpush.bf16.xpose.msra.mxu0 0
    %604 = vmatpush.bf16.xpose.msra.mxu0 0
    %605 = vmatpush.bf16.xpose.msra.mxu0 %v596
    %606 = vmatmul.bf16.gmra.mxu0 %v593
    %v607 = vpop.f32.mrf.mxu0
    %v608 = vadd.f32 0.0, %v607
    %v609 = vpop.f32.mrf.mxu0
    %v610 = vadd.f32 0.0, %v609
    %611 = vdwg.mxu0
    %v612 = vsel %vm536, %v608, -inf
    %613 = vmax.xlane.f32.xlu0 %v612
    %v614 = vpop.xlane.xlu0 %613
    %v615 = vsel %vm536, %v610, -inf
    %616 = vmax.xlane.f32.xlu0 %v615
    %v617 = vpop.xlane.xlu0 %616
    %v618 = vsub.f32 %v608, %v614
    %v619 = vsub.f32 %v610, %v617
    %v620 = vmul.f32 %v618, 1.442695
    %v621 = vpow.pop %v620
    %v622 = vmul.f32 %v619, 1.442695
    %v623 = vpow.pop %v622
    %v624 = vsel %vm536, %v621, 0.0
    %625 = vadd.xlane.f32.xlu0 %v624
    %v626 = vpop.xlane.xlu0 %625
    %v627 = vsel %vm536, %v623, 0.0
    %628 = vadd.xlane.f32.xlu0 %v627
    %v629 = vpop.xlane.xlu0 %628
    %v630 = vrcp.pop %v626
    %v631 = vrcp.pop %v629
    %v632 = vmul.f32 %v621, %v630
    %v633 = vmul.f32 %v623, %v631
    %v634 = vpack.c.bf16 %v633, %v632
    %635 = vrot.lane.b32.xlu0 %v564, 96
    %v636 = vpop.permute.xlu0 %635
    %v639 = vsel %vm536, %v634, 0
    %641 = vmatpush.bf16.msra.mxu0 0
    %642 = vmatpush.bf16.msra.mxu0 0
    %643 = vmatpush.bf16.msra.mxu0 0
    %644 = vmatpush.bf16.msra.mxu0 0
    %645 = vmatpush.bf16.msra.mxu0 0
    %646 = vmatpush.bf16.msra.mxu0 0
    %647 = vmatpush.bf16.msra.mxu0 0
    %648 = vmatpush.bf16.msra.mxu0 %v636
    %649 = vmatmul.bf16.gmra.mxu0 %v639
    %v650 = vpop.f32.mrf.mxu0
    %v651 = vadd.f32 0.0, %v650
    %v652 = vpop.f32.mrf.mxu0
    %v653 = vadd.f32 0.0, %v652
    %654 = vdwg.mxu0
    %v655 = vpack.c.bf16 %v651, %v651
    %v656 = vpack.c.bf16 %v653, %v653
    %659 = vrot.lane.b32.xlu0 %v655, 32
    %v660 = vpop.permute.xlu0 %659
    %661 = vrot.lane.b32.xlu0 %v656, 32
    %v662 = vpop.permute.xlu0 %661
    %vm665 = vcmask 519424
    %666 = vst.msk [vmem:[#allocation2] sm:$0xf] %vm665, %v660
    %667 = vst.msk [vmem:[#allocation2 + $0x4] sm:$0xf] %vm665, %v662
    %668 = vrot.lane.b32.xlu0 %v511, 64
    %v669 = vpop.permute.xlu0 %668
    %670 = vrot.lane.b32.xlu0 %v514, 64
    %v671 = vpop.permute.xlu0 %670
    %v673 = vsel %vm515, %v669, 0
    %v676 = vsel %vm515, %v671, 0
    %678 = vmatpush.bf16.xpose.msra.mxu0 0
    %679 = vmatpush.bf16.xpose.msra.mxu0 0
    %680 = vmatpush.bf16.xpose.msra.mxu0 0
    %681 = vmatpush.bf16.xpose.msra.mxu0 0
    %682 = vmatpush.bf16.xpose.msra.mxu0 0
    %683 = vmatpush.bf16.xpose.msra.mxu0 0
    %684 = vmatpush.bf16.xpose.msra.mxu0 0
    %685 = vmatpush.bf16.xpose.msra.mxu0 %v676
    %686 = vmatmul.bf16.gmra.mxu0 %v673
    %v687 = vpop.f32.mrf.mxu0
    %v688 = vadd.f32 0.0, %v687
    %v689 = vpop.f32.mrf.mxu0
    %v690 = vadd.f32 0.0, %v689
    %691 = vdwg.mxu0
    %v692 = vsel %vm536, %v688, -inf
    %693 = vmax.xlane.f32.xlu0 %v692
    %v694 = vpop.xlane.xlu0 %693
    %v695 = vsel %vm536, %v690, -inf
    %696 = vmax.xlane.f32.xlu0 %v695
    %v697 = vpop.xlane.xlu0 %696
    %v698 = vsub.f32 %v688, %v694
    %v699 = vsub.f32 %v690, %v697
    %v700 = vmul.f32 %v698, 1.442695
    %v701 = vpow.pop %v700
    %v702 = vmul.f32 %v699, 1.442695
    %v703 = vpow.pop %v702
    %v704 = vsel %vm536, %v701, 0.0
    %705 = vadd.xlane.f32.xlu0 %v704
    %v706 = vpop.xlane.xlu0 %705
    %v707 = vsel %vm536, %v703, 0.0
    %708 = vadd.xlane.f32.xlu0 %v707
    %v709 = vpop.xlane.xlu0 %708
    %v710 = vrcp.pop %v706
    %v711 = vrcp.pop %v709
    %v712 = vmul.f32 %v701, %v710
    %v713 = vmul.f32 %v703, %v711
    %v714 = vpack.c.bf16 %v713, %v712
    %715 = vrot.lane.b32.xlu0 %v564, 64
    %v716 = vpop.permute.xlu0 %715
    %v719 = vsel %vm536, %v714, 0
    %721 = vmatpush.bf16.msra.mxu0 0
    %722 = vmatpush.bf16.msra.mxu0 0
    %723 = vmatpush.bf16.msra.mxu0 0
    %724 = vmatpush.bf16.msra.mxu0 0
    %725 = vmatpush.bf16.msra.mxu0 0
    %726 = vmatpush.bf16.msra.mxu0 0
    %727 = vmatpush.bf16.msra.mxu0 0
    %728 = vmatpush.bf16.msra.mxu0 %v716
    %729 = vmatmul.bf16.gmra.mxu0 %v719
    %v730 = vpop.f32.mrf.mxu0
    %v731 = vadd.f32 0.0, %v730
    %v732 = vpop.f32.mrf.mxu0
    %v733 = vadd.f32 0.0, %v732
    %734 = vdwg.mxu0
    %v735 = vpack.c.bf16 %v731, %v731
    %v736 = vpack.c.bf16 %v733, %v733
    %739 = vrot.lane.b32.xlu0 %v735, 64
    %v740 = vpop.permute.xlu0 %739
    %741 = vrot.lane.b32.xlu0 %v736, 64
    %v742 = vpop.permute.xlu0 %741
    %vm745 = vcmask 781824
    %746 = vst.msk [vmem:[#allocation2] sm:$0xf] %vm745, %v740
    %747 = vst.msk [vmem:[#allocation2 + $0x4] sm:$0xf] %vm745, %v742
    %748 = vrot.lane.b32.xlu0 %v511, 32
    %v749 = vpop.permute.xlu0 %748
    %750 = vrot.lane.b32.xlu0 %v514, 32
    %v751 = vpop.permute.xlu0 %750
    %v753 = vsel %vm515, %v749, 0
    %v756 = vsel %vm515, %v751, 0
    %758 = vmatpush.bf16.xpose.msra.mxu0 0
    %759 = vmatpush.bf16.xpose.msra.mxu0 0
    %760 = vmatpush.bf16.xpose.msra.mxu0 0
    %761 = vmatpush.bf16.xpose.msra.mxu0 0
    %762 = vmatpush.bf16.xpose.msra.mxu0 0
    %763 = vmatpush.bf16.xpose.msra.mxu0 0
    %764 = vmatpush.bf16.xpose.msra.mxu0 0
    %765 = vmatpush.bf16.xpose.msra.mxu0 %v756
    %766 = vmatmul.bf16.gmra.mxu0 %v753
    %v767 = vpop.f32.mrf.mxu0
    %v768 = vadd.f32 0.0, %v767
    %v769 = vpop.f32.mrf.mxu0
    %v770 = vadd.f32 0.0, %v769
    %771 = vdwg.mxu0
    %v772 = vsel %vm536, %v768, -inf
    %773 = vmax.xlane.f32.xlu0 %v772
    %v774 = vpop.xlane.xlu0 %773
    %v775 = vsel %vm536, %v770, -inf
    %776 = vmax.xlane.f32.xlu0 %v775
    %v777 = vpop.xlane.xlu0 %776
    %v778 = vsub.f32 %v768, %v774
    %v779 = vsub.f32 %v770, %v777
    %v780 = vmul.f32 %v778, 1.442695
    %v781 = vpow.pop %v780
    %v782 = vmul.f32 %v779, 1.442695
    %v783 = vpow.pop %v782
    %v784 = vsel %vm536, %v781, 0.0
    %785 = vadd.xlane.f32.xlu0 %v784
    %v786 = vpop.xlane.xlu0 %785
    %v787 = vsel %vm536, %v783, 0.0
    %788 = vadd.xlane.f32.xlu0 %v787
    %v789 = vpop.xlane.xlu0 %788
    %v790 = vrcp.pop %v786
    %v791 = vrcp.pop %v789
    %v792 = vmul.f32 %v781, %v790
    %v793 = vmul.f32 %v783, %v791
    %v794 = vpack.c.bf16 %v793, %v792
    %795 = vrot.lane.b32.xlu0 %v564, 32
    %v796 = vpop.permute.xlu0 %795
    %v799 = vsel %vm536, %v794, 0
    %801 = vmatpush.bf16.msra.mxu0 0
    %802 = vmatpush.bf16.msra.mxu0 0
    %803 = vmatpush.bf16.msra.mxu0 0
    %804 = vmatpush.bf16.msra.mxu0 0
    %805 = vmatpush.bf16.msra.mxu0 0
    %806 = vmatpush.bf16.msra.mxu0 0
    %807 = vmatpush.bf16.msra.mxu0 0
    %808 = vmatpush.bf16.msra.mxu0 %v796
    %809 = vmatmul.bf16.gmra.mxu0 %v799
    %v810 = vpop.f32.mrf.mxu0
    %v811 = vadd.f32 0.0, %v810
    %v812 = vpop.f32.mrf.mxu0
    %v813 = vadd.f32 0.0, %v812
    %814 = vdwg.mxu0
    %v815 = vpack.c.bf16 %v811, %v811
    %v816 = vpack.c.bf16 %v813, %v813
    %819 = vrot.lane.b32.xlu0 %v815, 96
    %v820 = vpop.permute.xlu0 %819
    %821 = vrot.lane.b32.xlu0 %v816, 96
    %v822 = vpop.permute.xlu0 %821
    %vm825 = vcmask 1044224
    %826 = vst.msk [vmem:[#allocation2] sm:$0xf] %vm825, %v820
    %827 = vst.msk [vmem:[#allocation2 + $0x4] sm:$0xf] %vm825, %v822
    %v830 = vunpack.c.l.b16 %v503
    %v831 = vunpack.c.l.b16 %v505
    %v832 = vpack.c.b16 %v831, %v830
    %v833 = vunpack.c.h.b16 %v503
    %v834 = vunpack.c.h.b16 %v505
    %v835 = vpack.c.b16 %v834, %v833
    %v837 = vsel %vm515, %v832, 0
    %v840 = vsel %vm515, %v835, 0
    %842 = vmatpush.bf16.xpose.msra.mxu0 0
    %843 = vmatpush.bf16.xpose.msra.mxu0 0
    %844 = vmatpush.bf16.xpose.msra.mxu0 0
    %845 = vmatpush.bf16.xpose.msra.mxu0 0
    %846 = vmatpush.bf16.xpose.msra.mxu0 0
    %847 = vmatpush.bf16.xpose.msra.mxu0 0
    %848 = vmatpush.bf16.xpose.msra.mxu0 0
    %849 = vmatpush.bf16.xpose.msra.mxu0 %v840
    %850 = vmatmul.bf16.gmra.mxu0 %v837
    %v851 = vpop.f32.mrf.mxu0
    %v852 = vadd.f32 0.0, %v851
    %v853 = vpop.f32.mrf.mxu0
    %v854 = vadd.f32 0.0, %v853
    %855 = vdwg.mxu0
    %v856 = vsel %vm536, %v852, -inf
    %857 = vmax.xlane.f32.xlu0 %v856
    %v858 = vpop.xlane.xlu0 %857
    %v859 = vsel %vm536, %v854, -inf
    %860 = vmax.xlane.f32.xlu0 %v859
    %v861 = vpop.xlane.xlu0 %860
    %v862 = vsub.f32 %v852, %v858
    %v863 = vsub.f32 %v854, %v861
    %v864 = vmul.f32 %v862, 1.442695
    %v865 = vpow.pop %v864
    %v866 = vmul.f32 %v863, 1.442695
    %v867 = vpow.pop %v866
    %v868 = vsel %vm536, %v865, 0.0
    %869 = vadd.xlane.f32.xlu0 %v868
    %v870 = vpop.xlane.xlu0 %869
    %v871 = vsel %vm536, %v867, 0.0
    %872 = vadd.xlane.f32.xlu0 %v871
    %v873 = vpop.xlane.xlu0 %872
    %v874 = vrcp.pop %v870
    %v875 = vrcp.pop %v873
    %v876 = vmul.f32 %v865, %v874
    %v877 = vmul.f32 %v867, %v875
    %v878 = vpack.c.bf16 %v877, %v876
    %v881 = vunpack.c.l.b16 %v504
    %v882 = vunpack.c.l.b16 %v506
    %v883 = vpack.c.b16 %v882, %v881
    %v886 = vsel %vm536, %v878, 0
    %888 = vmatpush.bf16.msra.mxu0 0
    %889 = vmatpush.bf16.msra.mxu0 0
    %890 = vmatpush.bf16.msra.mxu0 0
    %891 = vmatpush.bf16.msra.mxu0 0
    %892 = vmatpush.bf16.msra.mxu0 0
    %893 = vmatpush.bf16.msra.mxu0 0
    %894 = vmatpush.bf16.msra.mxu0 0
    %895 = vmatpush.bf16.msra.mxu0 %v883
    %896 = vmatmul.bf16.gmra.mxu0 %v886
    %v897 = vpop.f32.mrf.mxu0
    %v898 = vadd.f32 0.0, %v897
    %v899 = vpop.f32.mrf.mxu0
    %v900 = vadd.f32 0.0, %v899
    %901 = vdwg.mxu0
    %v902 = vpack.c.bf16 %v898, %v898
    %v903 = vpack.c.bf16 %v900, %v900
    %904 = vst.msk [vmem:[#allocation2 + $0x8] sm:$0xf] %vm585, %v902
    %905 = vst.msk [vmem:[#allocation2 + $0xc] sm:$0xf] %vm585, %v903
    %906 = vrot.lane.b32.xlu0 %v832, 96
    %v907 = vpop.permute.xlu0 %906
    %908 = vrot.lane.b32.xlu0 %v835, 96
    %v909 = vpop.permute.xlu0 %908
    %v911 = vsel %vm515, %v907, 0
    %v914 = vsel %vm515, %v909, 0
    %916 = vmatpush.bf16.xpose.msra.mxu0 0
    %917 = vmatpush.bf16.xpose.msra.mxu0 0
    %918 = vmatpush.bf16.xpose.msra.mxu0 0
    %919 = vmatpush.bf16.xpose.msra.mxu0 0
    %920 = vmatpush.bf16.xpose.msra.mxu0 0
    %921 = vmatpush.bf16.xpose.msra.mxu0 0
    %922 = vmatpush.bf16.xpose.msra.mxu0 0
    %923 = vmatpush.bf16.xpose.msra.mxu0 %v914
    %924 = vmatmul.bf16.gmra.mxu0 %v911
    %v925 = vpop.f32.mrf.mxu0
    %v926 = vadd.f32 0.0, %v925
    %v927 = vpop.f32.mrf.mxu0
    %v928 = vadd.f32 0.0, %v927
    %929 = vdwg.mxu0
    %v930 = vsel %vm536, %v926, -inf
    %931 = vmax.xlane.f32.xlu0 %v930
    %v932 = vpop.xlane.xlu0 %931
    %v933 = vsel %vm536, %v928, -inf
    %934 = vmax.xlane.f32.xlu0 %v933
    %v935 = vpop.xlane.xlu0 %934
    %v936 = vsub.f32 %v926, %v932
    %v937 = vsub.f32 %v928, %v935
    %v938 = vmul.f32 %v936, 1.442695
    %v939 = vpow.pop %v938
    %v940 = vmul.f32 %v937, 1.442695
    %v941 = vpow.pop %v940
    %v942 = vsel %vm536, %v939, 0.0
    %943 = vadd.xlane.f32.xlu0 %v942
    %v944 = vpop.xlane.xlu0 %943
    %v945 = vsel %vm536, %v941, 0.0
    %946 = vadd.xlane.f32.xlu0 %v945
    %v947 = vpop.xlane.xlu0 %946
    %v948 = vrcp.pop %v944
    %v949 = vrcp.pop %v947
    %v950 = vmul.f32 %v939, %v948
    %v951 = vmul.f32 %v941, %v949
    %v952 = vpack.c.bf16 %v951, %v950
    %953 = vrot.lane.b32.xlu0 %v883, 96
    %v954 = vpop.permute.xlu0 %953
    %v957 = vsel %vm536, %v952, 0
    %959 = vmatpush.bf16.msra.mxu0 0
    %960 = vmatpush.bf16.msra.mxu0 0
    %961 = vmatpush.bf16.msra.mxu0 0
    %962 = vmatpush.bf16.msra.mxu0 0
    %963 = vmatpush.bf16.msra.mxu0 0
    %964 = vmatpush.bf16.msra.mxu0 0
    %965 = vmatpush.bf16.msra.mxu0 0
    %966 = vmatpush.bf16.msra.mxu0 %v954
    %967 = vmatmul.bf16.gmra.mxu0 %v957
    %v968 = vpop.f32.mrf.mxu0
    %v969 = vadd.f32 0.0, %v968
    %v970 = vpop.f32.mrf.mxu0
    %v971 = vadd.f32 0.0, %v970
    %972 = vdwg.mxu0
    %v973 = vpack.c.bf16 %v969, %v969
    %v974 = vpack.c.bf16 %v971, %v971
    %977 = vrot.lane.b32.xlu0 %v973, 32
    %v978 = vpop.permute.xlu0 %977
    %979 = vrot.lane.b32.xlu0 %v974, 32
    %v980 = vpop.permute.xlu0 %979
    %983 = vst.msk [vmem:[#allocation2 + $0x8] sm:$0xf] %vm665, %v978
    %984 = vst.msk [vmem:[#allocation2 + $0xc] sm:$0xf] %vm665, %v980
    %985 = vrot.lane.b32.xlu0 %v832, 64
    %v986 = vpop.permute.xlu0 %985
    %987 = vrot.lane.b32.xlu0 %v835, 64
    %v988 = vpop.permute.xlu0 %987
    %v990 = vsel %vm515, %v986, 0
    %v993 = vsel %vm515, %v988, 0
    %995 = vmatpush.bf16.xpose.msra.mxu0 0
    %996 = vmatpush.bf16.xpose.msra.mxu0 0
    %997 = vmatpush.bf16.xpose.msra.mxu0 0
    %998 = vmatpush.bf16.xpose.msra.mxu0 0
    %999 = vmatpush.bf16.xpose.msra.mxu0 0
    %1000 = vmatpush.bf16.xpose.msra.mxu0 0
    %1001 = vmatpush.bf16.xpose.msra.mxu0 0
    %1002 = vmatpush.bf16.xpose.msra.mxu0 %v993
    %1003 = vmatmul.bf16.gmra.mxu0 %v990
    %v1004 = vpop.f32.mrf.mxu0
    %v1005 = vadd.f32 0.0, %v1004
    %v1006 = vpop.f32.mrf.mxu0
    %v1007 = vadd.f32 0.0, %v1006
    %1008 = vdwg.mxu0
    %v1009 = vsel %vm536, %v1005, -inf
    %1010 = vmax.xlane.f32.xlu0 %v1009
    %v1011 = vpop.xlane.xlu0 %1010
    %v1012 = vsel %vm536, %v1007, -inf
    %1013 = vmax.xlane.f32.xlu0 %v1012
    %v1014 = vpop.xlane.xlu0 %1013
    %v1015 = vsub.f32 %v1005, %v1011
    %v1016 = vsub.f32 %v1007, %v1014
    %v1017 = vmul.f32 %v1015, 1.442695
    %v1018 = vpow.pop %v1017
    %v1019 = vmul.f32 %v1016, 1.442695
    %v1020 = vpow.pop %v1019
    %v1021 = vsel %vm536, %v1018, 0.0
    %1022 = vadd.xlane.f32.xlu0 %v1021
    %v1023 = vpop.xlane.xlu0 %1022
    %v1024 = vsel %vm536, %v1020, 0.0
    %1025 = vadd.xlane.f32.xlu0 %v1024
    %v1026 = vpop.xlane.xlu0 %1025
    %v1027 = vrcp.pop %v1023
    %v1028 = vrcp.pop %v1026
    %v1029 = vmul.f32 %v1018, %v1027
    %v1030 = vmul.f32 %v1020, %v1028
    %v1031 = vpack.c.bf16 %v1030, %v1029
    %1032 = vrot.lane.b32.xlu0 %v883, 64
    %v1033 = vpop.permute.xlu0 %1032
    %v1036 = vsel %vm536, %v1031, 0
    %1038 = vmatpush.bf16.msra.mxu0 0
    %1039 = vmatpush.bf16.msra.mxu0 0
    %1040 = vmatpush.bf16.msra.mxu0 0
    %1041 = vmatpush.bf16.msra.mxu0 0
    %1042 = vmatpush.bf16.msra.mxu0 0
    %1043 = vmatpush.bf16.msra.mxu0 0
    %1044 = vmatpush.bf16.msra.mxu0 0
    %1045 = vmatpush.bf16.msra.mxu0 %v1033
    %1046 = vmatmul.bf16.gmra.mxu0 %v1036
    %v1047 = vpop.f32.mrf.mxu0
    %v1048 = vadd.f32 0.0, %v1047
    %v1049 = vpop.f32.mrf.mxu0
    %v1050 = vadd.f32 0.0, %v1049
    %1051 = vdwg.mxu0
    %v1052 = vpack.c.bf16 %v1048, %v1048
    %v1053 = vpack.c.bf16 %v1050, %v1050
    %1056 = vrot.lane.b32.xlu0 %v1052, 64
    %v1057 = vpop.permute.xlu0 %1056
    %1058 = vrot.lane.b32.xlu0 %v1053, 64
    %v1059 = vpop.permute.xlu0 %1058
    %1062 = vst.msk [vmem:[#allocation2 + $0x8] sm:$0xf] %vm745, %v1057
    %1063 = vst.msk [vmem:[#allocation2 + $0xc] sm:$0xf] %vm745, %v1059
    %1064 = vrot.lane.b32.xlu0 %v832, 32
    %v1065 = vpop.permute.xlu0 %1064
    %1066 = vrot.lane.b32.xlu0 %v835, 32
    %v1067 = vpop.permute.xlu0 %1066
    %v1069 = vsel %vm515, %v1065, 0
    %v1072 = vsel %vm515, %v1067, 0
    %1074 = vmatpush.bf16.xpose.msra.mxu0 0
    %1075 = vmatpush.bf16.xpose.msra.mxu0 0
    %1076 = vmatpush.bf16.xpose.msra.mxu0 0
    %1077 = vmatpush.bf16.xpose.msra.mxu0 0
    %1078 = vmatpush.bf16.xpose.msra.mxu0 0
    %1079 = vmatpush.bf16.xpose.msra.mxu0 0
    %1080 = vmatpush.bf16.xpose.msra.mxu0 0
    %1081 = vmatpush.bf16.xpose.msra.mxu0 %v1072
    %1082 = vmatmul.bf16.gmra.mxu0 %v1069
    %v1083 = vpop.f32.mrf.mxu0
    %v1084 = vadd.f32 0.0, %v1083
    %v1085 = vpop.f32.mrf.mxu0
    %v1086 = vadd.f32 0.0, %v1085
    %1087 = vdwg.mxu0
    %v1088 = vsel %vm536, %v1084, -inf
    %1089 = vmax.xlane.f32.xlu0 %v1088
    %v1090 = vpop.xlane.xlu0 %1089
    %v1091 = vsel %vm536, %v1086, -inf
    %1092 = vmax.xlane.f32.xlu0 %v1091
    %v1093 = vpop.xlane.xlu0 %1092
    %v1094 = vsub.f32 %v1084, %v1090
    %v1095 = vsub.f32 %v1086, %v1093
    %v1096 = vmul.f32 %v1094, 1.442695
    %v1097 = vpow.pop %v1096
    %v1098 = vmul.f32 %v1095, 1.442695
    %v1099 = vpow.pop %v1098
    %v1100 = vsel %vm536, %v1097, 0.0
    %1101 = vadd.xlane.f32.xlu0 %v1100
    %v1102 = vpop.xlane.xlu0 %1101
    %v1103 = vsel %vm536, %v1099, 0.0
    %1104 = vadd.xlane.f32.xlu0 %v1103
    %v1105 = vpop.xlane.xlu0 %1104
    %v1106 = vrcp.pop %v1102
    %v1107 = vrcp.pop %v1105
    %v1108 = vmul.f32 %v1097, %v1106
    %v1109 = vmul.f32 %v1099, %v1107
    %v1110 = vpack.c.bf16 %v1109, %v1108
    %1111 = vrot.lane.b32.xlu0 %v883, 32
    %v1112 = vpop.permute.xlu0 %1111
    %v1115 = vsel %vm536, %v1110, 0
    %1117 = vmatpush.bf16.msra.mxu0 0
    %1118 = vmatpush.bf16.msra.mxu0 0
    %1119 = vmatpush.bf16.msra.mxu0 0
    %1120 = vmatpush.bf16.msra.mxu0 0
    %1121 = vmatpush.bf16.msra.mxu0 0
    %1122 = vmatpush.bf16.msra.mxu0 0
    %1123 = vmatpush.bf16.msra.mxu0 0
    %1124 = vmatpush.bf16.msra.mxu0 %v1112
    %1125 = vmatmul.bf16.gmra.mxu0 %v1115
    %v1126 = vpop.f32.mrf.mxu0
    %v1127 = vadd.f32 0.0, %v1126
    %v1128 = vpop.f32.mrf.mxu0
    %v1129 = vadd.f32 0.0, %v1128
    %1130 = vdwg.mxu0
    %v1131 = vpack.c.bf16 %v1127, %v1127
    %v1132 = vpack.c.bf16 %v1129, %v1129
    %1135 = vrot.lane.b32.xlu0 %v1131, 96
    %v1136 = vpop.permute.xlu0 %1135
    %1137 = vrot.lane.b32.xlu0 %v1132, 96
    %v1138 = vpop.permute.xlu0 %1137
    %1141 = vst.msk [vmem:[#allocation2 + $0x8] sm:$0xf] %vm825, %v1136
    %1142 = vst.msk [vmem:[#allocation2 + $0xc] sm:$0xf] %vm825, %v1138
    %v1143 = vld [vmem:[#allocation2] sm:$0xf]
    %v1144 = vld [vmem:[#allocation2 + $0x4] sm:$0xf]
    %v1145 = vld [vmem:[#allocation2 + $0x8] sm:$0xf]
    %v1146 = vld [vmem:[#allocation2 + $0xc] sm:$0xf]
    %v1147 = vld [vmem:[#allocation11] sm:$0xf]
    %v1148 = vld [vmem:[#allocation11 + $0x4] sm:$0xf]
    %v1149 = vld [vmem:[#allocation11 + $0x8] sm:$0xf]
    %v1150 = vld [vmem:[#allocation11 + $0xc] sm:$0xf]
    %v1151 = vld [vmem:[#allocation11 + $0x10] sm:$0xf]
    %v1152 = vld [vmem:[#allocation11 + $0x14] sm:$0xf]
    %v1153 = vld [vmem:[#allocation11 + $0x18] sm:$0xf]
    %v1154 = vld [vmem:[#allocation11 + $0x1c] sm:$0xf]
    %v1155 = vld [vmem:[#allocation11 + $0x20] sm:$0xf]
    %v1156 = vld [vmem:[#allocation11 + $0x24] sm:$0xf]
    %v1157 = vld [vmem:[#allocation11 + $0x28] sm:$0xf]
    %v1158 = vld [vmem:[#allocation11 + $0x2c] sm:$0xf]
    %v1159 = vld [vmem:[#allocation11 + $0x30] sm:$0xf]
    %v1160 = vld [vmem:[#allocation11 + $0x34] sm:$0xf]
    %v1161 = vld [vmem:[#allocation11 + $0x38] sm:$0xf]
    %v1162 = vld [vmem:[#allocation11 + $0x3c] sm:$0xf]
    %v1163 = vld [vmem:[#allocation12] sm:$0x1]
    %v1165 = vperm.slane %v1163, 0
    %v1171 = vunpack.c.l.b16 %v1143
    %v1172 = vunpack.c.l.b16 %v1144
    %v1173 = vunpack.c.l.b16 %v1145
    %v1174 = vunpack.c.l.b16 %v1146
    %v1175 = vpack.c.b16 %v1172, %v1171
    %v1176 = vpack.c.b16 %v1174, %v1173
    %v1195 = vunpack.c.l.b16 %v1147
    %v1196 = vunpack.c.l.b16 %v1148
    %v1197 = vunpack.c.l.b16 %v1149
    %v1198 = vunpack.c.l.b16 %v1150
    %v1199 = vunpack.c.l.b16 %v1151
    %v1200 = vunpack.c.l.b16 %v1152
    %v1201 = vunpack.c.l.b16 %v1153
    %v1202 = vunpack.c.l.b16 %v1154
    %v1203 = vunpack.c.l.b16 %v1155
    %v1204 = vunpack.c.l.b16 %v1156
    %v1205 = vunpack.c.l.b16 %v1157
    %v1206 = vunpack.c.l.b16 %v1158
    %v1207 = vunpack.c.l.b16 %v1159
    %v1208 = vunpack.c.l.b16 %v1160
    %v1209 = vunpack.c.l.b16 %v1161
    %v1210 = vunpack.c.l.b16 %v1162
    %v1211 = vpack.c.b16 %v1196, %v1195
    %v1212 = vpack.c.b16 %v1198, %v1197
    %v1213 = vpack.c.b16 %v1200, %v1199
    %v1214 = vpack.c.b16 %v1202, %v1201
    %v1215 = vpack.c.b16 %v1204, %v1203
    %v1216 = vpack.c.b16 %v1206, %v1205
    %v1217 = vpack.c.b16 %v1208, %v1207
    %v1218 = vpack.c.b16 %v1210, %v1209
    %1227 = vmatpush.bf16.msra.mxu0 %v1218
    %1228 = vmatpush.bf16.msra.mxu0 %v1217
    %1229 = vmatpush.bf16.msra.mxu0 %v1216
    %1230 = vmatpush.bf16.msra.mxu0 %v1215
    %1231 = vmatpush.bf16.msra.mxu0 %v1214
    %1232 = vmatpush.bf16.msra.mxu0 %v1213
    %1233 = vmatpush.bf16.msra.mxu0 %v1212
    %1234 = vmatpush.bf16.msra.mxu0 %v1211
    %1235 = vmatmul.bf16.gmra.mxu0 %v1175
    %v1236 = vpop.f32.mrf.mxu0
    %v1237 = vadd.f32 %v1165, %v1236
    %v1238 = vpop.f32.mrf.mxu0
    %v1239 = vadd.f32 %v1165, %v1238
    %1240 = vmatmul.bf16.gmra.mxu0 %v1176
    %v1241 = vpop.f32.mrf.mxu0
    %v1242 = vadd.f32 %v1165, %v1241
    %v1243 = vpop.f32.mrf.mxu0
    %v1244 = vadd.f32 %v1165, %v1243
    %1245 = vdwg.mxu0
    %v1246 = vadd.f32 %v1237, %v165
    %v1247 = vadd.f32 %v1239, %v166
    %v1248 = vadd.f32 %v1242, %v167
    %v1249 = vadd.f32 %v1244, %v168
    %v1250 = vld [vmem:[%s7] sm:$0x1]
    %v1251 = vld [vmem:[%s8] sm:$0x1]
    %1252 = vadd.xlane.f32.xlu0 %v1246
    %v1253 = vpop.xlane.xlu0 %1252
    %1254 = vadd.xlane.f32.xlu0 %v1247
    %v1255 = vpop.xlane.xlu0 %1254
    %1256 = vadd.xlane.f32.xlu0 %v1248
    %v1257 = vpop.xlane.xlu0 %1256
    %1258 = vadd.xlane.f32.xlu0 %v1249
    %v1259 = vpop.xlane.xlu0 %1258
    %v1260 = vmul.f32 %v1253, %v185
    %v1261 = vmul.f32 %v1255, %v185
    %v1262 = vmul.f32 %v1257, %v185
    %v1263 = vmul.f32 %v1259, %v185
    %v1264 = vsub.f32 %v1246, %v1260
    %v1265 = vsub.f32 %v1247, %v1261
    %v1266 = vsub.f32 %v1248, %v1262
    %v1267 = vsub.f32 %v1249, %v1263
    %v1268 = vmul.f32 %v1264, %v1264
    %v1269 = vmul.f32 %v1265, %v1265
    %v1270 = vmul.f32 %v1266, %v1266
    %v1271 = vmul.f32 %v1267, %v1267
    %1272 = vadd.xlane.f32.xlu0 %v1268
    %v1273 = vpop.xlane.xlu0 %1272
    %1274 = vadd.xlane.f32.xlu0 %v1269
    %v1275 = vpop.xlane.xlu0 %1274
    %1276 = vadd.xlane.f32.xlu0 %v1270
    %v1277 = vpop.xlane.xlu0 %1276
    %1278 = vadd.xlane.f32.xlu0 %v1271
    %v1279 = vpop.xlane.xlu0 %1278
    %v1280 = vmul.f32 %v1273, %v185
    %v1281 = vmul.f32 %v1275, %v185
    %v1282 = vmul.f32 %v1277, %v185
    %v1283 = vmul.f32 %v1279, %v185
    %v1284 = vadd.f32 %v1280, 1e-05
    %v1285 = vadd.f32 %v1281, 1e-05
    %v1286 = vadd.f32 %v1282, 1e-05
    %v1287 = vadd.f32 %v1283, 1e-05
    %v1288 = vrsqrt.pop %v1284
    %v1289 = vmul.f32 %v1288, %v1284
    %v1290 = vmul.f32 %v1289, %v1288
    %v1291 = vmul.f32 0.5, %v1290
    %v1292 = vsub.f32 1.5, %v1291
    %v1293 = vmul.f32 %v1288, %v1292
    %vm1294 = vweird.f32 %v1284
    %vm1295 = vweird.f32 %v1288
    %vm1296 = vmor %vm1294, %vm1295
    %v1297 = vsel %vm1296, %v1288, %v1293
    %v1298 = vrsqrt.pop %v1285
    %v1299 = vmul.f32 %v1298, %v1285
    %v1300 = vmul.f32 %v1299, %v1298
    %v1301 = vmul.f32 0.5, %v1300
    %v1302 = vsub.f32 1.5, %v1301
    %v1303 = vmul.f32 %v1298, %v1302
    %vm1304 = vweird.f32 %v1285
    %vm1305 = vweird.f32 %v1298
    %vm1306 = vmor %vm1304, %vm1305
    %v1307 = vsel %vm1306, %v1298, %v1303
    %v1308 = vrsqrt.pop %v1286
    %v1309 = vmul.f32 %v1308, %v1286
    %v1310 = vmul.f32 %v1309, %v1308
    %v1311 = vmul.f32 0.5, %v1310
    %v1312 = vsub.f32 1.5, %v1311
    %v1313 = vmul.f32 %v1308, %v1312
    %vm1314 = vweird.f32 %v1286
    %vm1315 = vweird.f32 %v1308
    %vm1316 = vmor %vm1314, %vm1315
    %v1317 = vsel %vm1316, %v1308, %v1313
    %v1318 = vrsqrt.pop %v1287
    %v1319 = vmul.f32 %v1318, %v1287
    %v1320 = vmul.f32 %v1319, %v1318
    %v1321 = vmul.f32 0.5, %v1320
    %v1322 = vsub.f32 1.5, %v1321
    %v1323 = vmul.f32 %v1318, %v1322
    %vm1324 = vweird.f32 %v1287
    %vm1325 = vweird.f32 %v1318
    %vm1326 = vmor %vm1324, %vm1325
    %v1327 = vsel %vm1326, %v1318, %v1323
    %v1328 = vmul.f32 %v1264, %v1297
    %v1329 = vmul.f32 %v1265, %v1307
    %v1330 = vmul.f32 %v1266, %v1317
    %v1331 = vmul.f32 %v1267, %v1327
    %v1333 = vperm.slane %v1250, 0
    %v1335 = vmul.f32 %v1328, %v1333
    %v1336 = vmul.f32 %v1329, %v1333
    %v1337 = vmul.f32 %v1330, %v1333
    %v1338 = vmul.f32 %v1331, %v1333
    %v1340 = vperm.slane %v1251, 0
    %v1342 = vadd.f32 %v1335, %v1340
    %v1343 = vadd.f32 %v1336, %v1340
    %v1344 = vadd.f32 %v1337, %v1340
    %v1345 = vadd.f32 %v1338, %v1340
    %v1346 = vpack.c.bf16 %v1343, %v1342
    %v1347 = vpack.c.bf16 %v1345, %v1344
    %v1348 = vld [vmem:[#allocation14] sm:$0xff]
    %v1349 = vld [vmem:[#allocation14 + $0x8] sm:$0xff]
    %v1350 = vld [vmem:[#allocation14 + $0x10] sm:$0xff]
    %v1351 = vld [vmem:[#allocation14 + $0x18] sm:$0xff]
    %v1352 = vld [vmem:[#allocation14 + $0x20] sm:$0xff]
    %v1353 = vld [vmem:[#allocation14 + $0x28] sm:$0xff]
    %v1354 = vld [vmem:[#allocation14 + $0x30] sm:$0xff]
    %v1355 = vld [vmem:[#allocation14 + $0x38] sm:$0xff]
    %v1356 = vld [vmem:[#allocation14 + $0x40] sm:$0xff]
    %v1357 = vld [vmem:[#allocation14 + $0x48] sm:$0xff]
    %v1358 = vld [vmem:[#allocation14 + $0x50] sm:$0xff]
    %v1359 = vld [vmem:[#allocation14 + $0x58] sm:$0xff]
    %v1360 = vld [vmem:[#allocation14 + $0x60] sm:$0xff]
    %v1361 = vld [vmem:[#allocation14 + $0x68] sm:$0xff]
    %v1362 = vld [vmem:[#allocation14 + $0x70] sm:$0xff]
    %v1363 = vld [vmem:[#allocation14 + $0x78] sm:$0xff]
    %v1364 = vld [vmem:[%s10] sm:$0x3]
    %v1366 = vperm.slane %v1364, 0
    %v1367 = vperm.slane %v1364, 1
    %v1386 = vunpack.c.l.b16 %v1348
    %v1387 = vunpack.c.h.b16 %v1348
    %v1388 = vunpack.c.l.b16 %v1349
    %v1389 = vunpack.c.h.b16 %v1349
    %v1390 = vunpack.c.l.b16 %v1350
    %v1391 = vunpack.c.h.b16 %v1350
    %v1392 = vunpack.c.l.b16 %v1351
    %v1393 = vunpack.c.h.b16 %v1351
    %v1394 = vunpack.c.l.b16 %v1352
    %v1395 = vunpack.c.h.b16 %v1352
    %v1396 = vunpack.c.l.b16 %v1353
    %v1397 = vunpack.c.h.b16 %v1353
    %v1398 = vunpack.c.l.b16 %v1354
    %v1399 = vunpack.c.h.b16 %v1354
    %v1400 = vunpack.c.l.b16 %v1355
    %v1401 = vunpack.c.h.b16 %v1355
    %v1402 = vunpack.c.l.b16 %v1356
    %v1403 = vunpack.c.h.b16 %v1356
    %v1404 = vunpack.c.l.b16 %v1357
    %v1405 = vunpack.c.h.b16 %v1357
    %v1406 = vunpack.c.l.b16 %v1358
    %v1407 = vunpack.c.h.b16 %v1358
    %v1408 = vunpack.c.l.b16 %v1359
    %v1409 = vunpack.c.h.b16 %v1359
    %v1410 = vunpack.c.l.b16 %v1360
    %v1411 = vunpack.c.h.b16 %v1360
    %v1412 = vunpack.c.l.b16 %v1361
    %v1413 = vunpack.c.h.b16 %v1361
    %v1414 = vunpack.c.l.b16 %v1362
    %v1415 = vunpack.c.h.b16 %v1362
    %v1416 = vunpack.c.l.b16 %v1363
    %v1417 = vunpack.c.h.b16 %v1363
    %v1418 = vpack.c.b16 %v1388, %v1386
    %v1419 = vpack.c.b16 %v1389, %v1387
    %v1420 = vpack.c.b16 %v1392, %v1390
    %v1421 = vpack.c.b16 %v1393, %v1391
    %v1422 = vpack.c.b16 %v1396, %v1394
    %v1423 = vpack.c.b16 %v1397, %v1395
    %v1424 = vpack.c.b16 %v1400, %v1398
    %v1425 = vpack.c.b16 %v1401, %v1399
    %v1426 = vpack.c.b16 %v1404, %v1402
    %v1427 = vpack.c.b16 %v1405, %v1403
    %v1428 = vpack.c.b16 %v1408, %v1406
    %v1429 = vpack.c.b16 %v1409, %v1407
    %v1430 = vpack.c.b16 %v1412, %v1410
    %v1431 = vpack.c.b16 %v1413, %v1411
    %v1432 = vpack.c.b16 %v1416, %v1414
    %v1433 = vpack.c.b16 %v1417, %v1415
    %1450 = vmatpush.bf16.msra.mxu0 %v1432
    %1451 = vmatpush.bf16.msra.mxu0 %v1430
    %1452 = vmatpush.bf16.msra.mxu0 %v1428
    %1453 = vmatpush.bf16.msra.mxu0 %v1426
    %1454 = vmatpush.bf16.msra.mxu0 %v1424
    %1455 = vmatpush.bf16.msra.mxu0 %v1422
    %1456 = vmatpush.bf16.msra.mxu0 %v1420
    %1457 = vmatpush.bf16.msra.mxu0 %v1418
    %1458 = vmatmul.bf16.gmra.mxu0 %v1346
    %v1459 = vpop.f32.mrf.mxu0
    %v1460 = vadd.f32 %v1366, %v1459
    %v1461 = vpop.f32.mrf.mxu0
    %v1462 = vadd.f32 %v1366, %v1461
    %1463 = vmatmul.bf16.gmra.mxu0 %v1347
    %v1464 = vpop.f32.mrf.mxu0
    %v1465 = vadd.f32 %v1366, %v1464
    %v1466 = vpop.f32.mrf.mxu0
    %v1467 = vadd.f32 %v1366, %v1466
    %1468 = vdwg.mxu0
    %1469 = vmatpush.bf16.msra.mxu0 %v1433
    %1470 = vmatpush.bf16.msra.mxu0 %v1431
    %1471 = vmatpush.bf16.msra.mxu0 %v1429
    %1472 = vmatpush.bf16.msra.mxu0 %v1427
    %1473 = vmatpush.bf16.msra.mxu0 %v1425
    %1474 = vmatpush.bf16.msra.mxu0 %v1423
    %1475 = vmatpush.bf16.msra.mxu0 %v1421
    %1476 = vmatpush.bf16.msra.mxu0 %v1419
    %1477 = vmatmul.bf16.gmra.mxu0 %v1346
    %v1478 = vpop.f32.mrf.mxu0
    %v1479 = vadd.f32 %v1367, %v1478
    %v1480 = vpop.f32.mrf.mxu0
    %v1481 = vadd.f32 %v1367, %v1480
    %1482 = vmatmul.bf16.gmra.mxu0 %v1347
    %v1483 = vpop.f32.mrf.mxu0
    %v1484 = vadd.f32 %v1367, %v1483
    %v1485 = vpop.f32.mrf.mxu0
    %v1486 = vadd.f32 %v1367, %v1485
    %1487 = vdwg.mxu0
    %v1488 = vmul.f32 %v1460, 0.5
    %v1489 = vmul.f32 %v1479, 0.5
    %v1490 = vmul.f32 %v1462, 0.5
    %v1491 = vmul.f32 %v1481, 0.5
    %v1492 = vmul.f32 %v1465, 0.5
    %v1493 = vmul.f32 %v1484, 0.5
    %v1494 = vmul.f32 %v1467, 0.5
    %v1495 = vmul.f32 %v1486, 0.5
    %v1496 = vmul.f32 %v1460, 0.70710677
    %v1497 = vmul.f32 %v1479, 0.70710677
    %v1498 = vmul.f32 %v1462, 0.70710677
    %v1499 = vmul.f32 %v1481, 0.70710677
    %v1500 = vmul.f32 %v1465, 0.70710677
    %v1501 = vmul.f32 %v1484, 0.70710677
    %v1502 = vmul.f32 %v1467, 0.70710677
    %v1503 = vmul.f32 %v1486, 0.70710677
    %v1504 = vmul.f32 %v1496, %v1496
    %v1505 = vmin.f32 16.0, %v1504
    %v1506 = vmul.f32 %v1505, 2.1237322e-06
    %v1507 = vadd.f32 %v1506, 0.00028619796
    %v1508 = vmul.f32 %v1505, %v1507
    %v1509 = vadd.f32 %v1508, 0.0036580483
    %v1510 = vmul.f32 %v1505, %v1509
    %v1511 = vadd.f32 %v1510, 0.05243302
    %v1512 = vmul.f32 %v1505, %v1511
    %v1513 = vadd.f32 %v1512, 0.18741608
    %v1514 = vmul.f32 %v1505, %v1513
    %v1515 = vadd.f32 %v1514, 1.1283791
    %v1516 = vmul.f32 %v1496, %v1515
    %v1517 = vmul.f32 %v1505, 3.8918573e-05
    %v1518 = vadd.f32 %v1517, 0.001143296
    %v1519 = vmul.f32 %v1505, %v1518
    %v1520 = vadd.f32 %v1519, 0.014752088
    %v1521 = vmul.f32 %v1505, %v1520
    %v1522 = vadd.f32 %v1521, 0.112945676
    %v1523 = vmul.f32 %v1505, %v1522
    %v1524 = vadd.f32 %v1523, 0.4994258
    %v1525 = vmul.f32 %v1505, %v1524
    %v1526 = vadd.f32 %v1525, 1.0
    %v1527 = vrcp.pop %v1526
    %v1528 = vmul.f32 %v1526, %v1527
    %v1529 = vsub.f32 1.0, %v1528
    %v1530 = vmul.f32 %v1527, %v1529
    %v1531 = vadd.f32 %v1527, %v1530
    %vm1532 = vweird.f32 %v1526
    %vm1533 = vweird.f32 %v1527
    %vm1534 = vmor %vm1532, %vm1533
    %v1535 = vsel %vm1534, %v1527, %v1531
    %v1536 = vand.u32 2147483647, %v1526
    %vm1537 = vcmp.eq.f32.partialorder %v1536, 8.507059e+37
    %v1538 = vand.u32 %v1526, 2147483648
    %v1539 = vor.u32 1.1754944e-38, %v1538
    %v1540 = vsel %vm1537, %v1539, %v1535
    %v1541 = vmul.f32 %v1516, %v1540
    %v1542 = vmin.f32 %v1541, 1.0
    %v1543 = vmax.f32 %v1542, -1.0
    %v1544 = vmul.f32 %v1497, %v1497
    %v1545 = vmin.f32 16.0, %v1544
    %v1546 = vmul.f32 %v1545, 2.1237322e-06
    %v1547 = vadd.f32 %v1546, 0.00028619796
    %v1548 = vmul.f32 %v1545, %v1547
    %v1549 = vadd.f32 %v1548, 0.0036580483
    %v1550 = vmul.f32 %v1545, %v1549
    %v1551 = vadd.f32 %v1550, 0.05243302
    %v1552 = vmul.f32 %v1545, %v1551
    %v1553 = vadd.f32 %v1552, 0.18741608
    %v1554 = vmul.f32 %v1545, %v1553
    %v1555 = vadd.f32 %v1554, 1.1283791
    %v1556 = vmul.f32 %v1497, %v1555
    %v1557 = vmul.f32 %v1545, 3.8918573e-05
    %v1558 = vadd.f32 %v1557, 0.001143296
    %v1559 = vmul.f32 %v1545, %v1558
    %v1560 = vadd.f32 %v1559, 0.014752088
    %v1561 = vmul.f32 %v1545, %v1560
    %v1562 = vadd.f32 %v1561, 0.112945676
    %v1563 = vmul.f32 %v1545, %v1562
    %v1564 = vadd.f32 %v1563, 0.4994258
    %v1565 = vmul.f32 %v1545, %v1564
    %v1566 = vadd.f32 %v1565, 1.0
    %v1567 = vrcp.pop %v1566
    %v1568 = vmul.f32 %v1566, %v1567
    %v1569 = vsub.f32 1.0, %v1568
    %v1570 = vmul.f32 %v1567, %v1569
    %v1571 = vadd.f32 %v1567, %v1570
    %vm1572 = vweird.f32 %v1566
    %vm1573 = vweird.f32 %v1567
    %vm1574 = vmor %vm1572, %vm1573
    %v1575 = vsel %vm1574, %v1567, %v1571
    %v1576 = vand.u32 2147483647, %v1566
    %vm1577 = vcmp.eq.f32.partialorder %v1576, 8.507059e+37
    %v1578 = vand.u32 %v1566, 2147483648
    %v1579 = vor.u32 1.1754944e-38, %v1578
    %v1580 = vsel %vm1577, %v1579, %v1575
    %v1581 = vmul.f32 %v1556, %v1580
    %v1582 = vmin.f32 %v1581, 1.0
    %v1583 = vmax.f32 %v1582, -1.0
    %v1584 = vmul.f32 %v1498, %v1498
    %v1585 = vmin.f32 16.0, %v1584
    %v1586 = vmul.f32 %v1585, 2.1237322e-06
    %v1587 = vadd.f32 %v1586, 0.00028619796
    %v1588 = vmul.f32 %v1585, %v1587
    %v1589 = vadd.f32 %v1588, 0.0036580483
    %v1590 = vmul.f32 %v1585, %v1589
    %v1591 = vadd.f32 %v1590, 0.05243302
    %v1592 = vmul.f32 %v1585, %v1591
    %v1593 = vadd.f32 %v1592, 0.18741608
    %v1594 = vmul.f32 %v1585, %v1593
    %v1595 = vadd.f32 %v1594, 1.1283791
    %v1596 = vmul.f32 %v1498, %v1595
    %v1597 = vmul.f32 %v1585, 3.8918573e-05
    %v1598 = vadd.f32 %v1597, 0.001143296
    %v1599 = vmul.f32 %v1585, %v1598
    %v1600 = vadd.f32 %v1599, 0.014752088
    %v1601 = vmul.f32 %v1585, %v1600
    %v1602 = vadd.f32 %v1601, 0.112945676
    %v1603 = vmul.f32 %v1585, %v1602
    %v1604 = vadd.f32 %v1603, 0.4994258
    %v1605 = vmul.f32 %v1585, %v1604
    %v1606 = vadd.f32 %v1605, 1.0
    %v1607 = vrcp.pop %v1606
    %v1608 = vmul.f32 %v1606, %v1607
    %v1609 = vsub.f32 1.0, %v1608
    %v1610 = vmul.f32 %v1607, %v1609
    %v1611 = vadd.f32 %v1607, %v1610
    %vm1612 = vweird.f32 %v1606
    %vm1613 = vweird.f32 %v1607
    %vm1614 = vmor %vm1612, %vm1613
    %v1615 = vsel %vm1614, %v1607, %v1611
    %v1616 = vand.u32 2147483647, %v1606
    %vm1617 = vcmp.eq.f32.partialorder %v1616, 8.507059e+37
    %v1618 = vand.u32 %v1606, 2147483648
    %v1619 = vor.u32 1.1754944e-38, %v1618
    %v1620 = vsel %vm1617, %v1619, %v1615
    %v1621 = vmul.f32 %v1596, %v1620
    %v1622 = vmin.f32 %v1621, 1.0
    %v1623 = vmax.f32 %v1622, -1.0
    %v1624 = vmul.f32 %v1499, %v1499
    %v1625 = vmin.f32 16.0, %v1624
    %v1626 = vmul.f32 %v1625, 2.1237322e-06
    %v1627 = vadd.f32 %v1626, 0.00028619796
    %v1628 = vmul.f32 %v1625, %v1627
    %v1629 = vadd.f32 %v1628, 0.0036580483
    %v1630 = vmul.f32 %v1625, %v1629
    %v1631 = vadd.f32 %v1630, 0.05243302
    %v1632 = vmul.f32 %v1625, %v1631
    %v1633 = vadd.f32 %v1632, 0.18741608
    %v1634 = vmul.f32 %v1625, %v1633
    %v1635 = vadd.f32 %v1634, 1.1283791
    %v1636 = vmul.f32 %v1499, %v1635
    %v1637 = vmul.f32 %v1625, 3.8918573e-05
    %v1638 = vadd.f32 %v1637, 0.001143296
    %v1639 = vmul.f32 %v1625, %v1638
    %v1640 = vadd.f32 %v1639, 0.014752088
    %v1641 = vmul.f32 %v1625, %v1640
    %v1642 = vadd.f32 %v1641, 0.112945676
    %v1643 = vmul.f32 %v1625, %v1642
    %v1644 = vadd.f32 %v1643, 0.4994258
    %v1645 = vmul.f32 %v1625, %v1644
    %v1646 = vadd.f32 %v1645, 1.0
    %v1647 = vrcp.pop %v1646
    %v1648 = vmul.f32 %v1646, %v1647
    %v1649 = vsub.f32 1.0, %v1648
    %v1650 = vmul.f32 %v1647, %v1649
    %v1651 = vadd.f32 %v1647, %v1650
    %vm1652 = vweird.f32 %v1646
    %vm1653 = vweird.f32 %v1647
    %vm1654 = vmor %vm1652, %vm1653
    %v1655 = vsel %vm1654, %v1647, %v1651
    %v1656 = vand.u32 2147483647, %v1646
    %vm1657 = vcmp.eq.f32.partialorder %v1656, 8.507059e+37
    %v1658 = vand.u32 %v1646, 2147483648
    %v1659 = vor.u32 1.1754944e-38, %v1658
    %v1660 = vsel %vm1657, %v1659, %v1655
    %v1661 = vmul.f32 %v1636, %v1660
    %v1662 = vmin.f32 %v1661, 1.0
    %v1663 = vmax.f32 %v1662, -1.0
    %v1664 = vmul.f32 %v1500, %v1500
    %v1665 = vmin.f32 16.0, %v1664
    %v1666 = vmul.f32 %v1665, 2.1237322e-06
    %v1667 = vadd.f32 %v1666, 0.00028619796
    %v1668 = vmul.f32 %v1665, %v1667
    %v1669 = vadd.f32 %v1668, 0.0036580483
    %v1670 = vmul.f32 %v1665, %v1669
    %v1671 = vadd.f32 %v1670, 0.05243302
    %v1672 = vmul.f32 %v1665, %v1671
    %v1673 = vadd.f32 %v1672, 0.18741608
    %v1674 = vmul.f32 %v1665, %v1673
    %v1675 = vadd.f32 %v1674, 1.1283791
    %v1676 = vmul.f32 %v1500, %v1675
    %v1677 = vmul.f32 %v1665, 3.8918573e-05
    %v1678 = vadd.f32 %v1677, 0.001143296
    %v1679 = vmul.f32 %v1665, %v1678
    %v1680 = vadd.f32 %v1679, 0.014752088
    %v1681 = vmul.f32 %v1665, %v1680
    %v1682 = vadd.f32 %v1681, 0.112945676
    %v1683 = vmul.f32 %v1665, %v1682
    %v1684 = vadd.f32 %v1683, 0.4994258
    %v1685 = vmul.f32 %v1665, %v1684
    %v1686 = vadd.f32 %v1685, 1.0
    %v1687 = vrcp.pop %v1686
    %v1688 = vmul.f32 %v1686, %v1687
    %v1689 = vsub.f32 1.0, %v1688
    %v1690 = vmul.f32 %v1687, %v1689
    %v1691 = vadd.f32 %v1687, %v1690
    %vm1692 = vweird.f32 %v1686
    %vm1693 = vweird.f32 %v1687
    %vm1694 = vmor %vm1692, %vm1693
    %v1695 = vsel %vm1694, %v1687, %v1691
    %v1696 = vand.u32 2147483647, %v1686
    %vm1697 = vcmp.eq.f32.partialorder %v1696, 8.507059e+37
    %v1698 = vand.u32 %v1686, 2147483648
    %v1699 = vor.u32 1.1754944e-38, %v1698
    %v1700 = vsel %vm1697, %v1699, %v1695
    %v1701 = vmul.f32 %v1676, %v1700
    %v1702 = vmin.f32 %v1701, 1.0
    %v1703 = vmax.f32 %v1702, -1.0
    %v1704 = vmul.f32 %v1501, %v1501
    %v1705 = vmin.f32 16.0, %v1704
    %v1706 = vmul.f32 %v1705, 2.1237322e-06
    %v1707 = vadd.f32 %v1706, 0.00028619796
    %v1708 = vmul.f32 %v1705, %v1707
    %v1709 = vadd.f32 %v1708, 0.0036580483
    %v1710 = vmul.f32 %v1705, %v1709
    %v1711 = vadd.f32 %v1710, 0.05243302
    %v1712 = vmul.f32 %v1705, %v1711
    %v1713 = vadd.f32 %v1712, 0.18741608
    %v1714 = vmul.f32 %v1705, %v1713
    %v1715 = vadd.f32 %v1714, 1.1283791
    %v1716 = vmul.f32 %v1501, %v1715
    %v1717 = vmul.f32 %v1705, 3.8918573e-05
    %v1718 = vadd.f32 %v1717, 0.001143296
    %v1719 = vmul.f32 %v1705, %v1718
    %v1720 = vadd.f32 %v1719, 0.014752088
    %v1721 = vmul.f32 %v1705, %v1720
    %v1722 = vadd.f32 %v1721, 0.112945676
    %v1723 = vmul.f32 %v1705, %v1722
    %v1724 = vadd.f32 %v1723, 0.4994258
    %v1725 = vmul.f32 %v1705, %v1724
    %v1726 = vadd.f32 %v1725, 1.0
    %v1727 = vrcp.pop %v1726
    %v1728 = vmul.f32 %v1726, %v1727
    %v1729 = vsub.f32 1.0, %v1728
    %v1730 = vmul.f32 %v1727, %v1729
    %v1731 = vadd.f32 %v1727, %v1730
    %vm1732 = vweird.f32 %v1726
    %vm1733 = vweird.f32 %v1727
    %vm1734 = vmor %vm1732, %vm1733
    %v1735 = vsel %vm1734, %v1727, %v1731
    %v1736 = vand.u32 2147483647, %v1726
    %vm1737 = vcmp.eq.f32.partialorder %v1736, 8.507059e+37
    %v1738 = vand.u32 %v1726, 2147483648
    %v1739 = vor.u32 1.1754944e-38, %v1738
    %v1740 = vsel %vm1737, %v1739, %v1735
    %v1741 = vmul.f32 %v1716, %v1740
    %v1742 = vmin.f32 %v1741, 1.0
    %v1743 = vmax.f32 %v1742, -1.0
    %v1744 = vmul.f32 %v1502, %v1502
    %v1745 = vmin.f32 16.0, %v1744
    %v1746 = vmul.f32 %v1745, 2.1237322e-06
    %v1747 = vadd.f32 %v1746, 0.00028619796
    %v1748 = vmul.f32 %v1745, %v1747
    %v1749 = vadd.f32 %v1748, 0.0036580483
    %v1750 = vmul.f32 %v1745, %v1749
    %v1751 = vadd.f32 %v1750, 0.05243302
    %v1752 = vmul.f32 %v1745, %v1751
    %v1753 = vadd.f32 %v1752, 0.18741608
    %v1754 = vmul.f32 %v1745, %v1753
    %v1755 = vadd.f32 %v1754, 1.1283791
    %v1756 = vmul.f32 %v1502, %v1755
    %v1757 = vmul.f32 %v1745, 3.8918573e-05
    %v1758 = vadd.f32 %v1757, 0.001143296
    %v1759 = vmul.f32 %v1745, %v1758
    %v1760 = vadd.f32 %v1759, 0.014752088
    %v1761 = vmul.f32 %v1745, %v1760
    %v1762 = vadd.f32 %v1761, 0.112945676
    %v1763 = vmul.f32 %v1745, %v1762
    %v1764 = vadd.f32 %v1763, 0.4994258
    %v1765 = vmul.f32 %v1745, %v1764
    %v1766 = vadd.f32 %v1765, 1.0
    %v1767 = vrcp.pop %v1766
    %v1768 = vmul.f32 %v1766, %v1767
    %v1769 = vsub.f32 1.0, %v1768
    %v1770 = vmul.f32 %v1767, %v1769
    %v1771 = vadd.f32 %v1767, %v1770
    %vm1772 = vweird.f32 %v1766
    %vm1773 = vweird.f32 %v1767
    %vm1774 = vmor %vm1772, %vm1773
    %v1775 = vsel %vm1774, %v1767, %v1771
    %v1776 = vand.u32 2147483647, %v1766
    %vm1777 = vcmp.eq.f32.partialorder %v1776, 8.507059e+37
    %v1778 = vand.u32 %v1766, 2147483648
    %v1779 = vor.u32 1.1754944e-38, %v1778
    %v1780 = vsel %vm1777, %v1779, %v1775
    %v1781 = vmul.f32 %v1756, %v1780
    %v1782 = vmin.f32 %v1781, 1.0
    %v1783 = vmax.f32 %v1782, -1.0
    %v1784 = vmul.f32 %v1503, %v1503
    %v1785 = vmin.f32 16.0, %v1784
    %v1786 = vmul.f32 %v1785, 2.1237322e-06
    %v1787 = vadd.f32 %v1786, 0.00028619796
    %v1788 = vmul.f32 %v1785, %v1787
    %v1789 = vadd.f32 %v1788, 0.0036580483
    %v1790 = vmul.f32 %v1785, %v1789
    %v1791 = vadd.f32 %v1790, 0.05243302
    %v1792 = vmul.f32 %v1785, %v1791
    %v1793 = vadd.f32 %v1792, 0.18741608
    %v1794 = vmul.f32 %v1785, %v1793
    %v1795 = vadd.f32 %v1794, 1.1283791
    %v1796 = vmul.f32 %v1503, %v1795
    %v1797 = vmul.f32 %v1785, 3.8918573e-05
    %v1798 = vadd.f32 %v1797, 0.001143296
    %v1799 = vmul.f32 %v1785, %v1798
    %v1800 = vadd.f32 %v1799, 0.014752088
    %v1801 = vmul.f32 %v1785, %v1800
    %v1802 = vadd.f32 %v1801, 0.112945676
    %v1803 = vmul.f32 %v1785, %v1802
    %v1804 = vadd.f32 %v1803, 0.4994258
    %v1805 = vmul.f32 %v1785, %v1804
    %v1806 = vadd.f32 %v1805, 1.0
    %v1807 = vrcp.pop %v1806
    %v1808 = vmul.f32 %v1806, %v1807
    %v1809 = vsub.f32 1.0, %v1808
    %v1810 = vmul.f32 %v1807, %v1809
    %v1811 = vadd.f32 %v1807, %v1810
    %vm1812 = vweird.f32 %v1806
    %vm1813 = vweird.f32 %v1807
    %vm1814 = vmor %vm1812, %vm1813
    %v1815 = vsel %vm1814, %v1807, %v1811
    %v1816 = vand.u32 2147483647, %v1806
    %vm1817 = vcmp.eq.f32.partialorder %v1816, 8.507059e+37
    %v1818 = vand.u32 %v1806, 2147483648
    %v1819 = vor.u32 1.1754944e-38, %v1818
    %v1820 = vsel %vm1817, %v1819, %v1815
    %v1821 = vmul.f32 %v1796, %v1820
    %v1822 = vmin.f32 %v1821, 1.0
    %v1823 = vmax.f32 %v1822, -1.0
    %v1824 = vadd.f32 %v1543, 1.0
    %v1825 = vadd.f32 %v1583, 1.0
    %v1826 = vadd.f32 %v1623, 1.0
    %v1827 = vadd.f32 %v1663, 1.0
    %v1828 = vadd.f32 %v1703, 1.0
    %v1829 = vadd.f32 %v1743, 1.0
    %v1830 = vadd.f32 %v1783, 1.0
    %v1831 = vadd.f32 %v1823, 1.0
    %v1832 = vmul.f32 %v1488, %v1824
    %v1833 = vmul.f32 %v1489, %v1825
    %v1834 = vmul.f32 %v1490, %v1826
    %v1835 = vmul.f32 %v1491, %v1827
    %v1836 = vmul.f32 %v1492, %v1828
    %v1837 = vmul.f32 %v1493, %v1829
    %v1838 = vmul.f32 %v1494, %v1830
    %v1839 = vmul.f32 %v1495, %v1831
    %v1840 = vpack.c.bf16 %v1834, %v1832
    %v1841 = vpack.c.bf16 %v1835, %v1833
    %v1842 = vpack.c.bf16 %v1838, %v1836
    %v1843 = vpack.c.bf16 %v1839, %v1837
    %v1844 = vld [vmem:[#allocation15] sm:$0xf]
    %v1845 = vld [vmem:[#allocation15 + $0x4] sm:$0xf]
    %v1846 = vld [vmem:[#allocation15 + $0x8] sm:$0xf]
    %v1847 = vld [vmem:[#allocation15 + $0xc] sm:$0xf]
    %v1848 = vld [vmem:[#allocation15 + $0x10] sm:$0xf]
    %v1849 = vld [vmem:[#allocation15 + $0x14] sm:$0xf]
    %v1850 = vld [vmem:[#allocation15 + $0x18] sm:$0xf]
    %v1851 = vld [vmem:[#allocation15 + $0x1c] sm:$0xf]
    %v1852 = vld [vmem:[#allocation15 + $0x20] sm:$0xf]
    %v1853 = vld [vmem:[#allocation15 + $0x24] sm:$0xf]
    %v1854 = vld [vmem:[#allocation15 + $0x28] sm:$0xf]
    %v1855 = vld [vmem:[#allocation15 + $0x2c] sm:$0xf]
    %v1856 = vld [vmem:[#allocation15 + $0x30] sm:$0xf]
    %v1857 = vld [vmem:[#allocation15 + $0x34] sm:$0xf]
    %v1858 = vld [vmem:[#allocation15 + $0x38] sm:$0xf]
    %v1859 = vld [vmem:[#allocation15 + $0x3c] sm:$0xf]
    %v1860 = vld [vmem:[#allocation15 + $0x40] sm:$0xf]
    %v1861 = vld [vmem:[#allocation15 + $0x44] sm:$0xf]
    %v1862 = vld [vmem:[#allocation15 + $0x48] sm:$0xf]
    %v1863 = vld [vmem:[#allocation15 + $0x4c] sm:$0xf]
    %v1864 = vld [vmem:[#allocation15 + $0x50] sm:$0xf]
    %v1865 = vld [vmem:[#allocation15 + $0x54] sm:$0xf]
    %v1866 = vld [vmem:[#allocation15 + $0x58] sm:$0xf]
    %v1867 = vld [vmem:[#allocation15 + $0x5c] sm:$0xf]
    %v1868 = vld [vmem:[#allocation15 + $0x60] sm:$0xf]
    %v1869 = vld [vmem:[#allocation15 + $0x64] sm:$0xf]
    %v1870 = vld [vmem:[#allocation15 + $0x68] sm:$0xf]
    %v1871 = vld [vmem:[#allocation15 + $0x6c] sm:$0xf]
    %v1872 = vld [vmem:[#allocation15 + $0x70] sm:$0xf]
    %v1873 = vld [vmem:[#allocation15 + $0x74] sm:$0xf]
    %v1874 = vld [vmem:[#allocation15 + $0x78] sm:$0xf]
    %v1875 = vld [vmem:[#allocation15 + $0x7c] sm:$0xf]
    %v1876 = vld [vmem:[%s12] sm:$0x1]
    %v1878 = vperm.slane %v1876, 0
    %v1912 = vunpack.c.l.b16 %v1844
    %v1913 = vunpack.c.l.b16 %v1845
    %v1914 = vunpack.c.l.b16 %v1846
    %v1915 = vunpack.c.l.b16 %v1847
    %v1916 = vunpack.c.l.b16 %v1848
    %v1917 = vunpack.c.l.b16 %v1849
    %v1918 = vunpack.c.l.b16 %v1850
    %v1919 = vunpack.c.l.b16 %v1851
    %v1920 = vunpack.c.l.b16 %v1852
    %v1921 = vunpack.c.l.b16 %v1853
    %v1922 = vunpack.c.l.b16 %v1854
    %v1923 = vunpack.c.l.b16 %v1855
    %v1924 = vunpack.c.l.b16 %v1856
    %v1925 = vunpack.c.l.b16 %v1857
    %v1926 = vunpack.c.l.b16 %v1858
    %v1927 = vunpack.c.l.b16 %v1859
    %v1928 = vunpack.c.l.b16 %v1860
    %v1929 = vunpack.c.l.b16 %v1861
    %v1930 = vunpack.c.l.b16 %v1862
    %v1931 = vunpack.c.l.b16 %v1863
    %v1932 = vunpack.c.l.b16 %v1864
    %v1933 = vunpack.c.l.b16 %v1865
    %v1934 = vunpack.c.l.b16 %v1866
    %v1935 = vunpack.c.l.b16 %v1867
    %v1936 = vunpack.c.l.b16 %v1868
    %v1937 = vunpack.c.l.b16 %v1869
    %v1938 = vunpack.c.l.b16 %v1870
    %v1939 = vunpack.c.l.b16 %v1871
    %v1940 = vunpack.c.l.b16 %v1872
    %v1941 = vunpack.c.l.b16 %v1873
    %v1942 = vunpack.c.l.b16 %v1874
    %v1943 = vunpack.c.l.b16 %v1875
    %v1944 = vpack.c.b16 %v1913, %v1912
    %v1945 = vpack.c.b16 %v1915, %v1914
    %v1946 = vpack.c.b16 %v1917, %v1916
    %v1947 = vpack.c.b16 %v1919, %v1918
    %v1948 = vpack.c.b16 %v1921, %v1920
    %v1949 = vpack.c.b16 %v1923, %v1922
    %v1950 = vpack.c.b16 %v1925, %v1924
    %v1951 = vpack.c.b16 %v1927, %v1926
    %v1952 = vpack.c.b16 %v1929, %v1928
    %v1953 = vpack.c.b16 %v1931, %v1930
    %v1954 = vpack.c.b16 %v1933, %v1932
    %v1955 = vpack.c.b16 %v1935, %v1934
    %v1956 = vpack.c.b16 %v1937, %v1936
    %v1957 = vpack.c.b16 %v1939, %v1938
    %v1958 = vpack.c.b16 %v1941, %v1940
    %v1959 = vpack.c.b16 %v1943, %v1942
    %1976 = vmatpush.bf16.msra.mxu0 %v1951
    %1977 = vmatpush.bf16.msra.mxu0 %v1950
    %1978 = vmatpush.bf16.msra.mxu0 %v1949
    %1979 = vmatpush.bf16.msra.mxu0 %v1948
    %1980 = vmatpush.bf16.msra.mxu0 %v1947
    %1981 = vmatpush.bf16.msra.mxu0 %v1946
    %1982 = vmatpush.bf16.msra.mxu0 %v1945
    %1983 = vmatpush.bf16.msra.mxu0 %v1944
    %1984 = vmatmul.bf16.gmra.mxu0 %v1840
    %v1985 = vpop.f32.mrf.mxu0
    %v1986 = vadd.f32 %v1878, %v1985
    %v1987 = vpop.f32.mrf.mxu0
    %v1988 = vadd.f32 %v1878, %v1987
    %1989 = vmatmul.bf16.gmra.mxu0 %v1842
    %v1990 = vpop.f32.mrf.mxu0
    %v1991 = vadd.f32 %v1878, %v1990
    %v1992 = vpop.f32.mrf.mxu0
    %v1993 = vadd.f32 %v1878, %v1992
    %1994 = vdwg.mxu0
    %1995 = vmatpush.bf16.msra.mxu0 %v1959
    %1996 = vmatpush.bf16.msra.mxu0 %v1958
    %1997 = vmatpush.bf16.msra.mxu0 %v1957
    %1998 = vmatpush.bf16.msra.mxu0 %v1956
    %1999 = vmatpush.bf16.msra.mxu0 %v1955
    %2000 = vmatpush.bf16.msra.mxu0 %v1954
    %2001 = vmatpush.bf16.msra.mxu0 %v1953
    %2002 = vmatpush.bf16.msra.mxu0 %v1952
    %2003 = vmatmul.bf16.gmra.mxu0 %v1841
    %v2004 = vpop.f32.mrf.mxu0
    %v2005 = vadd.f32 %v1986, %v2004
    %v2006 = vpop.f32.mrf.mxu0
    %v2007 = vadd.f32 %v1988, %v2006
    %2008 = vmatmul.bf16.gmra.mxu0 %v1843
    %v2009 = vpop.f32.mrf.mxu0
    %v2010 = vadd.f32 %v1991, %v2009
    %v2011 = vpop.f32.mrf.mxu0
    %v2012 = vadd.f32 %v1993, %v2011
    %2013 = vdwg.mxu0
    %v2014 = vadd.f32 %v2005, %v1246
    %v2015 = vadd.f32 %v2007, %v1247
    %v2016 = vadd.f32 %v2010, %v1248
    %v2017 = vadd.f32 %v2012, %v1249
    %2018 = vst [vmem:[#allocation17] sm:$0xff] %v2014
    %2019 = vst [vmem:[#allocation17 + $0x8] sm:$0xff] %v2015
    %2020 = vst [vmem:[#allocation17 + $0x10] sm:$0xff] %v2016
    %2021 = vst [vmem:[#allocation17 + $0x18] sm:$0xff] %v2017
    // Predicated region
    $region86: #{tpu_custom_call.1} parent=1 // pred_check
      _
    $region87: #{tpu_custom_call.1} parent=1 // pred_check_branch
      %2023 = sbr.rel (0) target = $region89
    $region88: #{tpu_custom_call.1} parent=1 // pred_region
      %2025 = vsyncadd [#allocation5], 0
      %s2026 = sshll.u32 [#allocation17], 4
      %s2027 = int_to_ptr.vmem [resolvable:$true] %s2026
      %s2028 = sshll.u32 %s13, 4
      %s2029 = int_to_ptr.hbm [resolvable:$true] %s2028
      %2034 = dma.vmem_to_hbm [thread:$0]  %s2027, 512, %s2029, [#allocation5], 128, 128, 8
    $region89: #{tpu_custom_call.1} parent=1 // pred_fallthru
      _
    // Predicated region
    $region90: #{tpu_custom_call.1} parent=1 // pred_check
      _
    $region91: #{tpu_custom_call.1} parent=1 // pred_check_branch
      %2036 = sbr.rel (0) target = $region93
    $region92: #{tpu_custom_call.1} parent=1 // pred_region
      %2038 = dma.done [#allocation5], 512
    $region93: #{tpu_custom_call.1} parent=1 // pred_fallthru
      _
    %2039 = vsyncpa [#allocation4], 1
    %2040 = vsyncpa [#allocation7], 1
    %2041 = vsyncpa [#allocation10], 1
    %2042 = vsyncpa [#allocation13], 1
    %2043 = vsyncpa [#allocation16], 1
    %2044 = vsyncpa [#allocation5], 1

</llo_original>
